<compile_context>
chip_gen: v7x
topology: tpu7x:2x2x1
jax: 0.10.0
libtpu: 0.0.40
codegen_flags: <defaults>
</compile_context>

<pallas_src>
import jax
import jax.numpy as jnp
from jax.experimental import pallas as pl
from jax.experimental.pallas import tpu as pltpu

NOISE_DIM = 64
OUTPUT_SHAPE = 784           # e.g. 28*28 flattened image
OUTPUT_SHAPE_PAD = 896       # 7 * 128 lane-dense output slab
LEAKY_SLOPE = 0.2
BN_EPS = 0.8                 # positional arg of BatchNorm2d(C, 0.8) is eps
HIDDEN_LAST = 512


def _round_up(x, m):
    return (x + m - 1) // m * m


def _make_kernel(batch, b_pad, tile_b):
    """Builds the generator kernel for a static (batch, b_pad, tile_b) geometry."""
    inv_b = 1.0 / float(batch)       # divide BN sums by the *real* batch size
    need_mask = b_pad != batch

    def kernel(x_ref,
               w1_ref, g1_ref, b1_ref,
               w2_ref, g2_ref, b2_ref,
               w3_ref, g3_ref, b3_ref,
               w4_ref,
               o_ref,
               h3_ref):
        i = pl.program_id(0)

        # ---- grid step 0: layers 1-3 on the whole batch (BN needs batch
        # ---- global statistics), result parked in VMEM scratch. -------------
        @pl.when(i == 0)
        def _():
            # Ones row for MXU-based batch reductions.
            ones_row = jnp.ones((1, b_pad), jnp.float32)
            if need_mask:
                row_mask = (
                    jax.lax.broadcasted_iota(jnp.int32, (b_pad, 1), 0) < batch
                ).astype(jnp.float32)
            else:
                row_mask = None

            def bn_lrelu(h, g_ref, b_ref):
                # Padded rows of h are exactly zero (zero-padded noise rows and
                # row-masked activations), so full-slab sums == real-batch sums.
                # Biased variance, eps = 0.8, affine, then LeakyReLU(0.2).
                s1 = jnp.dot(ones_row, h, preferred_element_type=jnp.float32)
                s2 = jnp.dot(ones_row, h * h,
                             preferred_element_type=jnp.float32)
                mean = s1 * inv_b
                var = s2 * inv_b - mean * mean
                hn = (h - mean) * jax.lax.rsqrt(var + BN_EPS)
                hn = hn * g_ref[...] + b_ref[...]
                # LeakyReLU(m) == max(x, m*x) for 0 < m < 1.
                hn = jnp.maximum(hn, LEAKY_SLOPE * hn)
                if row_mask is not None:
                    hn = hn * row_mask      # keep padded rows exactly zero
                return hn

            # FIRST UPSAMPLING: Linear(64, 128) -> BN -> LeakyReLU
            x = x_ref[...].astype(jnp.bfloat16)
            h = jnp.dot(x, w1_ref[...], preferred_element_type=jnp.float32)
            h = bn_lrelu(h, g1_ref, b1_ref)

            # SECOND UPSAMPLING: Linear(128, 256) -> BN -> LeakyReLU
            h = jnp.dot(h.astype(jnp.bfloat16), w2_ref[...],
                        preferred_element_type=jnp.float32)
            h = bn_lrelu(h, g2_ref, b2_ref)

            # THIRD UPSAMPLING: Linear(256, 512) -> BN -> LeakyReLU
            h = jnp.dot(h.astype(jnp.bfloat16), w3_ref[...],
                        preferred_element_type=jnp.float32)
            h = bn_lrelu(h, g3_ref, b3_ref)

            h3_ref[...] = h

        # ---- every grid step: LAST UPSAMPLE on one batch tile --------------
        # Linear(512, 784->896 lane-padded) -> Tanh, pipelined so the bf16
        # output writeback of the previous tile overlaps this compute.
        start = pl.multiple_of(i * tile_b, tile_b)
        h_tile = h3_ref[pl.ds(start, tile_b), :].astype(jnp.bfloat16)
        out = jnp.dot(h_tile, w4_ref[...], preferred_element_type=jnp.float32)
        o_ref[...] = jnp.tanh(out).astype(o_ref.dtype)

    return kernel


def _vmem_limit_bytes(b_pad, tile_b):
    # ~1.3 MB bf16 weights (double-buffered), (b_pad,64) f32 input,
    # (b_pad,512) f32 scratch, layer-1..3 f32 temporaries, 2x output buffers.
    need = (8 << 20) + b_pad * 16 * 1024 + 4 * tile_b * OUTPUT_SHAPE_PAD * 2
    try:
        cap = pltpu.get_tpu_info().vmem_capacity_bytes
    except Exception:
        cap = 64 << 20          # conservative: v7x per-core VMEM
    return int(min(max(need, 16 << 20), (cap * 3) // 4))


def generator_forward(x, params, *, tile_b=None, return_padded=False):
    """x: (B, NOISE_DIM) float32.

    Returns (B, OUTPUT_SHAPE) bfloat16 by default, or the lane-dense
    (B, OUTPUT_SHAPE_PAD) slab when return_padded=True (skips the extra HBM
    copy of the wrapper slice at large B)."""
    B = x.shape[0]
    if tile_b is None:
        tile_b = 256 if B >= 512 else _round_up(B, 8)
    tile_b = _round_up(tile_b, 8)
    b_pad = _round_up(B, tile_b)
    n_tiles = b_pad // tile_b

    if b_pad != B:
        # Zero-padded noise rows; kept exactly inert through BN by the
        # in-kernel row mask, and sliced off below.
        x = jnp.pad(x, ((0, b_pad - B), (0, 0)))

    kernel = _make_kernel(B, b_pad, tile_b)

    def full(shape):
        # Whole-array block, constant block index -> DMA'd once across the grid.
        return pl.BlockSpec(shape, lambda i, _s=len(shape): (0,) * _s)

    in_specs = [
        full((b_pad, NOISE_DIM)),
        full(params["w1"].shape), full(params["g1"].shape), full(params["b1"].shape),
        full(params["w2"].shape), full(params["g2"].shape), full(params["b2"].shape),
        full(params["w3"].shape), full(params["g3"].shape), full(params["b3"].shape),
        full(params["w4"].shape),
    ]

    out_pad = pl.pallas_call(
        kernel,
        out_shape=jax.ShapeDtypeStruct((b_pad, OUTPUT_SHAPE_PAD), jnp.bfloat16),
        grid_spec=pltpu.PrefetchScalarGridSpec(
            num_scalar_prefetch=0,
            grid=(n_tiles,),
            in_specs=in_specs,
            out_specs=pl.BlockSpec((tile_b, OUTPUT_SHAPE_PAD), lambda i: (i, 0)),
            scratch_shapes=[pltpu.VMEM((b_pad, HIDDEN_LAST), jnp.float32)],
        ),
        compiler_params=pltpu.CompilerParams(
            # Scratch written on step 0 and read by later steps -> sequential.
            dimension_semantics=("arbitrary",),
            vmem_limit_bytes=_vmem_limit_bytes(b_pad, tile_b),
        ),
    )(x,
      params["w1"], params["g1"], params["b1"],
      params["w2"], params["g2"], params["b2"],
      params["w3"], params["g3"], params["b3"],
      params["w4"])

    if return_padded:
        return out_pad if b_pad == B else out_pad[:B]
    return out_pad[:B, :OUTPUT_SHAPE]


def init_params(key):
    """Deterministic init. Linear weights ~ U(-1/sqrt(fan_in), 1/sqrt(fan_in))
    (PyTorch default), stored transposed as (in, out) bf16; w4 is N-padded
    784->896 with zero columns (lane-dense output). BN gamma=1, beta=0 (f32)."""
    ks = jax.random.split(key, 4)

    def lin(k, fan_in, fan_out, pad_out=0):
        bound = 1.0 / jnp.sqrt(float(fan_in))
        w = jax.random.uniform(k, (fan_in, fan_out), jnp.float32,
                               minval=-bound, maxval=bound).astype(jnp.bfloat16)
        if pad_out:
            w = jnp.pad(w, ((0, 0), (0, pad_out)))
        return w

    return {
        "w1": lin(ks[0], NOISE_DIM, 128),
        "g1": jnp.ones((1, 128), jnp.float32),
        "b1": jnp.zeros((1, 128), jnp.float32),
        "w2": lin(ks[1], 128, 256),
        "g2": jnp.ones((1, 256), jnp.float32),
        "b2": jnp.zeros((1, 256), jnp.float32),
        "w3": lin(ks[2], 256, 512),
        "g3": jnp.ones((1, 512), jnp.float32),
        "b3": jnp.zeros((1, 512), jnp.float32),
        "w4": lin(ks[3], 512, OUTPUT_SHAPE,
                  pad_out=OUTPUT_SHAPE_PAD - OUTPUT_SHAPE),
    }


if __name__ == "__main__":
    key = jax.random.PRNGKey(0)
    k_x, k_p = jax.random.split(key)

    # Small test batch; B=14 exercises batch padding/masking (b_pad=16) and
    # tile_b=8 exercises the 2-step pipelined last layer.  Production use
    # should run B >= 256 to amortize the ~1.3 MB weight DMA.
    B = 14
    x = jax.random.normal(k_x, (B, NOISE_DIM), dtype=jnp.float32)
    params = init_params(k_p)

    out = generator_forward(x, params, tile_b=8)
    out = jax.block_until_ready(out)

    assert out.shape == (B, OUTPUT_SHAPE)
    out_f32 = out.astype(jnp.float32)
    assert bool(jnp.all(jnp.isfinite(out_f32)))
    assert bool(jnp.all(jnp.abs(out_f32) <= 1.0))   # tanh range

    print("KERNEL_OK")
</pallas_src>

<mosaic_0001>
module attributes {stable_mosaic.version = 11 : i64} {
  func.func @kernel(%arg0: i32, %arg1: memref<16x64xf32, #tpu.memory_space<vmem>>, %arg2: memref<64x128xbf16, #tpu.memory_space<vmem>>, %arg3: memref<1x128xf32, #tpu.memory_space<vmem>>, %arg4: memref<1x128xf32, #tpu.memory_space<vmem>>, %arg5: memref<128x256xbf16, #tpu.memory_space<vmem>>, %arg6: memref<1x256xf32, #tpu.memory_space<vmem>>, %arg7: memref<1x256xf32, #tpu.memory_space<vmem>>, %arg8: memref<256x512xbf16, #tpu.memory_space<vmem>>, %arg9: memref<1x512xf32, #tpu.memory_space<vmem>>, %arg10: memref<1x512xf32, #tpu.memory_space<vmem>>, %arg11: memref<512x896xbf16, #tpu.memory_space<vmem>>, %arg12: memref<8x896xbf16, #tpu.memory_space<vmem>>, %arg13: memref<16x512xf32, #tpu.memory_space<vmem>>) attributes {dimension_semantics = [#tpu.dimension_semantics<arbitrary>], iteration_bounds = array<i64: 2>, scalar_prefetch = 0 : i64, scratch_operands = 1 : i64, tpu.core_type = #tpu.core_type<tc>, window_params = [{pipeline_mode = #tpu.pipeline_mode<synchronous>, transform_indices = @transform_0, window_bounds = array<i64: 16, 64>}, {pipeline_mode = #tpu.pipeline_mode<synchronous>, transform_indices = @transform_1, window_bounds = array<i64: 64, 128>}, {pipeline_mode = #tpu.pipeline_mode<synchronous>, transform_indices = @transform_2, window_bounds = array<i64: 1, 128>}, {pipeline_mode = #tpu.pipeline_mode<synchronous>, transform_indices = @transform_3, window_bounds = array<i64: 1, 128>}, {pipeline_mode = #tpu.pipeline_mode<synchronous>, transform_indices = @transform_4, window_bounds = array<i64: 128, 256>}, {pipeline_mode = #tpu.pipeline_mode<synchronous>, transform_indices = @transform_5, window_bounds = array<i64: 1, 256>}, {pipeline_mode = #tpu.pipeline_mode<synchronous>, transform_indices = @transform_6, window_bounds = array<i64: 1, 256>}, {pipeline_mode = #tpu.pipeline_mode<synchronous>, transform_indices = @transform_7, window_bounds = array<i64: 256, 512>}, {pipeline_mode = #tpu.pipeline_mode<synchronous>, transform_indices = @transform_8, window_bounds = array<i64: 1, 512>}, {pipeline_mode = #tpu.pipeline_mode<synchronous>, transform_indices = @transform_9, window_bounds = array<i64: 1, 512>}, {pipeline_mode = #tpu.pipeline_mode<synchronous>, transform_indices = @transform_10, window_bounds = array<i64: 512, 896>}, {transform_indices = @transform_11, window_bounds = array<i64: 8, 896>}]} {
    %c0_i32 = arith.constant 0 : i32
    %0 = arith.cmpi eq, %arg0, %c0_i32 : i32
    %1 = arith.extui %0 : i1 to i32
    %c0_i32_0 = arith.constant 0 : i32
    %2 = arith.cmpi ne, %1, %c0_i32_0 : i32
    scf.if %2 {
      %cst_5 = arith.constant 1.000000e+00 : f32
      %13 = vector.broadcast %cst_5 : f32 to vector<1x16xf32>
      %14 = tpu.iota {dimensions = array<i32: 0>} : vector<16x1xi32>
      %c14_i32 = arith.constant 14 : i32
      %15 = vector.broadcast %c14_i32 : i32 to vector<16x1xi32>
      %16 = arith.cmpi slt, %14, %15 : vector<16x1xi32>
      %17 = arith.extui %16 : vector<16x1xi1> to vector<16x1xi32>
      %18 = arith.sitofp %17 : vector<16x1xi32> to vector<16x1xf32>
      %c0_6 = arith.constant 0 : index
      %c0_7 = arith.constant 0 : index
      %19 = vector.load %arg1[%c0_6, %c0_7] : memref<16x64xf32, #tpu.memory_space<vmem>>, vector<16x64xf32>
      %20 = arith.truncf %19 : vector<16x64xf32> to vector<16x64xbf16>
      %c0_8 = arith.constant 0 : index
      %c0_9 = arith.constant 0 : index
      %21 = vector.load %arg2[%c0_8, %c0_9] : memref<64x128xbf16, #tpu.memory_space<vmem>>, vector<64x128xbf16>
      %cst_10 = arith.constant dense<0.000000e+00> : vector<16x128xf32>
      %22 = tpu.matmul %20, %21, %cst_10 {dimension_numbers = #tpu.dot_dimension_numbers<[1], [0], [0], [1], [0, 0, 1, 1], [], []>} : vector<16x64xbf16>, vector<64x128xbf16>, vector<16x128xf32> -> vector<16x128xf32>
      %cst_11 = arith.constant dense<0.000000e+00> : vector<1x128xf32>
      %23 = tpu.matmul %13, %22, %cst_11 {dimension_numbers = #tpu.dot_dimension_numbers<[1], [0], [0], [1], [0, 0, 1, 1], [], []>} : vector<1x16xf32>, vector<16x128xf32>, vector<1x128xf32> -> vector<1x128xf32>
      %24 = arith.mulf %22, %22 : vector<16x128xf32>
      %cst_12 = arith.constant dense<0.000000e+00> : vector<1x128xf32>
      %25 = tpu.matmul %13, %24, %cst_12 {dimension_numbers = #tpu.dot_dimension_numbers<[1], [0], [0], [1], [0, 0, 1, 1], [], []>} : vector<1x16xf32>, vector<16x128xf32>, vector<1x128xf32> -> vector<1x128xf32>
      %cst_13 = arith.constant 0.0714285746 : f32
      %26 = vector.broadcast %cst_13 : f32 to vector<1x128xf32>
      %27 = arith.mulf %23, %26 : vector<1x128xf32>
      %cst_14 = arith.constant 0.0714285746 : f32
      %28 = vector.broadcast %cst_14 : f32 to vector<1x128xf32>
      %29 = arith.mulf %25, %28 : vector<1x128xf32>
      %30 = arith.mulf %27, %27 : vector<1x128xf32>
      %31 = arith.subf %29, %30 : vector<1x128xf32>
      %32 = vector.broadcast %27 : vector<1x128xf32> to vector<16x128xf32>
      %33 = arith.subf %22, %32 : vector<16x128xf32>
      %cst_15 = arith.constant 8.000000e-01 : f32
      %34 = vector.broadcast %cst_15 : f32 to vector<1x128xf32>
      %35 = arith.addf %31, %34 : vector<1x128xf32>
      %36 = math.rsqrt %35 : vector<1x128xf32>
      %37 = vector.broadcast %36 : vector<1x128xf32> to vector<16x128xf32>
      %38 = arith.mulf %33, %37 : vector<16x128xf32>
      %c0_16 = arith.constant 0 : index
      %c0_17 = arith.constant 0 : index
      %39 = vector.load %arg3[%c0_16, %c0_17] : memref<1x128xf32, #tpu.memory_space<vmem>>, vector<1x128xf32>
      %40 = vector.broadcast %39 : vector<1x128xf32> to vector<16x128xf32>
      %41 = arith.mulf %38, %40 : vector<16x128xf32>
      %c0_18 = arith.constant 0 : index
      %c0_19 = arith.constant 0 : index
      %42 = vector.load %arg4[%c0_18, %c0_19] : memref<1x128xf32, #tpu.memory_space<vmem>>, vector<1x128xf32>
      %43 = vector.broadcast %42 : vector<1x128xf32> to vector<16x128xf32>
      %44 = arith.addf %41, %43 : vector<16x128xf32>
      %cst_20 = arith.constant 2.000000e-01 : f32
      %45 = vector.broadcast %cst_20 : f32 to vector<16x128xf32>
      %46 = arith.mulf %45, %44 : vector<16x128xf32>
      %47 = arith.maximumf %44, %46 : vector<16x128xf32>
      %48 = vector.broadcast %18 : vector<16x1xf32> to vector<16x128xf32>
      %49 = arith.mulf %47, %48 : vector<16x128xf32>
      %50 = arith.truncf %49 : vector<16x128xf32> to vector<16x128xbf16>
      %c0_21 = arith.constant 0 : index
      %c0_22 = arith.constant 0 : index
      %51 = vector.load %arg5[%c0_21, %c0_22] : memref<128x256xbf16, #tpu.memory_space<vmem>>, vector<128x256xbf16>
      %cst_23 = arith.constant dense<0.000000e+00> : vector<16x256xf32>
      %52 = tpu.matmul %50, %51, %cst_23 {dimension_numbers = #tpu.dot_dimension_numbers<[1], [0], [0], [1], [0, 0, 1, 1], [], []>} : vector<16x128xbf16>, vector<128x256xbf16>, vector<16x256xf32> -> vector<16x256xf32>
      %cst_24 = arith.constant dense<0.000000e+00> : vector<1x256xf32>
      %53 = tpu.matmul %13, %52, %cst_24 {dimension_numbers = #tpu.dot_dimension_numbers<[1], [0], [0], [1], [0, 0, 1, 1], [], []>} : vector<1x16xf32>, vector<16x256xf32>, vector<1x256xf32> -> vector<1x256xf32>
      %54 = arith.mulf %52, %52 : vector<16x256xf32>
      %cst_25 = arith.constant dense<0.000000e+00> : vector<1x256xf32>
      %55 = tpu.matmul %13, %54, %cst_25 {dimension_numbers = #tpu.dot_dimension_numbers<[1], [0], [0], [1], [0, 0, 1, 1], [], []>} : vector<1x16xf32>, vector<16x256xf32>, vector<1x256xf32> -> vector<1x256xf32>
      %cst_26 = arith.constant 0.0714285746 : f32
      %56 = vector.broadcast %cst_26 : f32 to vector<1x256xf32>
      %57 = arith.mulf %53, %56 : vector<1x256xf32>
      %cst_27 = arith.constant 0.0714285746 : f32
      %58 = vector.broadcast %cst_27 : f32 to vector<1x256xf32>
      %59 = arith.mulf %55, %58 : vector<1x256xf32>
      %60 = arith.mulf %57, %57 : vector<1x256xf32>
      %61 = arith.subf %59, %60 : vector<1x256xf32>
      %62 = vector.broadcast %57 : vector<1x256xf32> to vector<16x256xf32>
      %63 = arith.subf %52, %62 : vector<16x256xf32>
      %cst_28 = arith.constant 8.000000e-01 : f32
      %64 = vector.broadcast %cst_28 : f32 to vector<1x256xf32>
      %65 = arith.addf %61, %64 : vector<1x256xf32>
      %66 = math.rsqrt %65 : vector<1x256xf32>
      %67 = vector.broadcast %66 : vector<1x256xf32> to vector<16x256xf32>
      %68 = arith.mulf %63, %67 : vector<16x256xf32>
      %c0_29 = arith.constant 0 : index
      %c0_30 = arith.constant 0 : index
      %69 = vector.load %arg6[%c0_29, %c0_30] : memref<1x256xf32, #tpu.memory_space<vmem>>, vector<1x256xf32>
      %70 = vector.broadcast %69 : vector<1x256xf32> to vector<16x256xf32>
      %71 = arith.mulf %68, %70 : vector<16x256xf32>
      %c0_31 = arith.constant 0 : index
      %c0_32 = arith.constant 0 : index
      %72 = vector.load %arg7[%c0_31, %c0_32] : memref<1x256xf32, #tpu.memory_space<vmem>>, vector<1x256xf32>
      %73 = vector.broadcast %72 : vector<1x256xf32> to vector<16x256xf32>
      %74 = arith.addf %71, %73 : vector<16x256xf32>
      %cst_33 = arith.constant 2.000000e-01 : f32
      %75 = vector.broadcast %cst_33 : f32 to vector<16x256xf32>
      %76 = arith.mulf %75, %74 : vector<16x256xf32>
      %77 = arith.maximumf %74, %76 : vector<16x256xf32>
      %78 = vector.broadcast %18 : vector<16x1xf32> to vector<16x256xf32>
      %79 = arith.mulf %77, %78 : vector<16x256xf32>
      %80 = arith.truncf %79 : vector<16x256xf32> to vector<16x256xbf16>
      %c0_34 = arith.constant 0 : index
      %c0_35 = arith.constant 0 : index
      %81 = vector.load %arg8[%c0_34, %c0_35] : memref<256x512xbf16, #tpu.memory_space<vmem>>, vector<256x512xbf16>
      %cst_36 = arith.constant dense<0.000000e+00> : vector<16x512xf32>
      %82 = tpu.matmul %80, %81, %cst_36 {dimension_numbers = #tpu.dot_dimension_numbers<[1], [0], [0], [1], [0, 0, 1, 1], [], []>} : vector<16x256xbf16>, vector<256x512xbf16>, vector<16x512xf32> -> vector<16x512xf32>
      %cst_37 = arith.constant dense<0.000000e+00> : vector<1x512xf32>
      %83 = tpu.matmul %13, %82, %cst_37 {dimension_numbers = #tpu.dot_dimension_numbers<[1], [0], [0], [1], [0, 0, 1, 1], [], []>} : vector<1x16xf32>, vector<16x512xf32>, vector<1x512xf32> -> vector<1x512xf32>
      %84 = arith.mulf %82, %82 : vector<16x512xf32>
      %cst_38 = arith.constant dense<0.000000e+00> : vector<1x512xf32>
      %85 = tpu.matmul %13, %84, %cst_38 {dimension_numbers = #tpu.dot_dimension_numbers<[1], [0], [0], [1], [0, 0, 1, 1], [], []>} : vector<1x16xf32>, vector<16x512xf32>, vector<1x512xf32> -> vector<1x512xf32>
      %cst_39 = arith.constant 0.0714285746 : f32
      %86 = vector.broadcast %cst_39 : f32 to vector<1x512xf32>
      %87 = arith.mulf %83, %86 : vector<1x512xf32>
      %cst_40 = arith.constant 0.0714285746 : f32
      %88 = vector.broadcast %cst_40 : f32 to vector<1x512xf32>
      %89 = arith.mulf %85, %88 : vector<1x512xf32>
      %90 = arith.mulf %87, %87 : vector<1x512xf32>
      %91 = arith.subf %89, %90 : vector<1x512xf32>
      %92 = vector.broadcast %87 : vector<1x512xf32> to vector<16x512xf32>
      %93 = arith.subf %82, %92 : vector<16x512xf32>
      %cst_41 = arith.constant 8.000000e-01 : f32
      %94 = vector.broadcast %cst_41 : f32 to vector<1x512xf32>
      %95 = arith.addf %91, %94 : vector<1x512xf32>
      %96 = math.rsqrt %95 : vector<1x512xf32>
      %97 = vector.broadcast %96 : vector<1x512xf32> to vector<16x512xf32>
      %98 = arith.mulf %93, %97 : vector<16x512xf32>
      %c0_42 = arith.constant 0 : index
      %c0_43 = arith.constant 0 : index
      %99 = vector.load %arg9[%c0_42, %c0_43] : memref<1x512xf32, #tpu.memory_space<vmem>>, vector<1x512xf32>
      %100 = vector.broadcast %99 : vector<1x512xf32> to vector<16x512xf32>
      %101 = arith.mulf %98, %100 : vector<16x512xf32>
      %c0_44 = arith.constant 0 : index
      %c0_45 = arith.constant 0 : index
      %102 = vector.load %arg10[%c0_44, %c0_45] : memref<1x512xf32, #tpu.memory_space<vmem>>, vector<1x512xf32>
      %103 = vector.broadcast %102 : vector<1x512xf32> to vector<16x512xf32>
      %104 = arith.addf %101, %103 : vector<16x512xf32>
      %cst_46 = arith.constant 2.000000e-01 : f32
      %105 = vector.broadcast %cst_46 : f32 to vector<16x512xf32>
      %106 = arith.mulf %105, %104 : vector<16x512xf32>
      %107 = arith.maximumf %104, %106 : vector<16x512xf32>
      %108 = vector.broadcast %18 : vector<16x1xf32> to vector<16x512xf32>
      %109 = arith.mulf %107, %108 : vector<16x512xf32>
      %c0_47 = arith.constant 0 : index
      %c0_48 = arith.constant 0 : index
      %110 = vector.load %arg13[%c0_47, %c0_48] : memref<16x512xf32, #tpu.memory_space<vmem>>, vector<16x512xf32>
      tpu.vector_store %arg13[%c0_47, %c0_48], %109 {strides = array<i32>} : memref<16x512xf32, #tpu.memory_space<vmem>>, vector<16x512xf32>,
    } else {
    }
    %c8_i32 = arith.constant 8 : i32
    %3 = arith.muli %arg0, %c8_i32 : i32
    %4 = tpu.assume_multiple %3, 8 : i32
    %5 = arith.index_cast %4 : i32 to index
    %c0 = arith.constant 0 : index
    %6 = vector.load %arg13[%5, %c0] : memref<16x512xf32, #tpu.memory_space<vmem>>, vector<8x512xf32>
    %7 = arith.truncf %6 : vector<8x512xf32> to vector<8x512xbf16>
    %c0_1 = arith.constant 0 : index
    %c0_2 = arith.constant 0 : index
    %8 = vector.load %arg11[%c0_1, %c0_2] : memref<512x896xbf16, #tpu.memory_space<vmem>>, vector<512x896xbf16>
    %cst = arith.constant dense<0.000000e+00> : vector<8x896xf32>
    %9 = tpu.matmul %7, %8, %cst {dimension_numbers = #tpu.dot_dimension_numbers<[1], [0], [0], [1], [0, 0, 1, 1], [], []>} : vector<8x512xbf16>, vector<512x896xbf16>, vector<8x896xf32> -> vector<8x896xf32>
    %10 = math.tanh %9 : vector<8x896xf32>
    %11 = arith.truncf %10 : vector<8x896xf32> to vector<8x896xbf16>
    %c0_3 = arith.constant 0 : index
    %c0_4 = arith.constant 0 : index
    %12 = vector.load %arg12[%c0_3, %c0_4] : memref<8x896xbf16, #tpu.memory_space<vmem>>, vector<8x896xbf16>
    tpu.vector_store %arg12[%c0_3, %c0_4], %11 {strides = array<i32>} : memref<8x896xbf16, #tpu.memory_space<vmem>>, vector<8x896xbf16>,
    return
  }
  func.func @transform_0(%arg0: i32) -> (i32, i32) {
    %c0_i32 = arith.constant 0 : i32
    %c0_i32_0 = arith.constant 0 : i32
    %c0_i32_1 = arith.constant 0 : i32
    return %c0_i32, %c0_i32_0 : i32, i32
  }
  func.func @transform_1(%arg0: i32) -> (i32, i32) {
    %c0_i32 = arith.constant 0 : i32
    %c0_i32_0 = arith.constant 0 : i32
    %c0_i32_1 = arith.constant 0 : i32
    return %c0_i32, %c0_i32_0 : i32, i32
  }
  func.func @transform_2(%arg0: i32) -> (i32, i32) {
    %c0_i32 = arith.constant 0 : i32
    %c0_i32_0 = arith.constant 0 : i32
    %c0_i32_1 = arith.constant 0 : i32
    return %c0_i32, %c0_i32_0 : i32, i32
  }
  func.func @transform_3(%arg0: i32) -> (i32, i32) {
    %c0_i32 = arith.constant 0 : i32
    %c0_i32_0 = arith.constant 0 : i32
    %c0_i32_1 = arith.constant 0 : i32
    return %c0_i32, %c0_i32_0 : i32, i32
  }
  func.func @transform_4(%arg0: i32) -> (i32, i32) {
    %c0_i32 = arith.constant 0 : i32
    %c0_i32_0 = arith.constant 0 : i32
    %c0_i32_1 = arith.constant 0 : i32
    return %c0_i32, %c0_i32_0 : i32, i32
  }
  func.func @transform_5(%arg0: i32) -> (i32, i32) {
    %c0_i32 = arith.constant 0 : i32
    %c0_i32_0 = arith.constant 0 : i32
    %c0_i32_1 = arith.constant 0 : i32
    return %c0_i32, %c0_i32_0 : i32, i32
  }
  func.func @transform_6(%arg0: i32) -> (i32, i32) {
    %c0_i32 = arith.constant 0 : i32
    %c0_i32_0 = arith.constant 0 : i32
    %c0_i32_1 = arith.constant 0 : i32
    return %c0_i32, %c0_i32_0 : i32, i32
  }
  func.func @transform_7(%arg0: i32) -> (i32, i32) {
    %c0_i32 = arith.constant 0 : i32
    %c0_i32_0 = arith.constant 0 : i32
    %c0_i32_1 = arith.constant 0 : i32
    return %c0_i32, %c0_i32_0 : i32, i32
  }
  func.func @transform_8(%arg0: i32) -> (i32, i32) {
    %c0_i32 = arith.constant 0 : i32
    %c0_i32_0 = arith.constant 0 : i32
    %c0_i32_1 = arith.constant 0 : i32
    return %c0_i32, %c0_i32_0 : i32, i32
  }
  func.func @transform_9(%arg0: i32) -> (i32, i32) {
    %c0_i32 = arith.constant 0 : i32
    %c0_i32_0 = arith.constant 0 : i32
    %c0_i32_1 = arith.constant 0 : i32
    return %c0_i32, %c0_i32_0 : i32, i32
  }
  func.func @transform_10(%arg0: i32) -> (i32, i32) {
    %c0_i32 = arith.constant 0 : i32
    %c0_i32_0 = arith.constant 0 : i32
    %c0_i32_1 = arith.constant 0 : i32
    return %c0_i32, %c0_i32_0 : i32, i32
  }
  func.func @transform_11(%arg0: i32) -> (i32, i32) {
    %c0_i32 = arith.constant 0 : i32
    %c0_i32_0 = arith.constant 0 : i32
    return %arg0, %c0_i32 : i32, i32
  }
}

</mosaic_0001>

<llo_original>
// kernel: tpu_custom_call.1
$region0: #{tpu_custom_call.1}
  #allocation0 [shape = 'u32[]', space=smem, size = 0x4, offset = 0x4, fixed_abs, tag = 'smem constant byte address 0x4 - core index']
  #allocation1 [shape = 'u32[144,128]{1,0:T(1,128)}', space=vmem, size = 0x12000, scoped, tag = 'internal scratch']
  #allocation2 [shape = 'f32[16,512]{1,0:T(8,128)}', space=vmem, size = 0x8000, scoped, tag = 'scratch operand']
  %s0 = inlined_call_operand.hbm [shape: f32[16,64], index: 0, kind: input, shape index: {}]
  %s1 = inlined_call_operand.hbm [shape: bf16[64,128], index: 1, kind: input, shape index: {}]
  %s2 = inlined_call_operand.vmem [shape: f32[1,128], index: 2, kind: input, shape index: {}]
  %s3 = inlined_call_operand.hbm [shape: f32[1,128], index: 3, kind: input, shape index: {}]
  %s4 = inlined_call_operand.hbm [shape: bf16[128,256], index: 4, kind: input, shape index: {}]
  %s5 = inlined_call_operand.vmem [shape: f32[1,256], index: 5, kind: input, shape index: {}]
  %s6 = inlined_call_operand.vmem [shape: f32[1,256], index: 6, kind: input, shape index: {}]
  %s7 = inlined_call_operand.hbm [shape: bf16[256,512], index: 7, kind: input, shape index: {}]
  %s8 = inlined_call_operand.vmem [shape: f32[1,512], index: 8, kind: input, shape index: {}]
  %s9 = inlined_call_operand.vmem [shape: f32[1,512], index: 9, kind: input, shape index: {}]
  %s10 = inlined_call_operand.hbm [shape: bf16[512,896], index: 10, kind: input, shape index: {}]
  %s11 = inlined_call_operand.hbm [shape: bf16[16,896], index: 11, kind: output, shape index: {}]
  %s12 = sld [smem:[#allocation0]]
  $region105: #{tpu_custom_call.1} parent=0
    _
  %s14 = ssub.s32 1, %s12
  %s15 = scalar_select 0, %s14, %s12
  $region1: #{tpu_custom_call.1} parent=0
    #allocation3 [shape = 'u8[8192]{0}', space=vmem, size = 0x2000, scoped, tag = 'input window, operand 0, single buffered']
    #allocation4 [shape = 's32[2]{0}', space=sflag, size = 0x8, scoped, tag = 'scoped memory for tpu_custom_call.1']
    #allocation5 [shape = 's32[2]{0}', space=sflag, size = 0x8, scoped, tag = 'scoped memory for tpu_custom_call.1']
    #allocation6 [shape = 'u8[16384]{0}', space=vmem, size = 0x4000, scoped, tag = 'input window, operand 1, single buffered']
    #allocation7 [shape = 's32[1]{0}', space=sflag, size = 0x4, scoped, tag = 'scoped memory for tpu_custom_call.1']
    #allocation8 [shape = 'u8[512]{0}', space=vmem, size = 0x400, scoped, tag = 'input window, operand 3, single buffered']
    #allocation9 [shape = 'u8[65536]{0}', space=vmem, size = 0x10000, scoped, tag = 'input window, operand 4, single buffered']
    #allocation10 [shape = 's32[1]{0}', space=sflag, size = 0x4, scoped, tag = 'scoped memory for tpu_custom_call.1']
    #allocation11 [shape = 'u8[262144]{0}', space=vmem, size = 0x40000, scoped, tag = 'input window, operand 7, single buffered']
    #allocation12 [shape = 'u8[917504]{0}', space=vmem, size = 0xe0000, scoped, tag = 'input window, operand 10, single buffered']
    #allocation13 [shape = 's32[1]{0}', space=sflag, size = 0x4, scoped, tag = 'scoped memory for tpu_custom_call.1']
    #allocation14 [shape = 'u8[28672]{0}', space=vmem, size = 0x7000, scoped, tag = 'output window, operand 0']
    %16 = vsyncpa [#allocation4], 0
    %17 = vsyncpa [#allocation7], 0
    %18 = vsyncpa [#allocation10], 0
    %19 = vsyncpa [#allocation13], 0
    %20 = vsyncpa [#allocation5], 0
    %s21 = scalar_lea.sflag [#allocation5], 1
    %22 = vsyncpa %s21, 0
    loop: start=0, step=1, limit=4
    $region2: #{tpu_custom_call.1} parent=1 // loop_pre_header
      _
    $region3: #{tpu_custom_call.1} parent=1 // loop_header
      %s24 = sphi 0, %s28
      %p25 = scmp.ge.s32.totalorder %s24, 4
      %s32 = sphi 0, %s32
      %s34 = sphi 0, %s32
      %s35 = sphi 0, %s34
      %s49 = sphi 0, %s35
      %s53 = sphi 0, %s53
      %s55 = sphi 0, %s53
      %s56 = sphi 0, %s55
      %s70 = sphi 0, %s56
      %s74 = sphi 0, %s74
      %s76 = sphi 0, %s74
      %s77 = sphi 0, %s76
      %s91 = sphi 0, %s77
      %s95 = sphi 0, %s95
      %s97 = sphi 0, %s95
      %s98 = sphi 0, %s97
      %s112 = sphi 0, %s98
      %s116 = sphi 0, %s116
      %s118 = sphi 0, %s116
      %s119 = sphi 0, %s118
      %s133 = sphi 0, %s119
      %s137 = sphi 0, %s137
      %s139 = sphi 0, %s137
      %s140 = sphi 0, %s139
      %s154 = sphi 0, %s140
      %s158 = sphi 0, %s158
      %s160 = sphi 0, %s158
      %s161 = sphi 0, %s160
      %s175 = sphi 0, %s161
      %s179 = sphi 0, %s179
      %s181 = sphi 0, %s179
      %s182 = sphi 0, %s181
      %s196 = sphi 0, %s182
      %s200 = sphi 0, %s200
      %s202 = sphi 0, %s200
      %s203 = sphi 0, %s202
      %s217 = sphi 0, %s203
      %s221 = sphi 0, %s221
      %s223 = sphi 0, %s221
      %s224 = sphi 0, %s223
      %s238 = sphi 0, %s224
      %s242 = sphi 0, %s242
      %s244 = sphi 0, %s242
      %s245 = sphi 0, %s244
      %s259 = sphi 0, %s245
      %s265 = sphi 0, %s267
      %s268 = sphi 0, %s265
      %s269 = sphi 0, %s268
      %s285 = sphi 0, %s269
    $region4: #{tpu_custom_call.1} parent=1 // loop_header_branch
      %27 = sbr.rel (%p25) target = $region8
    $region5: #{tpu_custom_call.1} parent=1 // loop_body
      %s29 = ssub.s32 %s24, 1
      %s30 = ssub.s32 %s24, 2
      %s31 = sadd.s32 %s24, 1
      %s33 = sadd.s32 %s32, 1
      %p36 = scmp.eq.s32.totalorder %s24, 1
      %p37 = scmp.ne.s32.totalorder %s32, %s34
      %p38 = scmp.eq.s32.totalorder %s24, 0
      %p39 = por %p37, %p38
      %p40 = scmp.ne.s32.totalorder %s32, %s34
      %p41 = scmp.eq.s32.totalorder %s29, 1
      %p42 = por %p40, %p41
      %p43 = scmp.ne.s32.totalorder %s34, %s35
      %p44 = scmp.eq.s32.totalorder %s29, 0
      %p45 = por %p43, %p44
      %p46 = scmp.ne.s32.totalorder %s34, %s35
      %p47 = scmp.eq.s32.totalorder %s30, 1
      %p48 = por %p46, %p47
      %p50 = scmp.ne.s32.totalorder %s35, %s49
      %p51 = scmp.eq.s32.totalorder %s30, 0
      %p52 = por %p50, %p51
      %s54 = sadd.s32 %s53, 1
      %p57 = scmp.eq.s32.totalorder %s24, 1
      %p58 = scmp.ne.s32.totalorder %s53, %s55
      %p59 = scmp.eq.s32.totalorder %s24, 0
      %p60 = por %p58, %p59
      %p61 = scmp.ne.s32.totalorder %s53, %s55
      %p62 = scmp.eq.s32.totalorder %s29, 1
      %p63 = por %p61, %p62
      %p64 = scmp.ne.s32.totalorder %s55, %s56
      %p65 = scmp.eq.s32.totalorder %s29, 0
      %p66 = por %p64, %p65
      %p67 = scmp.ne.s32.totalorder %s55, %s56
      %p68 = scmp.eq.s32.totalorder %s30, 1
      %p69 = por %p67, %p68
      %p71 = scmp.ne.s32.totalorder %s56, %s70
      %p72 = scmp.eq.s32.totalorder %s30, 0
      %p73 = por %p71, %p72
      %s75 = sadd.s32 %s74, 1
      %p78 = scmp.eq.s32.totalorder %s24, 1
      %p79 = scmp.ne.s32.totalorder %s74, %s76
      %p80 = scmp.eq.s32.totalorder %s24, 0
      %p81 = por %p79, %p80
      %p82 = scmp.ne.s32.totalorder %s74, %s76
      %p83 = scmp.eq.s32.totalorder %s29, 1
      %p84 = por %p82, %p83
      %p85 = scmp.ne.s32.totalorder %s76, %s77
      %p86 = scmp.eq.s32.totalorder %s29, 0
      %p87 = por %p85, %p86
      %p88 = scmp.ne.s32.totalorder %s76, %s77
      %p89 = scmp.eq.s32.totalorder %s30, 1
      %p90 = por %p88, %p89
      %p92 = scmp.ne.s32.totalorder %s77, %s91
      %p93 = scmp.eq.s32.totalorder %s30, 0
      %p94 = por %p92, %p93
      %s96 = sadd.s32 %s95, 1
      %p99 = scmp.eq.s32.totalorder %s24, 1
      %p100 = scmp.ne.s32.totalorder %s95, %s97
      %p101 = scmp.eq.s32.totalorder %s24, 0
      %p102 = por %p100, %p101
      %p103 = scmp.ne.s32.totalorder %s95, %s97
      %p104 = scmp.eq.s32.totalorder %s29, 1
      %p105 = por %p103, %p104
      %p106 = scmp.ne.s32.totalorder %s97, %s98
      %p107 = scmp.eq.s32.totalorder %s29, 0
      %p108 = por %p106, %p107
      %p109 = scmp.ne.s32.totalorder %s97, %s98
      %p110 = scmp.eq.s32.totalorder %s30, 1
      %p111 = por %p109, %p110
      %p113 = scmp.ne.s32.totalorder %s98, %s112
      %p114 = scmp.eq.s32.totalorder %s30, 0
      %p115 = por %p113, %p114
      %s117 = sadd.s32 %s116, 1
      %p120 = scmp.eq.s32.totalorder %s24, 1
      %p121 = scmp.ne.s32.totalorder %s116, %s118
      %p122 = scmp.eq.s32.totalorder %s24, 0
      %p123 = por %p121, %p122
      %p124 = scmp.ne.s32.totalorder %s116, %s118
      %p125 = scmp.eq.s32.totalorder %s29, 1
      %p126 = por %p124, %p125
      %p127 = scmp.ne.s32.totalorder %s118, %s119
      %p128 = scmp.eq.s32.totalorder %s29, 0
      %p129 = por %p127, %p128
      %p130 = scmp.ne.s32.totalorder %s118, %s119
      %p131 = scmp.eq.s32.totalorder %s30, 1
      %p132 = por %p130, %p131
      %p134 = scmp.ne.s32.totalorder %s119, %s133
      %p135 = scmp.eq.s32.totalorder %s30, 0
      %p136 = por %p134, %p135
      %s138 = sadd.s32 %s137, 1
      %p141 = scmp.eq.s32.totalorder %s24, 1
      %p142 = scmp.ne.s32.totalorder %s137, %s139
      %p143 = scmp.eq.s32.totalorder %s24, 0
      %p144 = por %p142, %p143
      %p145 = scmp.ne.s32.totalorder %s137, %s139
      %p146 = scmp.eq.s32.totalorder %s29, 1
      %p147 = por %p145, %p146
      %p148 = scmp.ne.s32.totalorder %s139, %s140
      %p149 = scmp.eq.s32.totalorder %s29, 0
      %p150 = por %p148, %p149
      %p151 = scmp.ne.s32.totalorder %s139, %s140
      %p152 = scmp.eq.s32.totalorder %s30, 1
      %p153 = por %p151, %p152
      %p155 = scmp.ne.s32.totalorder %s140, %s154
      %p156 = scmp.eq.s32.totalorder %s30, 0
      %p157 = por %p155, %p156
      %s159 = sadd.s32 %s158, 1
      %p162 = scmp.eq.s32.totalorder %s24, 1
      %p163 = scmp.ne.s32.totalorder %s158, %s160
      %p164 = scmp.eq.s32.totalorder %s24, 0
      %p165 = por %p163, %p164
      %p166 = scmp.ne.s32.totalorder %s158, %s160
      %p167 = scmp.eq.s32.totalorder %s29, 1
      %p168 = por %p166, %p167
      %p169 = scmp.ne.s32.totalorder %s160, %s161
      %p170 = scmp.eq.s32.totalorder %s29, 0
      %p171 = por %p169, %p170
      %p172 = scmp.ne.s32.totalorder %s160, %s161
      %p173 = scmp.eq.s32.totalorder %s30, 1
      %p174 = por %p172, %p173
      %p176 = scmp.ne.s32.totalorder %s161, %s175
      %p177 = scmp.eq.s32.totalorder %s30, 0
      %p178 = por %p176, %p177
      %s180 = sadd.s32 %s179, 1
      %p183 = scmp.eq.s32.totalorder %s24, 1
      %p184 = scmp.ne.s32.totalorder %s179, %s181
      %p185 = scmp.eq.s32.totalorder %s24, 0
      %p186 = por %p184, %p185
      %p187 = scmp.ne.s32.totalorder %s179, %s181
      %p188 = scmp.eq.s32.totalorder %s29, 1
      %p189 = por %p187, %p188
      %p190 = scmp.ne.s32.totalorder %s181, %s182
      %p191 = scmp.eq.s32.totalorder %s29, 0
      %p192 = por %p190, %p191
      %p193 = scmp.ne.s32.totalorder %s181, %s182
      %p194 = scmp.eq.s32.totalorder %s30, 1
      %p195 = por %p193, %p194
      %p197 = scmp.ne.s32.totalorder %s182, %s196
      %p198 = scmp.eq.s32.totalorder %s30, 0
      %p199 = por %p197, %p198
      %s201 = sadd.s32 %s200, 1
      %p204 = scmp.eq.s32.totalorder %s24, 1
      %p205 = scmp.ne.s32.totalorder %s200, %s202
      %p206 = scmp.eq.s32.totalorder %s24, 0
      %p207 = por %p205, %p206
      %p208 = scmp.ne.s32.totalorder %s200, %s202
      %p209 = scmp.eq.s32.totalorder %s29, 1
      %p210 = por %p208, %p209
      %p211 = scmp.ne.s32.totalorder %s202, %s203
      %p212 = scmp.eq.s32.totalorder %s29, 0
      %p213 = por %p211, %p212
      %p214 = scmp.ne.s32.totalorder %s202, %s203
      %p215 = scmp.eq.s32.totalorder %s30, 1
      %p216 = por %p214, %p215
      %p218 = scmp.ne.s32.totalorder %s203, %s217
      %p219 = scmp.eq.s32.totalorder %s30, 0
      %p220 = por %p218, %p219
      %s222 = sadd.s32 %s221, 1
      %p225 = scmp.eq.s32.totalorder %s24, 1
      %p226 = scmp.ne.s32.totalorder %s221, %s223
      %p227 = scmp.eq.s32.totalorder %s24, 0
      %p228 = por %p226, %p227
      %p229 = scmp.ne.s32.totalorder %s221, %s223
      %p230 = scmp.eq.s32.totalorder %s29, 1
      %p231 = por %p229, %p230
      %p232 = scmp.ne.s32.totalorder %s223, %s224
      %p233 = scmp.eq.s32.totalorder %s29, 0
      %p234 = por %p232, %p233
      %p235 = scmp.ne.s32.totalorder %s223, %s224
      %p236 = scmp.eq.s32.totalorder %s30, 1
      %p237 = por %p235, %p236
      %p239 = scmp.ne.s32.totalorder %s224, %s238
      %p240 = scmp.eq.s32.totalorder %s30, 0
      %p241 = por %p239, %p240
      %s243 = sadd.s32 %s242, 1
      %p246 = scmp.eq.s32.totalorder %s24, 1
      %p247 = scmp.ne.s32.totalorder %s242, %s244
      %p248 = scmp.eq.s32.totalorder %s24, 0
      %p249 = por %p247, %p248
      %p250 = scmp.ne.s32.totalorder %s242, %s244
      %p251 = scmp.eq.s32.totalorder %s29, 1
      %p252 = por %p250, %p251
      %p253 = scmp.ne.s32.totalorder %s244, %s245
      %p254 = scmp.eq.s32.totalorder %s29, 0
      %p255 = por %p253, %p254
      %p256 = scmp.ne.s32.totalorder %s244, %s245
      %p257 = scmp.eq.s32.totalorder %s30, 1
      %p258 = por %p256, %p257
      %p260 = scmp.ne.s32.totalorder %s245, %s259
      %p261 = scmp.eq.s32.totalorder %s30, 0
      %p262 = por %p260, %p261
      %s263 = ssub.s32 %s24, %s31
      %p264 = scmp.eq.s32.totalorder %s263, 0
      %s266 = sadd.s32 %s265, 1
      %s267 = scalar_select %p264, %s265, %s266
      %p270 = pneg %p264
      %p271 = scmp.eq.s32.totalorder %s24, 1
      %p272 = por %p270, %p271
      %p273 = scmp.ne.s32.totalorder %s265, %s268
      %p274 = scmp.eq.s32.totalorder %s24, 0
      %p275 = por %p273, %p274
      %p276 = scmp.ne.s32.totalorder %s265, %s268
      %p277 = scmp.eq.s32.totalorder %s29, 1
      %p278 = por %p276, %p277
      %p279 = scmp.ne.s32.totalorder %s268, %s269
      %p280 = scmp.eq.s32.totalorder %s29, 0
      %p281 = por %p279, %p280
      %p282 = scmp.ne.s32.totalorder %s268, %s269
      %p283 = scmp.eq.s32.totalorder %s30, 1
      %p284 = por %p282, %p283
      %p286 = scmp.ne.s32.totalorder %s269, %s285
      %p287 = scmp.eq.s32.totalorder %s30, 0
      %p288 = por %p286, %p287
      %p289 = scmp.le.s32.totalorder 1, %s24
      %p290 = scmp.lt.s32.totalorder %s24, 3
      %p291 = pnand %p289, %p290
      %p292 = pneg %p291
      // Predicated region
      $region9: #{tpu_custom_call.1} parent=5 // pred_check
        _
      $region10: #{tpu_custom_call.1} parent=5 // pred_check_branch
        %294 = sbr.rel (%p291) target = $region12
      $region11: #{tpu_custom_call.1} parent=5 // pred_region
        %s295 = ssub.s32 %s24, 1
        // Predicated region
        $region13: #{tpu_custom_call.1} parent=11 // pred_check
          %p296 = pneg %p45
        $region14: #{tpu_custom_call.1} parent=11 // pred_check_branch
          %298 = sbr.rel (%p296) target = $region16
        $region15: #{tpu_custom_call.1} parent=11 // pred_region
          %s300 = ssub.s32 256, 256
          %301 = vsyncadd [#allocation4], %s300
          %s302 = sshll.u32 [#allocation3], 4
          %s303 = int_to_ptr.vmem [resolvable:$true] %s302
          %308 = dma.hbm_to_vmem [thread:$0]  %s0, 256, %s303, [#allocation4], 128, 128, 8
        $region16: #{tpu_custom_call.1} parent=11 // pred_fallthru
          _
        // Predicated region
        $region17: #{tpu_custom_call.1} parent=11 // pred_check
          %p309 = pneg %p66
        $region18: #{tpu_custom_call.1} parent=11 // pred_check_branch
          %311 = sbr.rel (%p309) target = $region20
        $region19: #{tpu_custom_call.1} parent=11 // pred_region
          %s313 = ssub.s32 512, 512
          %314 = vsyncadd [#allocation7], %s313
          %s315 = sshll.u32 [#allocation6], 4
          %s316 = int_to_ptr.vmem [resolvable:$true] %s315
          %321 = dma.hbm_to_vmem [thread:$0]  %s1, 512, %s316, [#allocation7], 64, 64, 4
        $region20: #{tpu_custom_call.1} parent=11 // pred_fallthru
          _
        // Predicated region
        $region21: #{tpu_custom_call.1} parent=11 // pred_check
          %p322 = pneg %p87
        $region22: #{tpu_custom_call.1} parent=11 // pred_check_branch
          %324 = sbr.rel (%p322) target = $region24
        $region23: #{tpu_custom_call.1} parent=11 // pred_region
          _
        $region24: #{tpu_custom_call.1} parent=11 // pred_fallthru
          _
        // Predicated region
        $region25: #{tpu_custom_call.1} parent=11 // pred_check
          %p325 = pneg %p108
        $region26: #{tpu_custom_call.1} parent=11 // pred_check_branch
          %327 = sbr.rel (%p325) target = $region28
        $region27: #{tpu_custom_call.1} parent=11 // pred_region
          %s329 = ssub.s32 16, 16
          %330 = vsyncadd [#allocation7], %s329
          %s332 = sshll.u32 [#allocation8], 4
          %s333 = int_to_ptr.vmem [resolvable:$true] %s332
          %335 = dma.hbm_to_vmem [thread:$0]  %s3, 16, %s333, [#allocation7]
        $region28: #{tpu_custom_call.1} parent=11 // pred_fallthru
          _
        // Predicated region
        $region29: #{tpu_custom_call.1} parent=11 // pred_check
          %p336 = pneg %p129
        $region30: #{tpu_custom_call.1} parent=11 // pred_check_branch
          %338 = sbr.rel (%p336) target = $region32
        $region31: #{tpu_custom_call.1} parent=11 // pred_region
          %s340 = ssub.s32 2048, 2048
          %341 = vsyncadd [#allocation10], %s340
          %s342 = sshll.u32 [#allocation9], 4
          %s343 = int_to_ptr.vmem [resolvable:$true] %s342
          %348 = dma.hbm_to_vmem [thread:$0]  %s4, 2048, %s343, [#allocation10], 128, 128, 8
        $region32: #{tpu_custom_call.1} parent=11 // pred_fallthru
          _
        // Predicated region
        $region33: #{tpu_custom_call.1} parent=11 // pred_check
          %p349 = pneg %p150
        $region34: #{tpu_custom_call.1} parent=11 // pred_check_branch
          %351 = sbr.rel (%p349) target = $region36
        $region35: #{tpu_custom_call.1} parent=11 // pred_region
          _
        $region36: #{tpu_custom_call.1} parent=11 // pred_fallthru
          _
        // Predicated region
        $region37: #{tpu_custom_call.1} parent=11 // pred_check
          %p352 = pneg %p171
        $region38: #{tpu_custom_call.1} parent=11 // pred_check_branch
          %354 = sbr.rel (%p352) target = $region40
        $region39: #{tpu_custom_call.1} parent=11 // pred_region
          _
        $region40: #{tpu_custom_call.1} parent=11 // pred_fallthru
          _
        // Predicated region
        $region41: #{tpu_custom_call.1} parent=11 // pred_check
          %p355 = pneg %p192
        $region42: #{tpu_custom_call.1} parent=11 // pred_check_branch
          %357 = sbr.rel (%p355) target = $region44
        $region43: #{tpu_custom_call.1} parent=11 // pred_region
          %s359 = ssub.s32 8192, 8192
          %360 = vsyncadd [#allocation10], %s359
          %s361 = sshll.u32 [#allocation11], 4
          %s362 = int_to_ptr.vmem [resolvable:$true] %s361
          %367 = dma.hbm_to_vmem [thread:$0]  %s7, 8192, %s362, [#allocation10], 256, 256, 16
        $region44: #{tpu_custom_call.1} parent=11 // pred_fallthru
          _
        // Predicated region
        $region45: #{tpu_custom_call.1} parent=11 // pred_check
          %p368 = pneg %p213
        $region46: #{tpu_custom_call.1} parent=11 // pred_check_branch
          %370 = sbr.rel (%p368) target = $region48
        $region47: #{tpu_custom_call.1} parent=11 // pred_region
          _
        $region48: #{tpu_custom_call.1} parent=11 // pred_fallthru
          _
        // Predicated region
        $region49: #{tpu_custom_call.1} parent=11 // pred_check
          %p371 = pneg %p234
        $region50: #{tpu_custom_call.1} parent=11 // pred_check_branch
          %373 = sbr.rel (%p371) target = $region52
        $region51: #{tpu_custom_call.1} parent=11 // pred_region
          _
        $region52: #{tpu_custom_call.1} parent=11 // pred_fallthru
          _
        // Predicated region
        $region53: #{tpu_custom_call.1} parent=11 // pred_check
          %p374 = pneg %p255
        $region54: #{tpu_custom_call.1} parent=11 // pred_check_branch
          %376 = sbr.rel (%p374) target = $region56
        $region55: #{tpu_custom_call.1} parent=11 // pred_region
          %s378 = ssub.s32 28672, 28672
          %379 = vsyncadd [#allocation13], %s378
          %s380 = sshll.u32 [#allocation12], 4
          %s381 = int_to_ptr.vmem [resolvable:$true] %s380
          %386 = dma.hbm_to_vmem [thread:$0]  %s10, 28672, %s381, [#allocation13], 448, 448, 28
        $region56: #{tpu_custom_call.1} parent=11 // pred_fallthru
          _
      $region12: #{tpu_custom_call.1} parent=5 // pred_fallthru
        _
      %p387 = scmp.lt.s32.totalorder %s24, 2
      // Predicated region
      $region57: #{tpu_custom_call.1} parent=5 // pred_check
        %p388 = pneg %p387
      $region58: #{tpu_custom_call.1} parent=5 // pred_check_branch
        %390 = sbr.rel (%p388) target = $region60
      $region59: #{tpu_custom_call.1} parent=5 // pred_region
        _
      $region60: #{tpu_custom_call.1} parent=5 // pred_fallthru
        _
      %p391 = scmp.le.s32.totalorder 1, %s24
      %p392 = scmp.lt.s32.totalorder %s24, 3
      %p393 = pnand %p391, %p392
      %p394 = pneg %p393
      // Predicated region
      $region61: #{tpu_custom_call.1} parent=5 // pred_check
        _
      $region62: #{tpu_custom_call.1} parent=5 // pred_check_branch
        %396 = sbr.rel (%p393) target = $region64
      $region63: #{tpu_custom_call.1} parent=5 // pred_region
        %s397 = ssub.s32 %s24, 1
        // Predicated region
        $region65: #{tpu_custom_call.1} parent=63 // pred_check
          %p398 = pneg %p45
        $region66: #{tpu_custom_call.1} parent=63 // pred_check_branch
          %400 = sbr.rel (%p398) target = $region68
        $region67: #{tpu_custom_call.1} parent=63 // pred_region
          %401 = dma.done [#allocation4], 256
        $region68: #{tpu_custom_call.1} parent=63 // pred_fallthru
          _
        // Predicated region
        $region69: #{tpu_custom_call.1} parent=63 // pred_check
          %p402 = pneg %p66
        $region70: #{tpu_custom_call.1} parent=63 // pred_check_branch
          %404 = sbr.rel (%p402) target = $region72
        $region71: #{tpu_custom_call.1} parent=63 // pred_region
          %405 = dma.done [#allocation7], 512
        $region72: #{tpu_custom_call.1} parent=63 // pred_fallthru
          _
        // Predicated region
        $region73: #{tpu_custom_call.1} parent=63 // pred_check
          %p406 = pneg %p108
        $region74: #{tpu_custom_call.1} parent=63 // pred_check_branch
          %408 = sbr.rel (%p406) target = $region76
        $region75: #{tpu_custom_call.1} parent=63 // pred_region
          %409 = dma.done [#allocation7], 16
        $region76: #{tpu_custom_call.1} parent=63 // pred_fallthru
          _
        // Predicated region
        $region77: #{tpu_custom_call.1} parent=63 // pred_check
          %p410 = pneg %p129
        $region78: #{tpu_custom_call.1} parent=63 // pred_check_branch
          %412 = sbr.rel (%p410) target = $region80
        $region79: #{tpu_custom_call.1} parent=63 // pred_region
          %413 = dma.done [#allocation10], 2048
        $region80: #{tpu_custom_call.1} parent=63 // pred_fallthru
          _
        // Predicated region
        $region81: #{tpu_custom_call.1} parent=63 // pred_check
          %p414 = pneg %p192
        $region82: #{tpu_custom_call.1} parent=63 // pred_check_branch
          %416 = sbr.rel (%p414) target = $region84
        $region83: #{tpu_custom_call.1} parent=63 // pred_region
          %417 = dma.done [#allocation10], 8192
        $region84: #{tpu_custom_call.1} parent=63 // pred_fallthru
          _
        // Predicated region
        $region85: #{tpu_custom_call.1} parent=63 // pred_check
          %p418 = pneg %p255
        $region86: #{tpu_custom_call.1} parent=63 // pred_check_branch
          %420 = sbr.rel (%p418) target = $region88
        $region87: #{tpu_custom_call.1} parent=63 // pred_region
          %421 = dma.done [#allocation13], 28672
        $region88: #{tpu_custom_call.1} parent=63 // pred_fallthru
          _
        %p422 = pneg %p45
        %p423 = pneg %p42
        %p424 = pneg %p66
        %p425 = pneg %p63
        %p426 = pneg %p87
        %p427 = pneg %p84
        %p428 = pneg %p108
        %p429 = pneg %p105
        %p430 = pneg %p129
        %p431 = pneg %p126
        %p432 = pneg %p150
        %p433 = pneg %p147
        %p434 = pneg %p171
        %p435 = pneg %p168
        %p436 = pneg %p192
        %p437 = pneg %p189
        %p438 = pneg %p213
        %p439 = pneg %p210
        %p440 = pneg %p234
        %p441 = pneg %p231
        %p442 = pneg %p255
        %p443 = pneg %p252
        %p444 = pneg %p281
        %p445 = pneg %p278
        %s446 = sand.u32 %s268, 1
        %s447 = scalar_lea.sflag [#allocation5], %s446
        %s448 = sand.u32 %s268, 1
        %s449 = smul.addr %s448, 28
        %s450 = scalar_lea.vmem [#allocation14], %s449
        %p452 = scmp.eq.s32.totalorder %s29, 0
        // Predicated region
        $region89: #{tpu_custom_call.1} parent=63 // pred_check
          %p453 = pneg %p452
        $region90: #{tpu_custom_call.1} parent=63 // pred_check_branch
          %455 = sbr.rel (%p453) target = $region92
        $region91: #{tpu_custom_call.1} parent=63 // pred_region
          %v456 = vlaneseq
          %v457 = vshrl.u32 %v456, 7
          %v458 = vadd.s32 %v457, 8
          %vm459 = vcmp.lt.s32.totalorder %v457, 14
          %vm460 = vcmp.lt.s32.totalorder %v458, 14
          %v461 = vsel %vm459, 1, 0
          %v462 = vsel %vm460, 1, 0
          %v463 = vcvt.s32.f32 %v461
          %v464 = vcvt.s32.f32 %v462
          %v465 = vld [vmem:[#allocation3] sm:$0xff]
          %v466 = vld [vmem:[#allocation3 + $0x8] sm:$0xff]
          %v467 = vpack.c.bf16 %v466, %v465
          %v468 = vld [vmem:[#allocation6] sm:$0xf]
          %v469 = vld [vmem:[#allocation6 + $0x4] sm:$0xf]
          %v470 = vld [vmem:[#allocation6 + $0x8] sm:$0xf]
          %v471 = vld [vmem:[#allocation6 + $0xc] sm:$0xf]
          %v472 = vld [vmem:[#allocation6 + $0x10] sm:$0xf]
          %v473 = vld [vmem:[#allocation6 + $0x14] sm:$0xf]
          %v474 = vld [vmem:[#allocation6 + $0x18] sm:$0xf]
          %v475 = vld [vmem:[#allocation6 + $0x1c] sm:$0xf]
          %v484 = vunpack.c.l.b16 %v468
          %v485 = vunpack.c.l.b16 %v469
          %v486 = vunpack.c.l.b16 %v470
          %v487 = vunpack.c.l.b16 %v471
          %v488 = vunpack.c.l.b16 %v472
          %v489 = vunpack.c.l.b16 %v473
          %v490 = vunpack.c.l.b16 %v474
          %v491 = vunpack.c.l.b16 %v475
          %v492 = vpack.c.b16 %v485, %v484
          %v493 = vpack.c.b16 %v487, %v486
          %v494 = vpack.c.b16 %v489, %v488
          %v495 = vpack.c.b16 %v491, %v490
          %vm500 = vcmask 523264
          %v502 = vsel %vm500, %v467, 0
          %504 = vmatprep.subr.bf16.mxu0 0
          %505 = vmatpush1.bf16.msra.mxu0 %v492
          %506 = vmatprep.subr.bf16.mxu0 0
          %507 = vmatpush1.bf16.msra.mxu0 %v493
          %508 = vmatprep.subr.bf16.mxu0 0
          %509 = vmatpush1.bf16.msra.mxu0 %v494
          %510 = vmatprep.subr.bf16.mxu0 0
          %511 = vmatpush1.bf16.msra.mxu0 %v495
          %512 = vmatprep.subr.bf16.mxu0 0
          %513 = vmatpush1.bf16.msra.mxu0 0
          %514 = vmatprep.subr.bf16.mxu0 0
          %515 = vmatpush1.bf16.msra.mxu0 0
          %516 = vmatprep.subr.bf16.mxu0 0
          %517 = vmatpush1.bf16.msra.mxu0 0
          %518 = vmatprep.subr.bf16.mxu0 0
          %519 = vmatpush1.bf16.msra.mxu0 0
          %520 = vmatprep.subr.bf16.mxu0 0
          %521 = vmatpush1.bf16.msra.mxu0 0
          %522 = vmatprep.subr.bf16.mxu0 0
          %523 = vmatpush1.bf16.msra.mxu0 0
          %524 = vmatprep.subr.bf16.mxu0 0
          %525 = vmatpush1.bf16.msra.mxu0 0
          %526 = vmatprep.subr.bf16.mxu0 0
          %527 = vmatpush1.bf16.msra.mxu0 0
          %528 = vmatprep.subr.bf16.mxu0 0
          %529 = vmatpush1.bf16.msra.mxu0 0
          %530 = vmatprep.subr.bf16.mxu0 0
          %531 = vmatpush1.bf16.msra.mxu0 0
          %532 = vmatprep.subr.bf16.mxu0 0
          %533 = vmatpush1.bf16.msra.mxu0 0
          %534 = vmatprep.subr.bf16.mxu0 0
          %535 = vmatpush1.bf16.msra.mxu0 0
          %536 = vmatprep.mubr.bf16.mxu0 0
          %537 = vmatmul.mubr.bf16.gmra.mrb[0].mxu0 %v502
          %v538 = vpop.f32.mrb[0].mxu0
          %v539 = vadd.f32 0.0, %v538
          %v540 = vpop.f32.mrb[0].mxu0
          %v541 = vpop.f32.mrb[0].mxu0
          %v542 = vadd.f32 0.0, %v541
          %v543 = vpop.f32.mrb[0].mxu0
          %544 = vdwg.mxu0
          %vm545 = vcmask 130048
          %v547 = vsel %vm545, 1.0, 0
          %549 = vmatprep.subr.mxu0 0.0
          %550 = vmatpush1.msra.mxu0 %v539
          %551 = vmatprep.subr.mxu0 0.0
          %552 = vmatpush1.msra.mxu0 %v542
          %553 = vmatprep.subr.mxu0 0.0
          %554 = vmatpush1.msra.mxu0 0.0
          %555 = vmatprep.subr.mxu0 0.0
          %556 = vmatpush1.msra.mxu0 0.0
          %557 = vmatprep.subr.mxu0 0.0
          %558 = vmatpush1.msra.mxu0 0.0
          %559 = vmatprep.subr.mxu0 0.0
          %560 = vmatpush1.msra.mxu0 0.0
          %561 = vmatprep.subr.mxu0 0.0
          %562 = vmatpush1.msra.mxu0 0.0
          %563 = vmatprep.subr.mxu0 0.0
          %564 = vmatpush1.msra.mxu0 0.0
          %565 = vmatprep.subr.mxu0 0.0
          %566 = vmatpush1.msra.mxu0 0.0
          %567 = vmatprep.subr.mxu0 0.0
          %568 = vmatpush1.msra.mxu0 0.0
          %569 = vmatprep.subr.mxu0 0.0
          %570 = vmatpush1.msra.mxu0 0.0
          %571 = vmatprep.subr.mxu0 0.0
          %572 = vmatpush1.msra.mxu0 0.0
          %573 = vmatprep.subr.mxu0 0.0
          %574 = vmatpush1.msra.mxu0 0.0
          %575 = vmatprep.subr.mxu0 0.0
          %576 = vmatpush1.msra.mxu0 0.0
          %577 = vmatprep.subr.mxu0 0.0
          %578 = vmatpush1.msra.mxu0 0.0
          %579 = vmatprep.subr.mxu0 0.0
          %580 = vmatpush1.msra.mxu0 0.0
          %581 = vmatprep.subr.mxu0 0.0
          %582 = vmatpush1.msra.mxu0 0.0
          %583 = vmatprep.subr.mxu0 0.0
          %584 = vmatpush1.msra.mxu0 0.0
          %585 = vmatprep.subr.mxu0 0.0
          %586 = vmatpush1.msra.mxu0 0.0
          %587 = vmatprep.subr.mxu0 0.0
          %588 = vmatpush1.msra.mxu0 0.0
          %589 = vmatprep.subr.mxu0 0.0
          %590 = vmatpush1.msra.mxu0 0.0
          %591 = vmatprep.subr.mxu0 0.0
          %592 = vmatpush1.msra.mxu0 0.0
          %593 = vmatprep.subr.mxu0 0.0
          %594 = vmatpush1.msra.mxu0 0.0
          %595 = vmatprep.subr.mxu0 0.0
          %596 = vmatpush1.msra.mxu0 0.0
          %597 = vmatprep.subr.mxu0 0.0
          %598 = vmatpush1.msra.mxu0 0.0
          %599 = vmatprep.subr.mxu0 0.0
          %600 = vmatpush1.msra.mxu0 0.0
          %601 = vmatprep.subr.mxu0 0.0
          %602 = vmatpush1.msra.mxu0 0.0
          %603 = vmatprep.subr.mxu0 0.0
          %604 = vmatpush1.msra.mxu0 0.0
          %605 = vmatprep.subr.mxu0 0.0
          %606 = vmatpush1.msra.mxu0 0.0
          %607 = vmatprep.subr.mxu0 0.0
          %608 = vmatpush1.msra.mxu0 0.0
          %609 = vmatprep.subr.mxu0 0.0
          %610 = vmatpush1.msra.mxu0 0.0
          %611 = vmatprep.subr.mxu0 0.0
          %612 = vmatpush1.msra.mxu0 0.0
          %613 = vmatprep.mubr.f32.mxu0 0.0
          %614 = vmatmul.mubr.f32.gmra.mrb[0].mxu0 %v547
          %v615 = vpop.f32.mrb[0].mxu0
          %v616 = vadd.f32 0.0, %v615
          %v617 = vpop.f32.mrb[0].mxu0
          %618 = vdwg.mxu0
          %v619 = vmul.f32 %v539, %v539
          %v620 = vmul.f32 %v542, %v542
          %621 = vmatprep.subr.mxu0 0.0
          %622 = vmatpush1.msra.mxu0 %v619
          %623 = vmatprep.subr.mxu0 0.0
          %624 = vmatpush1.msra.mxu0 %v620
          %625 = vmatprep.subr.mxu0 0.0
          %626 = vmatpush1.msra.mxu0 0.0
          %627 = vmatprep.subr.mxu0 0.0
          %628 = vmatpush1.msra.mxu0 0.0
          %629 = vmatprep.subr.mxu0 0.0
          %630 = vmatpush1.msra.mxu0 0.0
          %631 = vmatprep.subr.mxu0 0.0
          %632 = vmatpush1.msra.mxu0 0.0
          %633 = vmatprep.subr.mxu0 0.0
          %634 = vmatpush1.msra.mxu0 0.0
          %635 = vmatprep.subr.mxu0 0.0
          %636 = vmatpush1.msra.mxu0 0.0
          %637 = vmatprep.subr.mxu0 0.0
          %638 = vmatpush1.msra.mxu0 0.0
          %639 = vmatprep.subr.mxu0 0.0
          %640 = vmatpush1.msra.mxu0 0.0
          %641 = vmatprep.subr.mxu0 0.0
          %642 = vmatpush1.msra.mxu0 0.0
          %643 = vmatprep.subr.mxu0 0.0
          %644 = vmatpush1.msra.mxu0 0.0
          %645 = vmatprep.subr.mxu0 0.0
          %646 = vmatpush1.msra.mxu0 0.0
          %647 = vmatprep.subr.mxu0 0.0
          %648 = vmatpush1.msra.mxu0 0.0
          %649 = vmatprep.subr.mxu0 0.0
          %650 = vmatpush1.msra.mxu0 0.0
          %651 = vmatprep.subr.mxu0 0.0
          %652 = vmatpush1.msra.mxu0 0.0
          %653 = vmatprep.subr.mxu0 0.0
          %654 = vmatpush1.msra.mxu0 0.0
          %655 = vmatprep.subr.mxu0 0.0
          %656 = vmatpush1.msra.mxu0 0.0
          %657 = vmatprep.subr.mxu0 0.0
          %658 = vmatpush1.msra.mxu0 0.0
          %659 = vmatprep.subr.mxu0 0.0
          %660 = vmatpush1.msra.mxu0 0.0
          %661 = vmatprep.subr.mxu0 0.0
          %662 = vmatpush1.msra.mxu0 0.0
          %663 = vmatprep.subr.mxu0 0.0
          %664 = vmatpush1.msra.mxu0 0.0
          %665 = vmatprep.subr.mxu0 0.0
          %666 = vmatpush1.msra.mxu0 0.0
          %667 = vmatprep.subr.mxu0 0.0
          %668 = vmatpush1.msra.mxu0 0.0
          %669 = vmatprep.subr.mxu0 0.0
          %670 = vmatpush1.msra.mxu0 0.0
          %671 = vmatprep.subr.mxu0 0.0
          %672 = vmatpush1.msra.mxu0 0.0
          %673 = vmatprep.subr.mxu0 0.0
          %674 = vmatpush1.msra.mxu0 0.0
          %675 = vmatprep.subr.mxu0 0.0
          %676 = vmatpush1.msra.mxu0 0.0
          %677 = vmatprep.subr.mxu0 0.0
          %678 = vmatpush1.msra.mxu0 0.0
          %679 = vmatprep.subr.mxu0 0.0
          %680 = vmatpush1.msra.mxu0 0.0
          %681 = vmatprep.subr.mxu0 0.0
          %682 = vmatpush1.msra.mxu0 0.0
          %683 = vmatprep.subr.mxu0 0.0
          %684 = vmatpush1.msra.mxu0 0.0
          %685 = vmatprep.mubr.f32.mxu0 0.0
          %686 = vmatmul.mubr.f32.gmra.mrb[0].mxu0 %v547
          %v687 = vpop.f32.mrb[0].mxu0
          %v688 = vadd.f32 0.0, %v687
          %v689 = vpop.f32.mrb[0].mxu0
          %690 = vdwg.mxu0
          %v691 = vmul.f32 %v616, 0.071428575
          %v692 = vmul.f32 %v688, 0.071428575
          %v693 = vmul.f32 %v691, %v691
          %v694 = vsub.f32 %v692, %v693
          %v695 = vlaneseq
          %v696 = vshrl.u32 %v695, 7
          %v697 = vsub.s32 0, %v696
          %v698 = vrot.slane %v691, %v697
          %v699 = vsub.f32 %v539, %v698
          %v700 = vsub.f32 %v542, %v698
          %v701 = vadd.f32 %v694, 0.8
          %v702 = vrsqrt.pop %v701
          %v703 = vlaneseq
          %v704 = vshrl.u32 %v703, 7
          %v705 = vsub.s32 0, %v704
          %v706 = vrot.slane %v702, %v705
          %v707 = vmul.f32 %v699, %v706
          %v708 = vmul.f32 %v700, %v706
          %v709 = vld [vmem:[%s2] sm:$0x1]
          %v711 = vlaneseq
          %v712 = vshrl.u32 %v711, 7
          %v713 = vsub.s32 0, %v712
          %v714 = vrot.slane %v709, %v713
          %v716 = vmul.f32 %v707, %v714
          %v717 = vmul.f32 %v708, %v714
          %v718 = vld [vmem:[#allocation8] sm:$0x1]
          %v720 = vlaneseq
          %v721 = vshrl.u32 %v720, 7
          %v722 = vsub.s32 0, %v721
          %v723 = vrot.slane %v718, %v722
          %v725 = vadd.f32 %v716, %v723
          %v726 = vadd.f32 %v717, %v723
          %v727 = vmul.f32 %v725, 0.2
          %v728 = vmul.f32 %v726, 0.2
          %v729 = vmax.f32 %v725, %v727
          %v730 = vmax.f32 %v726, %v728
          %v731 = vmul.f32 %v729, %v463
          %v732 = vmul.f32 %v730, %v464
          %v733 = vpack.c.bf16 %v732, %v731
          %v734 = vld [vmem:[#allocation9] sm:$0xff]
          %v735 = vld [vmem:[#allocation9 + $0x8] sm:$0xff]
          %v736 = vld [vmem:[#allocation9 + $0x10] sm:$0xff]
          %v737 = vld [vmem:[#allocation9 + $0x18] sm:$0xff]
          %v738 = vld [vmem:[#allocation9 + $0x20] sm:$0xff]
          %v739 = vld [vmem:[#allocation9 + $0x28] sm:$0xff]
          %v740 = vld [vmem:[#allocation9 + $0x30] sm:$0xff]
          %v741 = vld [vmem:[#allocation9 + $0x38] sm:$0xff]
          %v742 = vld [vmem:[#allocation9 + $0x40] sm:$0xff]
          %v743 = vld [vmem:[#allocation9 + $0x48] sm:$0xff]
          %v744 = vld [vmem:[#allocation9 + $0x50] sm:$0xff]
          %v745 = vld [vmem:[#allocation9 + $0x58] sm:$0xff]
          %v746 = vld [vmem:[#allocation9 + $0x60] sm:$0xff]
          %v747 = vld [vmem:[#allocation9 + $0x68] sm:$0xff]
          %v748 = vld [vmem:[#allocation9 + $0x70] sm:$0xff]
          %v749 = vld [vmem:[#allocation9 + $0x78] sm:$0xff]
          %v766 = vunpack.c.l.b16 %v734
          %v767 = vunpack.c.h.b16 %v734
          %v768 = vunpack.c.l.b16 %v735
          %v769 = vunpack.c.h.b16 %v735
          %v770 = vunpack.c.l.b16 %v736
          %v771 = vunpack.c.h.b16 %v736
          %v772 = vunpack.c.l.b16 %v737
          %v773 = vunpack.c.h.b16 %v737
          %v774 = vunpack.c.l.b16 %v738
          %v775 = vunpack.c.h.b16 %v738
          %v776 = vunpack.c.l.b16 %v739
          %v777 = vunpack.c.h.b16 %v739
          %v778 = vunpack.c.l.b16 %v740
          %v779 = vunpack.c.h.b16 %v740
          %v780 = vunpack.c.l.b16 %v741
          %v781 = vunpack.c.h.b16 %v741
          %v782 = vunpack.c.l.b16 %v742
          %v783 = vunpack.c.h.b16 %v742
          %v784 = vunpack.c.l.b16 %v743
          %v785 = vunpack.c.h.b16 %v743
          %v786 = vunpack.c.l.b16 %v744
          %v787 = vunpack.c.h.b16 %v744
          %v788 = vunpack.c.l.b16 %v745
          %v789 = vunpack.c.h.b16 %v745
          %v790 = vunpack.c.l.b16 %v746
          %v791 = vunpack.c.h.b16 %v746
          %v792 = vunpack.c.l.b16 %v747
          %v793 = vunpack.c.h.b16 %v747
          %v794 = vunpack.c.l.b16 %v748
          %v795 = vunpack.c.h.b16 %v748
          %v796 = vunpack.c.l.b16 %v749
          %v797 = vunpack.c.h.b16 %v749
          %v798 = vpack.c.b16 %v768, %v766
          %v799 = vpack.c.b16 %v769, %v767
          %v800 = vpack.c.b16 %v772, %v770
          %v801 = vpack.c.b16 %v773, %v771
          %v802 = vpack.c.b16 %v776, %v774
          %v803 = vpack.c.b16 %v777, %v775
          %v804 = vpack.c.b16 %v780, %v778
          %v805 = vpack.c.b16 %v781, %v779
          %v806 = vpack.c.b16 %v784, %v782
          %v807 = vpack.c.b16 %v785, %v783
          %v808 = vpack.c.b16 %v788, %v786
          %v809 = vpack.c.b16 %v789, %v787
          %v810 = vpack.c.b16 %v792, %v790
          %v811 = vpack.c.b16 %v793, %v791
          %v812 = vpack.c.b16 %v796, %v794
          %v813 = vpack.c.b16 %v797, %v795
          %830 = vmatprep.subr.bf16.mxu0 %v799
          %831 = vmatpush1.bf16.msra.mxu0 %v798
          %832 = vmatprep.subr.bf16.mxu0 %v801
          %833 = vmatpush1.bf16.msra.mxu0 %v800
          %834 = vmatprep.subr.bf16.mxu0 %v803
          %835 = vmatpush1.bf16.msra.mxu0 %v802
          %836 = vmatprep.subr.bf16.mxu0 %v805
          %837 = vmatpush1.bf16.msra.mxu0 %v804
          %838 = vmatprep.subr.bf16.mxu0 %v807
          %839 = vmatpush1.bf16.msra.mxu0 %v806
          %840 = vmatprep.subr.bf16.mxu0 %v809
          %841 = vmatpush1.bf16.msra.mxu0 %v808
          %842 = vmatprep.subr.bf16.mxu0 %v811
          %843 = vmatpush1.bf16.msra.mxu0 %v810
          %844 = vmatprep.subr.bf16.mxu0 %v813
          %845 = vmatpush1.bf16.msra.mxu0 %v812
          %846 = vmatprep.subr.bf16.mxu0 0
          %847 = vmatpush1.bf16.msra.mxu0 0
          %848 = vmatprep.subr.bf16.mxu0 0
          %849 = vmatpush1.bf16.msra.mxu0 0
          %850 = vmatprep.subr.bf16.mxu0 0
          %851 = vmatpush1.bf16.msra.mxu0 0
          %852 = vmatprep.subr.bf16.mxu0 0
          %853 = vmatpush1.bf16.msra.mxu0 0
          %854 = vmatprep.subr.bf16.mxu0 0
          %855 = vmatpush1.bf16.msra.mxu0 0
          %856 = vmatprep.subr.bf16.mxu0 0
          %857 = vmatpush1.bf16.msra.mxu0 0
          %858 = vmatprep.subr.bf16.mxu0 0
          %859 = vmatpush1.bf16.msra.mxu0 0
          %860 = vmatprep.subr.bf16.mxu0 0
          %861 = vmatpush1.bf16.msra.mxu0 0
          %862 = vmatprep.mubr.bf16.mxu0 0
          %863 = vmatmul.mubr.bf16.gmra.mrb[0].mxu0 %v733
          %v864 = vpop.f32.mrb[0].mxu0
          %v865 = vadd.f32 0.0, %v864
          %v866 = vpop.f32.mrb[0].mxu0
          %v867 = vadd.f32 0.0, %v866
          %v868 = vpop.f32.mrb[0].mxu0
          %v869 = vadd.f32 0.0, %v868
          %v870 = vpop.f32.mrb[0].mxu0
          %v871 = vadd.f32 0.0, %v870
          %872 = vdwg.mxu0
          %873 = vmatprep.subr.mxu0 %v867
          %874 = vmatpush1.msra.mxu0 %v865
          %875 = vmatprep.subr.mxu0 %v871
          %876 = vmatpush1.msra.mxu0 %v869
          %877 = vmatprep.subr.mxu0 0.0
          %878 = vmatpush1.msra.mxu0 0.0
          %879 = vmatprep.subr.mxu0 0.0
          %880 = vmatpush1.msra.mxu0 0.0
          %881 = vmatprep.subr.mxu0 0.0
          %882 = vmatpush1.msra.mxu0 0.0
          %883 = vmatprep.subr.mxu0 0.0
          %884 = vmatpush1.msra.mxu0 0.0
          %885 = vmatprep.subr.mxu0 0.0
          %886 = vmatpush1.msra.mxu0 0.0
          %887 = vmatprep.subr.mxu0 0.0
          %888 = vmatpush1.msra.mxu0 0.0
          %889 = vmatprep.subr.mxu0 0.0
          %890 = vmatpush1.msra.mxu0 0.0
          %891 = vmatprep.subr.mxu0 0.0
          %892 = vmatpush1.msra.mxu0 0.0
          %893 = vmatprep.subr.mxu0 0.0
          %894 = vmatpush1.msra.mxu0 0.0
          %895 = vmatprep.subr.mxu0 0.0
          %896 = vmatpush1.msra.mxu0 0.0
          %897 = vmatprep.subr.mxu0 0.0
          %898 = vmatpush1.msra.mxu0 0.0
          %899 = vmatprep.subr.mxu0 0.0
          %900 = vmatpush1.msra.mxu0 0.0
          %901 = vmatprep.subr.mxu0 0.0
          %902 = vmatpush1.msra.mxu0 0.0
          %903 = vmatprep.subr.mxu0 0.0
          %904 = vmatpush1.msra.mxu0 0.0
          %905 = vmatprep.subr.mxu0 0.0
          %906 = vmatpush1.msra.mxu0 0.0
          %907 = vmatprep.subr.mxu0 0.0
          %908 = vmatpush1.msra.mxu0 0.0
          %909 = vmatprep.subr.mxu0 0.0
          %910 = vmatpush1.msra.mxu0 0.0
          %911 = vmatprep.subr.mxu0 0.0
          %912 = vmatpush1.msra.mxu0 0.0
          %913 = vmatprep.subr.mxu0 0.0
          %914 = vmatpush1.msra.mxu0 0.0
          %915 = vmatprep.subr.mxu0 0.0
          %916 = vmatpush1.msra.mxu0 0.0
          %917 = vmatprep.subr.mxu0 0.0
          %918 = vmatpush1.msra.mxu0 0.0
          %919 = vmatprep.subr.mxu0 0.0
          %920 = vmatpush1.msra.mxu0 0.0
          %921 = vmatprep.subr.mxu0 0.0
          %922 = vmatpush1.msra.mxu0 0.0
          %923 = vmatprep.subr.mxu0 0.0
          %924 = vmatpush1.msra.mxu0 0.0
          %925 = vmatprep.subr.mxu0 0.0
          %926 = vmatpush1.msra.mxu0 0.0
          %927 = vmatprep.subr.mxu0 0.0
          %928 = vmatpush1.msra.mxu0 0.0
          %929 = vmatprep.subr.mxu0 0.0
          %930 = vmatpush1.msra.mxu0 0.0
          %931 = vmatprep.subr.mxu0 0.0
          %932 = vmatpush1.msra.mxu0 0.0
          %933 = vmatprep.subr.mxu0 0.0
          %934 = vmatpush1.msra.mxu0 0.0
          %935 = vmatprep.subr.mxu0 0.0
          %936 = vmatpush1.msra.mxu0 0.0
          %937 = vmatprep.mubr.f32.mxu0 0.0
          %938 = vmatmul.mubr.f32.gmra.mrb[0].mxu0 %v547
          %v939 = vpop.f32.mrb[0].mxu0
          %v940 = vadd.f32 0.0, %v939
          %v941 = vpop.f32.mrb[0].mxu0
          %v942 = vadd.f32 0.0, %v941
          %943 = vdwg.mxu0
          %v944 = vmul.f32 %v865, %v865
          %v945 = vmul.f32 %v867, %v867
          %v946 = vmul.f32 %v869, %v869
          %v947 = vmul.f32 %v871, %v871
          %948 = vmatprep.subr.mxu0 %v945
          %949 = vmatpush1.msra.mxu0 %v944
          %950 = vmatprep.subr.mxu0 %v947
          %951 = vmatpush1.msra.mxu0 %v946
          %952 = vmatprep.subr.mxu0 0.0
          %953 = vmatpush1.msra.mxu0 0.0
          %954 = vmatprep.subr.mxu0 0.0
          %955 = vmatpush1.msra.mxu0 0.0
          %956 = vmatprep.subr.mxu0 0.0
          %957 = vmatpush1.msra.mxu0 0.0
          %958 = vmatprep.subr.mxu0 0.0
          %959 = vmatpush1.msra.mxu0 0.0
          %960 = vmatprep.subr.mxu0 0.0
          %961 = vmatpush1.msra.mxu0 0.0
          %962 = vmatprep.subr.mxu0 0.0
          %963 = vmatpush1.msra.mxu0 0.0
          %964 = vmatprep.subr.mxu0 0.0
          %965 = vmatpush1.msra.mxu0 0.0
          %966 = vmatprep.subr.mxu0 0.0
          %967 = vmatpush1.msra.mxu0 0.0
          %968 = vmatprep.subr.mxu0 0.0
          %969 = vmatpush1.msra.mxu0 0.0
          %970 = vmatprep.subr.mxu0 0.0
          %971 = vmatpush1.msra.mxu0 0.0
          %972 = vmatprep.subr.mxu0 0.0
          %973 = vmatpush1.msra.mxu0 0.0
          %974 = vmatprep.subr.mxu0 0.0
          %975 = vmatpush1.msra.mxu0 0.0
          %976 = vmatprep.subr.mxu0 0.0
          %977 = vmatpush1.msra.mxu0 0.0
          %978 = vmatprep.subr.mxu0 0.0
          %979 = vmatpush1.msra.mxu0 0.0
          %980 = vmatprep.subr.mxu0 0.0
          %981 = vmatpush1.msra.mxu0 0.0
          %982 = vmatprep.subr.mxu0 0.0
          %983 = vmatpush1.msra.mxu0 0.0
          %984 = vmatprep.subr.mxu0 0.0
          %985 = vmatpush1.msra.mxu0 0.0
          %986 = vmatprep.subr.mxu0 0.0
          %987 = vmatpush1.msra.mxu0 0.0
          %988 = vmatprep.subr.mxu0 0.0
          %989 = vmatpush1.msra.mxu0 0.0
          %990 = vmatprep.subr.mxu0 0.0
          %991 = vmatpush1.msra.mxu0 0.0
          %992 = vmatprep.subr.mxu0 0.0
          %993 = vmatpush1.msra.mxu0 0.0
          %994 = vmatprep.subr.mxu0 0.0
          %995 = vmatpush1.msra.mxu0 0.0
          %996 = vmatprep.subr.mxu0 0.0
          %997 = vmatpush1.msra.mxu0 0.0
          %998 = vmatprep.subr.mxu0 0.0
          %999 = vmatpush1.msra.mxu0 0.0
          %1000 = vmatprep.subr.mxu0 0.0
          %1001 = vmatpush1.msra.mxu0 0.0
          %1002 = vmatprep.subr.mxu0 0.0
          %1003 = vmatpush1.msra.mxu0 0.0
          %1004 = vmatprep.subr.mxu0 0.0
          %1005 = vmatpush1.msra.mxu0 0.0
          %1006 = vmatprep.subr.mxu0 0.0
          %1007 = vmatpush1.msra.mxu0 0.0
          %1008 = vmatprep.subr.mxu0 0.0
          %1009 = vmatpush1.msra.mxu0 0.0
          %1010 = vmatprep.subr.mxu0 0.0
          %1011 = vmatpush1.msra.mxu0 0.0
          %1012 = vmatprep.mubr.f32.mxu0 0.0
          %1013 = vmatmul.mubr.f32.gmra.mrb[0].mxu0 %v547
          %v1014 = vpop.f32.mrb[0].mxu0
          %v1015 = vadd.f32 0.0, %v1014
          %v1016 = vpop.f32.mrb[0].mxu0
          %v1017 = vadd.f32 0.0, %v1016
          %1018 = vdwg.mxu0
          %v1019 = vmul.f32 %v940, 0.071428575
          %v1020 = vmul.f32 %v942, 0.071428575
          %v1021 = vmul.f32 %v1015, 0.071428575
          %v1022 = vmul.f32 %v1017, 0.071428575
          %v1023 = vmul.f32 %v1019, %v1019
          %v1024 = vmul.f32 %v1020, %v1020
          %v1025 = vsub.f32 %v1021, %v1023
          %v1026 = vsub.f32 %v1022, %v1024
          %v1027 = vlaneseq
          %v1028 = vshrl.u32 %v1027, 7
          %v1029 = vsub.s32 0, %v1028
          %v1030 = vrot.slane %v1019, %v1029
          %v1031 = vlaneseq
          %v1032 = vshrl.u32 %v1031, 7
          %v1033 = vsub.s32 0, %v1032
          %v1034 = vrot.slane %v1020, %v1033
          %v1035 = vsub.f32 %v865, %v1030
          %v1036 = vsub.f32 %v867, %v1034
          %v1037 = vsub.f32 %v869, %v1030
          %v1038 = vsub.f32 %v871, %v1034
          %v1039 = vadd.f32 %v1025, 0.8
          %v1040 = vadd.f32 %v1026, 0.8
          %v1041 = vrsqrt.pop %v1039
          %v1042 = vrsqrt.pop %v1040
          %v1043 = vlaneseq
          %v1044 = vshrl.u32 %v1043, 7
          %v1045 = vsub.s32 0, %v1044
          %v1046 = vrot.slane %v1041, %v1045
          %v1047 = vlaneseq
          %v1048 = vshrl.u32 %v1047, 7
          %v1049 = vsub.s32 0, %v1048
          %v1050 = vrot.slane %v1042, %v1049
          %v1051 = vmul.f32 %v1035, %v1046
          %v1052 = vmul.f32 %v1036, %v1050
          %v1053 = vmul.f32 %v1037, %v1046
          %v1054 = vmul.f32 %v1038, %v1050
          %v1055 = vld [vmem:[%s5] sm:$0x3]
          %v1057 = vlaneseq
          %v1058 = vshrl.u32 %v1057, 7
          %v1059 = vsub.s32 0, %v1058
          %v1060 = vrot.slane %v1055, %v1059
          %v1061 = vlaneseq
          %v1062 = vshrl.u32 %v1061, 7
          %v1063 = vsub.s32 1, %v1062
          %v1064 = vrot.slane %v1055, %v1063
          %v1067 = vmul.f32 %v1051, %v1060
          %v1068 = vmul.f32 %v1052, %v1064
          %v1069 = vmul.f32 %v1053, %v1060
          %v1070 = vmul.f32 %v1054, %v1064
          %v1071 = vld [vmem:[%s6] sm:$0x3]
          %v1073 = vlaneseq
          %v1074 = vshrl.u32 %v1073, 7
          %v1075 = vsub.s32 0, %v1074
          %v1076 = vrot.slane %v1071, %v1075
          %v1077 = vlaneseq
          %v1078 = vshrl.u32 %v1077, 7
          %v1079 = vsub.s32 1, %v1078
          %v1080 = vrot.slane %v1071, %v1079
          %v1083 = vadd.f32 %v1067, %v1076
          %v1084 = vadd.f32 %v1068, %v1080
          %v1085 = vadd.f32 %v1069, %v1076
          %v1086 = vadd.f32 %v1070, %v1080
          %v1087 = vmul.f32 %v1083, 0.2
          %v1088 = vmul.f32 %v1084, 0.2
          %v1089 = vmul.f32 %v1085, 0.2
          %v1090 = vmul.f32 %v1086, 0.2
          %v1091 = vmax.f32 %v1083, %v1087
          %v1092 = vmax.f32 %v1084, %v1088
          %v1093 = vmax.f32 %v1085, %v1089
          %v1094 = vmax.f32 %v1086, %v1090
          %v1095 = vmul.f32 %v1091, %v463
          %v1096 = vmul.f32 %v1092, %v463
          %v1097 = vmul.f32 %v1093, %v464
          %v1098 = vmul.f32 %v1094, %v464
          %v1099 = vpack.c.bf16 %v1097, %v1095
          %v1100 = vpack.c.bf16 %v1098, %v1096
          %v1101 = vld [vmem:[#allocation11] sm:$0xff]
          %v1102 = vld [vmem:[#allocation11 + $0x8] sm:$0xff]
          %v1103 = vld [vmem:[#allocation11 + $0x10] sm:$0xff]
          %v1104 = vld [vmem:[#allocation11 + $0x18] sm:$0xff]
          %v1105 = vld [vmem:[#allocation11 + $0x20] sm:$0xff]
          %v1106 = vld [vmem:[#allocation11 + $0x28] sm:$0xff]
          %v1107 = vld [vmem:[#allocation11 + $0x30] sm:$0xff]
          %v1108 = vld [vmem:[#allocation11 + $0x38] sm:$0xff]
          %v1109 = vld [vmem:[#allocation11 + $0x40] sm:$0xff]
          %v1110 = vld [vmem:[#allocation11 + $0x48] sm:$0xff]
          %v1111 = vld [vmem:[#allocation11 + $0x50] sm:$0xff]
          %v1112 = vld [vmem:[#allocation11 + $0x58] sm:$0xff]
          %v1113 = vld [vmem:[#allocation11 + $0x60] sm:$0xff]
          %v1114 = vld [vmem:[#allocation11 + $0x68] sm:$0xff]
          %v1115 = vld [vmem:[#allocation11 + $0x70] sm:$0xff]
          %v1116 = vld [vmem:[#allocation11 + $0x78] sm:$0xff]
          %v1117 = vld [vmem:[#allocation11 + $0x80] sm:$0xff]
          %v1118 = vld [vmem:[#allocation11 + $0x88] sm:$0xff]
          %v1119 = vld [vmem:[#allocation11 + $0x90] sm:$0xff]
          %v1120 = vld [vmem:[#allocation11 + $0x98] sm:$0xff]
          %v1121 = vld [vmem:[#allocation11 + $0xa0] sm:$0xff]
          %v1122 = vld [vmem:[#allocation11 + $0xa8] sm:$0xff]
          %v1123 = vld [vmem:[#allocation11 + $0xb0] sm:$0xff]
          %v1124 = vld [vmem:[#allocation11 + $0xb8] sm:$0xff]
          %v1125 = vld [vmem:[#allocation11 + $0xc0] sm:$0xff]
          %v1126 = vld [vmem:[#allocation11 + $0xc8] sm:$0xff]
          %v1127 = vld [vmem:[#allocation11 + $0xd0] sm:$0xff]
          %v1128 = vld [vmem:[#allocation11 + $0xd8] sm:$0xff]
          %v1129 = vld [vmem:[#allocation11 + $0xe0] sm:$0xff]
          %v1130 = vld [vmem:[#allocation11 + $0xe8] sm:$0xff]
          %v1131 = vld [vmem:[#allocation11 + $0xf0] sm:$0xff]
          %v1132 = vld [vmem:[#allocation11 + $0xf8] sm:$0xff]
          %v1133 = vld [vmem:[#allocation11 + $0x100] sm:$0xff]
          %v1134 = vld [vmem:[#allocation11 + $0x108] sm:$0xff]
          %v1135 = vld [vmem:[#allocation11 + $0x110] sm:$0xff]
          %v1136 = vld [vmem:[#allocation11 + $0x118] sm:$0xff]
          %v1137 = vld [vmem:[#allocation11 + $0x120] sm:$0xff]
          %v1138 = vld [vmem:[#allocation11 + $0x128] sm:$0xff]
          %v1139 = vld [vmem:[#allocation11 + $0x130] sm:$0xff]
          %v1140 = vld [vmem:[#allocation11 + $0x138] sm:$0xff]
          %v1141 = vld [vmem:[#allocation11 + $0x140] sm:$0xff]
          %v1142 = vld [vmem:[#allocation11 + $0x148] sm:$0xff]
          %v1143 = vld [vmem:[#allocation11 + $0x150] sm:$0xff]
          %v1144 = vld [vmem:[#allocation11 + $0x158] sm:$0xff]
          %v1145 = vld [vmem:[#allocation11 + $0x160] sm:$0xff]
          %v1146 = vld [vmem:[#allocation11 + $0x168] sm:$0xff]
          %v1147 = vld [vmem:[#allocation11 + $0x170] sm:$0xff]
          %v1148 = vld [vmem:[#allocation11 + $0x178] sm:$0xff]
          %v1149 = vld [vmem:[#allocation11 + $0x180] sm:$0xff]
          %v1150 = vld [vmem:[#allocation11 + $0x188] sm:$0xff]
          %v1151 = vld [vmem:[#allocation11 + $0x190] sm:$0xff]
          %v1152 = vld [vmem:[#allocation11 + $0x198] sm:$0xff]
          %v1153 = vld [vmem:[#allocation11 + $0x1a0] sm:$0xff]
          %v1154 = vld [vmem:[#allocation11 + $0x1a8] sm:$0xff]
          %v1155 = vld [vmem:[#allocation11 + $0x1b0] sm:$0xff]
          %v1156 = vld [vmem:[#allocation11 + $0x1b8] sm:$0xff]
          %v1157 = vld [vmem:[#allocation11 + $0x1c0] sm:$0xff]
          %v1158 = vld [vmem:[#allocation11 + $0x1c8] sm:$0xff]
          %v1159 = vld [vmem:[#allocation11 + $0x1d0] sm:$0xff]
          %v1160 = vld [vmem:[#allocation11 + $0x1d8] sm:$0xff]
          %v1161 = vld [vmem:[#allocation11 + $0x1e0] sm:$0xff]
          %v1162 = vld [vmem:[#allocation11 + $0x1e8] sm:$0xff]
          %v1163 = vld [vmem:[#allocation11 + $0x1f0] sm:$0xff]
          %v1164 = vld [vmem:[#allocation11 + $0x1f8] sm:$0xff]
          %v1229 = vunpack.c.l.b16 %v1101
          %v1230 = vunpack.c.h.b16 %v1101
          %v1231 = vunpack.c.l.b16 %v1102
          %v1232 = vunpack.c.h.b16 %v1102
          %v1233 = vunpack.c.l.b16 %v1103
          %v1234 = vunpack.c.h.b16 %v1103
          %v1235 = vunpack.c.l.b16 %v1104
          %v1236 = vunpack.c.h.b16 %v1104
          %v1237 = vunpack.c.l.b16 %v1105
          %v1238 = vunpack.c.h.b16 %v1105
          %v1239 = vunpack.c.l.b16 %v1106
          %v1240 = vunpack.c.h.b16 %v1106
          %v1241 = vunpack.c.l.b16 %v1107
          %v1242 = vunpack.c.h.b16 %v1107
          %v1243 = vunpack.c.l.b16 %v1108
          %v1244 = vunpack.c.h.b16 %v1108
          %v1245 = vunpack.c.l.b16 %v1109
          %v1246 = vunpack.c.h.b16 %v1109
          %v1247 = vunpack.c.l.b16 %v1110
          %v1248 = vunpack.c.h.b16 %v1110
          %v1249 = vunpack.c.l.b16 %v1111
          %v1250 = vunpack.c.h.b16 %v1111
          %v1251 = vunpack.c.l.b16 %v1112
          %v1252 = vunpack.c.h.b16 %v1112
          %v1253 = vunpack.c.l.b16 %v1113
          %v1254 = vunpack.c.h.b16 %v1113
          %v1255 = vunpack.c.l.b16 %v1114
          %v1256 = vunpack.c.h.b16 %v1114
          %v1257 = vunpack.c.l.b16 %v1115
          %v1258 = vunpack.c.h.b16 %v1115
          %v1259 = vunpack.c.l.b16 %v1116
          %v1260 = vunpack.c.h.b16 %v1116
          %v1261 = vunpack.c.l.b16 %v1117
          %v1262 = vunpack.c.h.b16 %v1117
          %v1263 = vunpack.c.l.b16 %v1118
          %v1264 = vunpack.c.h.b16 %v1118
          %v1265 = vunpack.c.l.b16 %v1119
          %v1266 = vunpack.c.h.b16 %v1119
          %v1267 = vunpack.c.l.b16 %v1120
          %v1268 = vunpack.c.h.b16 %v1120
          %v1269 = vunpack.c.l.b16 %v1121
          %v1270 = vunpack.c.h.b16 %v1121
          %v1271 = vunpack.c.l.b16 %v1122
          %v1272 = vunpack.c.h.b16 %v1122
          %v1273 = vunpack.c.l.b16 %v1123
          %v1274 = vunpack.c.h.b16 %v1123
          %v1275 = vunpack.c.l.b16 %v1124
          %v1276 = vunpack.c.h.b16 %v1124
          %v1277 = vunpack.c.l.b16 %v1125
          %v1278 = vunpack.c.h.b16 %v1125
          %v1279 = vunpack.c.l.b16 %v1126
          %v1280 = vunpack.c.h.b16 %v1126
          %v1281 = vunpack.c.l.b16 %v1127
          %v1282 = vunpack.c.h.b16 %v1127
          %v1283 = vunpack.c.l.b16 %v1128
          %v1284 = vunpack.c.h.b16 %v1128
          %v1285 = vunpack.c.l.b16 %v1129
          %v1286 = vunpack.c.h.b16 %v1129
          %v1287 = vunpack.c.l.b16 %v1130
          %v1288 = vunpack.c.h.b16 %v1130
          %v1289 = vunpack.c.l.b16 %v1131
          %v1290 = vunpack.c.h.b16 %v1131
          %v1291 = vunpack.c.l.b16 %v1132
          %v1292 = vunpack.c.h.b16 %v1132
          %v1293 = vunpack.c.l.b16 %v1133
          %v1294 = vunpack.c.h.b16 %v1133
          %v1295 = vunpack.c.l.b16 %v1134
          %v1296 = vunpack.c.h.b16 %v1134
          %v1297 = vunpack.c.l.b16 %v1135
          %v1298 = vunpack.c.h.b16 %v1135
          %v1299 = vunpack.c.l.b16 %v1136
          %v1300 = vunpack.c.h.b16 %v1136
          %v1301 = vunpack.c.l.b16 %v1137
          %v1302 = vunpack.c.h.b16 %v1137
          %v1303 = vunpack.c.l.b16 %v1138
          %v1304 = vunpack.c.h.b16 %v1138
          %v1305 = vunpack.c.l.b16 %v1139
          %v1306 = vunpack.c.h.b16 %v1139
          %v1307 = vunpack.c.l.b16 %v1140
          %v1308 = vunpack.c.h.b16 %v1140
          %v1309 = vunpack.c.l.b16 %v1141
          %v1310 = vunpack.c.h.b16 %v1141
          %v1311 = vunpack.c.l.b16 %v1142
          %v1312 = vunpack.c.h.b16 %v1142
          %v1313 = vunpack.c.l.b16 %v1143
          %v1314 = vunpack.c.h.b16 %v1143
          %v1315 = vunpack.c.l.b16 %v1144
          %v1316 = vunpack.c.h.b16 %v1144
          %v1317 = vunpack.c.l.b16 %v1145
          %v1318 = vunpack.c.h.b16 %v1145
          %v1319 = vunpack.c.l.b16 %v1146
          %v1320 = vunpack.c.h.b16 %v1146
          %v1321 = vunpack.c.l.b16 %v1147
          %v1322 = vunpack.c.h.b16 %v1147
          %v1323 = vunpack.c.l.b16 %v1148
          %v1324 = vunpack.c.h.b16 %v1148
          %v1325 = vunpack.c.l.b16 %v1149
          %v1326 = vunpack.c.h.b16 %v1149
          %v1327 = vunpack.c.l.b16 %v1150
          %v1328 = vunpack.c.h.b16 %v1150
          %v1329 = vunpack.c.l.b16 %v1151
          %v1330 = vunpack.c.h.b16 %v1151
          %v1331 = vunpack.c.l.b16 %v1152
          %v1332 = vunpack.c.h.b16 %v1152
          %v1333 = vunpack.c.l.b16 %v1153
          %v1334 = vunpack.c.h.b16 %v1153
          %v1335 = vunpack.c.l.b16 %v1154
          %v1336 = vunpack.c.h.b16 %v1154
          %v1337 = vunpack.c.l.b16 %v1155
          %v1338 = vunpack.c.h.b16 %v1155
          %v1339 = vunpack.c.l.b16 %v1156
          %v1340 = vunpack.c.h.b16 %v1156
          %v1341 = vunpack.c.l.b16 %v1157
          %v1342 = vunpack.c.h.b16 %v1157
          %v1343 = vunpack.c.l.b16 %v1158
          %v1344 = vunpack.c.h.b16 %v1158
          %v1345 = vunpack.c.l.b16 %v1159
          %v1346 = vunpack.c.h.b16 %v1159
          %v1347 = vunpack.c.l.b16 %v1160
          %v1348 = vunpack.c.h.b16 %v1160
          %v1349 = vunpack.c.l.b16 %v1161
          %v1350 = vunpack.c.h.b16 %v1161
          %v1351 = vunpack.c.l.b16 %v1162
          %v1352 = vunpack.c.h.b16 %v1162
          %v1353 = vunpack.c.l.b16 %v1163
          %v1354 = vunpack.c.h.b16 %v1163
          %v1355 = vunpack.c.l.b16 %v1164
          %v1356 = vunpack.c.h.b16 %v1164
          %v1357 = vpack.c.b16 %v1233, %v1229
          %v1358 = vpack.c.b16 %v1234, %v1230
          %v1359 = vpack.c.b16 %v1235, %v1231
          %v1360 = vpack.c.b16 %v1236, %v1232
          %v1361 = vpack.c.b16 %v1241, %v1237
          %v1362 = vpack.c.b16 %v1242, %v1238
          %v1363 = vpack.c.b16 %v1243, %v1239
          %v1364 = vpack.c.b16 %v1244, %v1240
          %v1365 = vpack.c.b16 %v1249, %v1245
          %v1366 = vpack.c.b16 %v1250, %v1246
          %v1367 = vpack.c.b16 %v1251, %v1247
          %v1368 = vpack.c.b16 %v1252, %v1248
          %v1369 = vpack.c.b16 %v1257, %v1253
          %v1370 = vpack.c.b16 %v1258, %v1254
          %v1371 = vpack.c.b16 %v1259, %v1255
          %v1372 = vpack.c.b16 %v1260, %v1256
          %v1373 = vpack.c.b16 %v1265, %v1261
          %v1374 = vpack.c.b16 %v1266, %v1262
          %v1375 = vpack.c.b16 %v1267, %v1263
          %v1376 = vpack.c.b16 %v1268, %v1264
          %v1377 = vpack.c.b16 %v1273, %v1269
          %v1378 = vpack.c.b16 %v1274, %v1270
          %v1379 = vpack.c.b16 %v1275, %v1271
          %v1380 = vpack.c.b16 %v1276, %v1272
          %v1381 = vpack.c.b16 %v1281, %v1277
          %v1382 = vpack.c.b16 %v1282, %v1278
          %v1383 = vpack.c.b16 %v1283, %v1279
          %v1384 = vpack.c.b16 %v1284, %v1280
          %v1385 = vpack.c.b16 %v1289, %v1285
          %v1386 = vpack.c.b16 %v1290, %v1286
          %v1387 = vpack.c.b16 %v1291, %v1287
          %v1388 = vpack.c.b16 %v1292, %v1288
          %v1389 = vpack.c.b16 %v1297, %v1293
          %v1390 = vpack.c.b16 %v1298, %v1294
          %v1391 = vpack.c.b16 %v1299, %v1295
          %v1392 = vpack.c.b16 %v1300, %v1296
          %v1393 = vpack.c.b16 %v1305, %v1301
          %v1394 = vpack.c.b16 %v1306, %v1302
          %v1395 = vpack.c.b16 %v1307, %v1303
          %v1396 = vpack.c.b16 %v1308, %v1304
          %v1397 = vpack.c.b16 %v1313, %v1309
          %v1398 = vpack.c.b16 %v1314, %v1310
          %v1399 = vpack.c.b16 %v1315, %v1311
          %v1400 = vpack.c.b16 %v1316, %v1312
          %v1401 = vpack.c.b16 %v1321, %v1317
          %v1402 = vpack.c.b16 %v1322, %v1318
          %v1403 = vpack.c.b16 %v1323, %v1319
          %v1404 = vpack.c.b16 %v1324, %v1320
          %v1405 = vpack.c.b16 %v1329, %v1325
          %v1406 = vpack.c.b16 %v1330, %v1326
          %v1407 = vpack.c.b16 %v1331, %v1327
          %v1408 = vpack.c.b16 %v1332, %v1328
          %v1409 = vpack.c.b16 %v1337, %v1333
          %v1410 = vpack.c.b16 %v1338, %v1334
          %v1411 = vpack.c.b16 %v1339, %v1335
          %v1412 = vpack.c.b16 %v1340, %v1336
          %v1413 = vpack.c.b16 %v1345, %v1341
          %v1414 = vpack.c.b16 %v1346, %v1342
          %v1415 = vpack.c.b16 %v1347, %v1343
          %v1416 = vpack.c.b16 %v1348, %v1344
          %v1417 = vpack.c.b16 %v1353, %v1349
          %v1418 = vpack.c.b16 %v1354, %v1350
          %v1419 = vpack.c.b16 %v1355, %v1351
          %v1420 = vpack.c.b16 %v1356, %v1352
          %1485 = vmatprep.subr.bf16.mxu0 %v1358
          %1486 = vmatpush1.bf16.msra.mxu0 %v1357
          %1487 = vmatprep.subr.bf16.mxu0 %v1362
          %1488 = vmatpush1.bf16.msra.mxu0 %v1361
          %1489 = vmatprep.subr.bf16.mxu0 %v1366
          %1490 = vmatpush1.bf16.msra.mxu0 %v1365
          %1491 = vmatprep.subr.bf16.mxu0 %v1370
          %1492 = vmatpush1.bf16.msra.mxu0 %v1369
          %1493 = vmatprep.subr.bf16.mxu0 %v1374
          %1494 = vmatpush1.bf16.msra.mxu0 %v1373
          %1495 = vmatprep.subr.bf16.mxu0 %v1378
          %1496 = vmatpush1.bf16.msra.mxu0 %v1377
          %1497 = vmatprep.subr.bf16.mxu0 %v1382
          %1498 = vmatpush1.bf16.msra.mxu0 %v1381
          %1499 = vmatprep.subr.bf16.mxu0 %v1386
          %1500 = vmatpush1.bf16.msra.mxu0 %v1385
          %1501 = vmatprep.subr.bf16.mxu0 %v1390
          %1502 = vmatpush1.bf16.msra.mxu0 %v1389
          %1503 = vmatprep.subr.bf16.mxu0 %v1394
          %1504 = vmatpush1.bf16.msra.mxu0 %v1393
          %1505 = vmatprep.subr.bf16.mxu0 %v1398
          %1506 = vmatpush1.bf16.msra.mxu0 %v1397
          %1507 = vmatprep.subr.bf16.mxu0 %v1402
          %1508 = vmatpush1.bf16.msra.mxu0 %v1401
          %1509 = vmatprep.subr.bf16.mxu0 %v1406
          %1510 = vmatpush1.bf16.msra.mxu0 %v1405
          %1511 = vmatprep.subr.bf16.mxu0 %v1410
          %1512 = vmatpush1.bf16.msra.mxu0 %v1409
          %1513 = vmatprep.subr.bf16.mxu0 %v1414
          %1514 = vmatpush1.bf16.msra.mxu0 %v1413
          %1515 = vmatprep.subr.bf16.mxu0 %v1418
          %1516 = vmatpush1.bf16.msra.mxu0 %v1417
          %1517 = vmatprep.mubr.bf16.mxu0 %v1100
          %1518 = vmatmul.mubr.bf16.gmra.mrb[0].mxu0 %v1099
          %v1519 = vpop.f32.mrb[0].mxu0
          %v1520 = vadd.f32 0.0, %v1519
          %v1521 = vpop.f32.mrb[0].mxu0
          %v1522 = vadd.f32 0.0, %v1521
          %v1523 = vpop.f32.mrb[0].mxu0
          %v1524 = vadd.f32 0.0, %v1523
          %v1525 = vpop.f32.mrb[0].mxu0
          %v1526 = vadd.f32 0.0, %v1525
          %1527 = vdwg.mxu0
          %1528 = vmatprep.subr.bf16.mxu0 %v1360
          %1529 = vmatpush1.bf16.msra.mxu0 %v1359
          %1530 = vmatprep.subr.bf16.mxu0 %v1364
          %1531 = vmatpush1.bf16.msra.mxu0 %v1363
          %1532 = vmatprep.subr.bf16.mxu0 %v1368
          %1533 = vmatpush1.bf16.msra.mxu0 %v1367
          %1534 = vmatprep.subr.bf16.mxu0 %v1372
          %1535 = vmatpush1.bf16.msra.mxu0 %v1371
          %1536 = vmatprep.subr.bf16.mxu0 %v1376
          %1537 = vmatpush1.bf16.msra.mxu0 %v1375
          %1538 = vmatprep.subr.bf16.mxu0 %v1380
          %1539 = vmatpush1.bf16.msra.mxu0 %v1379
          %1540 = vmatprep.subr.bf16.mxu0 %v1384
          %1541 = vmatpush1.bf16.msra.mxu0 %v1383
          %1542 = vmatprep.subr.bf16.mxu0 %v1388
          %1543 = vmatpush1.bf16.msra.mxu0 %v1387
          %1544 = vmatprep.subr.bf16.mxu0 %v1392
          %1545 = vmatpush1.bf16.msra.mxu0 %v1391
          %1546 = vmatprep.subr.bf16.mxu0 %v1396
          %1547 = vmatpush1.bf16.msra.mxu0 %v1395
          %1548 = vmatprep.subr.bf16.mxu0 %v1400
          %1549 = vmatpush1.bf16.msra.mxu0 %v1399
          %1550 = vmatprep.subr.bf16.mxu0 %v1404
          %1551 = vmatpush1.bf16.msra.mxu0 %v1403
          %1552 = vmatprep.subr.bf16.mxu0 %v1408
          %1553 = vmatpush1.bf16.msra.mxu0 %v1407
          %1554 = vmatprep.subr.bf16.mxu0 %v1412
          %1555 = vmatpush1.bf16.msra.mxu0 %v1411
          %1556 = vmatprep.subr.bf16.mxu0 %v1416
          %1557 = vmatpush1.bf16.msra.mxu0 %v1415
          %1558 = vmatprep.subr.bf16.mxu0 %v1420
          %1559 = vmatpush1.bf16.msra.mxu0 %v1419
          %1560 = vmatprep.mubr.bf16.mxu0 %v1100
          %1561 = vmatmul.mubr.bf16.gmra.mrb[0].mxu0 %v1099
          %v1562 = vpop.f32.mrb[0].mxu0
          %v1563 = vadd.f32 0.0, %v1562
          %v1564 = vpop.f32.mrb[0].mxu0
          %v1565 = vadd.f32 0.0, %v1564
          %v1566 = vpop.f32.mrb[0].mxu0
          %v1567 = vadd.f32 0.0, %v1566
          %v1568 = vpop.f32.mrb[0].mxu0
          %v1569 = vadd.f32 0.0, %v1568
          %1570 = vdwg.mxu0
          %1571 = vmatprep.subr.mxu0 %v1522
          %1572 = vmatpush1.msra.mxu0 %v1520
          %1573 = vmatprep.subr.mxu0 %v1526
          %1574 = vmatpush1.msra.mxu0 %v1524
          %1575 = vmatprep.subr.mxu0 0.0
          %1576 = vmatpush1.msra.mxu0 0.0
          %1577 = vmatprep.subr.mxu0 0.0
          %1578 = vmatpush1.msra.mxu0 0.0
          %1579 = vmatprep.subr.mxu0 0.0
          %1580 = vmatpush1.msra.mxu0 0.0
          %1581 = vmatprep.subr.mxu0 0.0
          %1582 = vmatpush1.msra.mxu0 0.0
          %1583 = vmatprep.subr.mxu0 0.0
          %1584 = vmatpush1.msra.mxu0 0.0
          %1585 = vmatprep.subr.mxu0 0.0
          %1586 = vmatpush1.msra.mxu0 0.0
          %1587 = vmatprep.subr.mxu0 0.0
          %1588 = vmatpush1.msra.mxu0 0.0
          %1589 = vmatprep.subr.mxu0 0.0
          %1590 = vmatpush1.msra.mxu0 0.0
          %1591 = vmatprep.subr.mxu0 0.0
          %1592 = vmatpush1.msra.mxu0 0.0
          %1593 = vmatprep.subr.mxu0 0.0
          %1594 = vmatpush1.msra.mxu0 0.0
          %1595 = vmatprep.subr.mxu0 0.0
          %1596 = vmatpush1.msra.mxu0 0.0
          %1597 = vmatprep.subr.mxu0 0.0
          %1598 = vmatpush1.msra.mxu0 0.0
          %1599 = vmatprep.subr.mxu0 0.0
          %1600 = vmatpush1.msra.mxu0 0.0
          %1601 = vmatprep.subr.mxu0 0.0
          %1602 = vmatpush1.msra.mxu0 0.0
          %1603 = vmatprep.subr.mxu0 0.0
          %1604 = vmatpush1.msra.mxu0 0.0
          %1605 = vmatprep.subr.mxu0 0.0
          %1606 = vmatpush1.msra.mxu0 0.0
          %1607 = vmatprep.subr.mxu0 0.0
          %1608 = vmatpush1.msra.mxu0 0.0
          %1609 = vmatprep.subr.mxu0 0.0
          %1610 = vmatpush1.msra.mxu0 0.0
          %1611 = vmatprep.subr.mxu0 0.0
          %1612 = vmatpush1.msra.mxu0 0.0
          %1613 = vmatprep.subr.mxu0 0.0
          %1614 = vmatpush1.msra.mxu0 0.0
          %1615 = vmatprep.subr.mxu0 0.0
          %1616 = vmatpush1.msra.mxu0 0.0
          %1617 = vmatprep.subr.mxu0 0.0
          %1618 = vmatpush1.msra.mxu0 0.0
          %1619 = vmatprep.subr.mxu0 0.0
          %1620 = vmatpush1.msra.mxu0 0.0
          %1621 = vmatprep.subr.mxu0 0.0
          %1622 = vmatpush1.msra.mxu0 0.0
          %1623 = vmatprep.subr.mxu0 0.0
          %1624 = vmatpush1.msra.mxu0 0.0
          %1625 = vmatprep.subr.mxu0 0.0
          %1626 = vmatpush1.msra.mxu0 0.0
          %1627 = vmatprep.subr.mxu0 0.0
          %1628 = vmatpush1.msra.mxu0 0.0
          %1629 = vmatprep.subr.mxu0 0.0
          %1630 = vmatpush1.msra.mxu0 0.0
          %1631 = vmatprep.subr.mxu0 0.0
          %1632 = vmatpush1.msra.mxu0 0.0
          %1633 = vmatprep.subr.mxu0 0.0
          %1634 = vmatpush1.msra.mxu0 0.0
          %1635 = vmatprep.mubr.f32.mxu0 0.0
          %1636 = vmatmul.mubr.f32.gmra.mrb[0].mxu0 %v547
          %v1637 = vpop.f32.mrb[0].mxu0
          %v1638 = vadd.f32 0.0, %v1637
          %v1639 = vpop.f32.mrb[0].mxu0
          %v1640 = vadd.f32 0.0, %v1639
          %1641 = vdwg.mxu0
          %1642 = vmatprep.subr.mxu0 %v1565
          %1643 = vmatpush1.msra.mxu0 %v1563
          %1644 = vmatprep.subr.mxu0 %v1569
          %1645 = vmatpush1.msra.mxu0 %v1567
          %1646 = vmatprep.subr.mxu0 0.0
          %1647 = vmatpush1.msra.mxu0 0.0
          %1648 = vmatprep.subr.mxu0 0.0
          %1649 = vmatpush1.msra.mxu0 0.0
          %1650 = vmatprep.subr.mxu0 0.0
          %1651 = vmatpush1.msra.mxu0 0.0
          %1652 = vmatprep.subr.mxu0 0.0
          %1653 = vmatpush1.msra.mxu0 0.0
          %1654 = vmatprep.subr.mxu0 0.0
          %1655 = vmatpush1.msra.mxu0 0.0
          %1656 = vmatprep.subr.mxu0 0.0
          %1657 = vmatpush1.msra.mxu0 0.0
          %1658 = vmatprep.subr.mxu0 0.0
          %1659 = vmatpush1.msra.mxu0 0.0
          %1660 = vmatprep.subr.mxu0 0.0
          %1661 = vmatpush1.msra.mxu0 0.0
          %1662 = vmatprep.subr.mxu0 0.0
          %1663 = vmatpush1.msra.mxu0 0.0
          %1664 = vmatprep.subr.mxu0 0.0
          %1665 = vmatpush1.msra.mxu0 0.0
          %1666 = vmatprep.subr.mxu0 0.0
          %1667 = vmatpush1.msra.mxu0 0.0
          %1668 = vmatprep.subr.mxu0 0.0
          %1669 = vmatpush1.msra.mxu0 0.0
          %1670 = vmatprep.subr.mxu0 0.0
          %1671 = vmatpush1.msra.mxu0 0.0
          %1672 = vmatprep.subr.mxu0 0.0
          %1673 = vmatpush1.msra.mxu0 0.0
          %1674 = vmatprep.subr.mxu0 0.0
          %1675 = vmatpush1.msra.mxu0 0.0
          %1676 = vmatprep.subr.mxu0 0.0
          %1677 = vmatpush1.msra.mxu0 0.0
          %1678 = vmatprep.subr.mxu0 0.0
          %1679 = vmatpush1.msra.mxu0 0.0
          %1680 = vmatprep.subr.mxu0 0.0
          %1681 = vmatpush1.msra.mxu0 0.0
          %1682 = vmatprep.subr.mxu0 0.0
          %1683 = vmatpush1.msra.mxu0 0.0
          %1684 = vmatprep.subr.mxu0 0.0
          %1685 = vmatpush1.msra.mxu0 0.0
          %1686 = vmatprep.subr.mxu0 0.0
          %1687 = vmatpush1.msra.mxu0 0.0
          %1688 = vmatprep.subr.mxu0 0.0
          %1689 = vmatpush1.msra.mxu0 0.0
          %1690 = vmatprep.subr.mxu0 0.0
          %1691 = vmatpush1.msra.mxu0 0.0
          %1692 = vmatprep.subr.mxu0 0.0
          %1693 = vmatpush1.msra.mxu0 0.0
          %1694 = vmatprep.subr.mxu0 0.0
          %1695 = vmatpush1.msra.mxu0 0.0
          %1696 = vmatprep.subr.mxu0 0.0
          %1697 = vmatpush1.msra.mxu0 0.0
          %1698 = vmatprep.subr.mxu0 0.0
          %1699 = vmatpush1.msra.mxu0 0.0
          %1700 = vmatprep.subr.mxu0 0.0
          %1701 = vmatpush1.msra.mxu0 0.0
          %1702 = vmatprep.subr.mxu0 0.0
          %1703 = vmatpush1.msra.mxu0 0.0
          %1704 = vmatprep.subr.mxu0 0.0
          %1705 = vmatpush1.msra.mxu0 0.0
          %1706 = vmatprep.mubr.f32.mxu0 0.0
          %1707 = vmatmul.mubr.f32.gmra.mrb[0].mxu0 %v547
          %v1708 = vpop.f32.mrb[0].mxu0
          %v1709 = vadd.f32 0.0, %v1708
          %v1710 = vpop.f32.mrb[0].mxu0
          %v1711 = vadd.f32 0.0, %v1710
          %1712 = vdwg.mxu0
          %v1713 = vmul.f32 %v1520, %v1520
          %v1714 = vmul.f32 %v1522, %v1522
          %v1715 = vmul.f32 %v1563, %v1563
          %v1716 = vmul.f32 %v1565, %v1565
          %v1717 = vmul.f32 %v1524, %v1524
          %v1718 = vmul.f32 %v1526, %v1526
          %v1719 = vmul.f32 %v1567, %v1567
          %v1720 = vmul.f32 %v1569, %v1569
          %1721 = vmatprep.subr.mxu0 %v1714
          %1722 = vmatpush1.msra.mxu0 %v1713
          %1723 = vmatprep.subr.mxu0 %v1718
          %1724 = vmatpush1.msra.mxu0 %v1717
          %1725 = vmatprep.subr.mxu0 0.0
          %1726 = vmatpush1.msra.mxu0 0.0
          %1727 = vmatprep.subr.mxu0 0.0
          %1728 = vmatpush1.msra.mxu0 0.0
          %1729 = vmatprep.subr.mxu0 0.0
          %1730 = vmatpush1.msra.mxu0 0.0
          %1731 = vmatprep.subr.mxu0 0.0
          %1732 = vmatpush1.msra.mxu0 0.0
          %1733 = vmatprep.subr.mxu0 0.0
          %1734 = vmatpush1.msra.mxu0 0.0
          %1735 = vmatprep.subr.mxu0 0.0
          %1736 = vmatpush1.msra.mxu0 0.0
          %1737 = vmatprep.subr.mxu0 0.0
          %1738 = vmatpush1.msra.mxu0 0.0
          %1739 = vmatprep.subr.mxu0 0.0
          %1740 = vmatpush1.msra.mxu0 0.0
          %1741 = vmatprep.subr.mxu0 0.0
          %1742 = vmatpush1.msra.mxu0 0.0
          %1743 = vmatprep.subr.mxu0 0.0
          %1744 = vmatpush1.msra.mxu0 0.0
          %1745 = vmatprep.subr.mxu0 0.0
          %1746 = vmatpush1.msra.mxu0 0.0
          %1747 = vmatprep.subr.mxu0 0.0
          %1748 = vmatpush1.msra.mxu0 0.0
          %1749 = vmatprep.subr.mxu0 0.0
          %1750 = vmatpush1.msra.mxu0 0.0
          %1751 = vmatprep.subr.mxu0 0.0
          %1752 = vmatpush1.msra.mxu0 0.0
          %1753 = vmatprep.subr.mxu0 0.0
          %1754 = vmatpush1.msra.mxu0 0.0
          %1755 = vmatprep.subr.mxu0 0.0
          %1756 = vmatpush1.msra.mxu0 0.0
          %1757 = vmatprep.subr.mxu0 0.0
          %1758 = vmatpush1.msra.mxu0 0.0
          %1759 = vmatprep.subr.mxu0 0.0
          %1760 = vmatpush1.msra.mxu0 0.0
          %1761 = vmatprep.subr.mxu0 0.0
          %1762 = vmatpush1.msra.mxu0 0.0
          %1763 = vmatprep.subr.mxu0 0.0
          %1764 = vmatpush1.msra.mxu0 0.0
          %1765 = vmatprep.subr.mxu0 0.0
          %1766 = vmatpush1.msra.mxu0 0.0
          %1767 = vmatprep.subr.mxu0 0.0
          %1768 = vmatpush1.msra.mxu0 0.0
          %1769 = vmatprep.subr.mxu0 0.0
          %1770 = vmatpush1.msra.mxu0 0.0
          %1771 = vmatprep.subr.mxu0 0.0
          %1772 = vmatpush1.msra.mxu0 0.0
          %1773 = vmatprep.subr.mxu0 0.0
          %1774 = vmatpush1.msra.mxu0 0.0
          %1775 = vmatprep.subr.mxu0 0.0
          %1776 = vmatpush1.msra.mxu0 0.0
          %1777 = vmatprep.subr.mxu0 0.0
          %1778 = vmatpush1.msra.mxu0 0.0
          %1779 = vmatprep.subr.mxu0 0.0
          %1780 = vmatpush1.msra.mxu0 0.0
          %1781 = vmatprep.subr.mxu0 0.0
          %1782 = vmatpush1.msra.mxu0 0.0
          %1783 = vmatprep.subr.mxu0 0.0
          %1784 = vmatpush1.msra.mxu0 0.0
          %1785 = vmatprep.mubr.f32.mxu0 0.0
          %1786 = vmatmul.mubr.f32.gmra.mrb[0].mxu0 %v547
          %v1787 = vpop.f32.mrb[0].mxu0
          %v1788 = vadd.f32 0.0, %v1787
          %v1789 = vpop.f32.mrb[0].mxu0
          %v1790 = vadd.f32 0.0, %v1789
          %1791 = vdwg.mxu0
          %1792 = vmatprep.subr.mxu0 %v1716
          %1793 = vmatpush1.msra.mxu0 %v1715
          %1794 = vmatprep.subr.mxu0 %v1720
          %1795 = vmatpush1.msra.mxu0 %v1719
          %1796 = vmatprep.subr.mxu0 0.0
          %1797 = vmatpush1.msra.mxu0 0.0
          %1798 = vmatprep.subr.mxu0 0.0
          %1799 = vmatpush1.msra.mxu0 0.0
          %1800 = vmatprep.subr.mxu0 0.0
          %1801 = vmatpush1.msra.mxu0 0.0
          %1802 = vmatprep.subr.mxu0 0.0
          %1803 = vmatpush1.msra.mxu0 0.0
          %1804 = vmatprep.subr.mxu0 0.0
          %1805 = vmatpush1.msra.mxu0 0.0
          %1806 = vmatprep.subr.mxu0 0.0
          %1807 = vmatpush1.msra.mxu0 0.0
          %1808 = vmatprep.subr.mxu0 0.0
          %1809 = vmatpush1.msra.mxu0 0.0
          %1810 = vmatprep.subr.mxu0 0.0
          %1811 = vmatpush1.msra.mxu0 0.0
          %1812 = vmatprep.subr.mxu0 0.0
          %1813 = vmatpush1.msra.mxu0 0.0
          %1814 = vmatprep.subr.mxu0 0.0
          %1815 = vmatpush1.msra.mxu0 0.0
          %1816 = vmatprep.subr.mxu0 0.0
          %1817 = vmatpush1.msra.mxu0 0.0
          %1818 = vmatprep.subr.mxu0 0.0
          %1819 = vmatpush1.msra.mxu0 0.0
          %1820 = vmatprep.subr.mxu0 0.0
          %1821 = vmatpush1.msra.mxu0 0.0
          %1822 = vmatprep.subr.mxu0 0.0
          %1823 = vmatpush1.msra.mxu0 0.0
          %1824 = vmatprep.subr.mxu0 0.0
          %1825 = vmatpush1.msra.mxu0 0.0
          %1826 = vmatprep.subr.mxu0 0.0
          %1827 = vmatpush1.msra.mxu0 0.0
          %1828 = vmatprep.subr.mxu0 0.0
          %1829 = vmatpush1.msra.mxu0 0.0
          %1830 = vmatprep.subr.mxu0 0.0
          %1831 = vmatpush1.msra.mxu0 0.0
          %1832 = vmatprep.subr.mxu0 0.0
          %1833 = vmatpush1.msra.mxu0 0.0
          %1834 = vmatprep.subr.mxu0 0.0
          %1835 = vmatpush1.msra.mxu0 0.0
          %1836 = vmatprep.subr.mxu0 0.0
          %1837 = vmatpush1.msra.mxu0 0.0
          %1838 = vmatprep.subr.mxu0 0.0
          %1839 = vmatpush1.msra.mxu0 0.0
          %1840 = vmatprep.subr.mxu0 0.0
          %1841 = vmatpush1.msra.mxu0 0.0
          %1842 = vmatprep.subr.mxu0 0.0
          %1843 = vmatpush1.msra.mxu0 0.0
          %1844 = vmatprep.subr.mxu0 0.0
          %1845 = vmatpush1.msra.mxu0 0.0
          %1846 = vmatprep.subr.mxu0 0.0
          %1847 = vmatpush1.msra.mxu0 0.0
          %1848 = vmatprep.subr.mxu0 0.0
          %1849 = vmatpush1.msra.mxu0 0.0
          %1850 = vmatprep.subr.mxu0 0.0
          %1851 = vmatpush1.msra.mxu0 0.0
          %1852 = vmatprep.subr.mxu0 0.0
          %1853 = vmatpush1.msra.mxu0 0.0
          %1854 = vmatprep.subr.mxu0 0.0
          %1855 = vmatpush1.msra.mxu0 0.0
          %1856 = vmatprep.mubr.f32.mxu0 0.0
          %1857 = vmatmul.mubr.f32.gmra.mrb[0].mxu0 %v547
          %v1858 = vpop.f32.mrb[0].mxu0
          %v1859 = vadd.f32 0.0, %v1858
          %v1860 = vpop.f32.mrb[0].mxu0
          %v1861 = vadd.f32 0.0, %v1860
          %1862 = vdwg.mxu0
          %v1863 = vmul.f32 %v1638, 0.071428575
          %v1864 = vmul.f32 %v1640, 0.071428575
          %v1865 = vmul.f32 %v1709, 0.071428575
          %v1866 = vmul.f32 %v1711, 0.071428575
          %v1867 = vmul.f32 %v1788, 0.071428575
          %v1868 = vmul.f32 %v1790, 0.071428575
          %v1869 = vmul.f32 %v1859, 0.071428575
          %v1870 = vmul.f32 %v1861, 0.071428575
          %v1871 = vmul.f32 %v1863, %v1863
          %v1872 = vmul.f32 %v1864, %v1864
          %v1873 = vmul.f32 %v1865, %v1865
          %v1874 = vmul.f32 %v1866, %v1866
          %v1875 = vsub.f32 %v1867, %v1871
          %v1876 = vsub.f32 %v1868, %v1872
          %v1877 = vsub.f32 %v1869, %v1873
          %v1878 = vsub.f32 %v1870, %v1874
          %v1879 = vlaneseq
          %v1880 = vshrl.u32 %v1879, 7
          %v1881 = vsub.s32 0, %v1880
          %v1882 = vrot.slane %v1863, %v1881
          %v1883 = vlaneseq
          %v1884 = vshrl.u32 %v1883, 7
          %v1885 = vsub.s32 0, %v1884
          %v1886 = vrot.slane %v1864, %v1885
          %v1887 = vlaneseq
          %v1888 = vshrl.u32 %v1887, 7
          %v1889 = vsub.s32 0, %v1888
          %v1890 = vrot.slane %v1865, %v1889
          %v1891 = vlaneseq
          %v1892 = vshrl.u32 %v1891, 7
          %v1893 = vsub.s32 0, %v1892
          %v1894 = vrot.slane %v1866, %v1893
          %v1895 = vsub.f32 %v1520, %v1882
          %v1896 = vsub.f32 %v1522, %v1886
          %v1897 = vsub.f32 %v1563, %v1890
          %v1898 = vsub.f32 %v1565, %v1894
          %v1899 = vsub.f32 %v1524, %v1882
          %v1900 = vsub.f32 %v1526, %v1886
          %v1901 = vsub.f32 %v1567, %v1890
          %v1902 = vsub.f32 %v1569, %v1894
          %v1903 = vadd.f32 %v1875, 0.8
          %v1904 = vadd.f32 %v1876, 0.8
          %v1905 = vadd.f32 %v1877, 0.8
          %v1906 = vadd.f32 %v1878, 0.8
          %v1907 = vrsqrt.pop %v1903
          %v1908 = vrsqrt.pop %v1904
          %v1909 = vrsqrt.pop %v1905
          %v1910 = vrsqrt.pop %v1906
          %v1911 = vlaneseq
          %v1912 = vshrl.u32 %v1911, 7
          %v1913 = vsub.s32 0, %v1912
          %v1914 = vrot.slane %v1907, %v1913
          %v1915 = vlaneseq
          %v1916 = vshrl.u32 %v1915, 7
          %v1917 = vsub.s32 0, %v1916
          %v1918 = vrot.slane %v1908, %v1917
          %v1919 = vlaneseq
          %v1920 = vshrl.u32 %v1919, 7
          %v1921 = vsub.s32 0, %v1920
          %v1922 = vrot.slane %v1909, %v1921
          %v1923 = vlaneseq
          %v1924 = vshrl.u32 %v1923, 7
          %v1925 = vsub.s32 0, %v1924
          %v1926 = vrot.slane %v1910, %v1925
          %v1927 = vmul.f32 %v1895, %v1914
          %v1928 = vmul.f32 %v1896, %v1918
          %v1929 = vmul.f32 %v1897, %v1922
          %v1930 = vmul.f32 %v1898, %v1926
          %v1931 = vmul.f32 %v1899, %v1914
          %v1932 = vmul.f32 %v1900, %v1918
          %v1933 = vmul.f32 %v1901, %v1922
          %v1934 = vmul.f32 %v1902, %v1926
          %v1935 = vld [vmem:[%s8] sm:$0xf]
          %v1937 = vlaneseq
          %v1938 = vshrl.u32 %v1937, 7
          %v1939 = vsub.s32 0, %v1938
          %v1940 = vrot.slane %v1935, %v1939
          %v1941 = vlaneseq
          %v1942 = vshrl.u32 %v1941, 7
          %v1943 = vsub.s32 1, %v1942
          %v1944 = vrot.slane %v1935, %v1943
          %v1945 = vlaneseq
          %v1946 = vshrl.u32 %v1945, 7
          %v1947 = vsub.s32 2, %v1946
          %v1948 = vrot.slane %v1935, %v1947
          %v1949 = vlaneseq
          %v1950 = vshrl.u32 %v1949, 7
          %v1951 = vsub.s32 3, %v1950
          %v1952 = vrot.slane %v1935, %v1951
          %v1957 = vmul.f32 %v1927, %v1940
          %v1958 = vmul.f32 %v1928, %v1944
          %v1959 = vmul.f32 %v1929, %v1948
          %v1960 = vmul.f32 %v1930, %v1952
          %v1961 = vmul.f32 %v1931, %v1940
          %v1962 = vmul.f32 %v1932, %v1944
          %v1963 = vmul.f32 %v1933, %v1948
          %v1964 = vmul.f32 %v1934, %v1952
          %v1965 = vld [vmem:[%s9] sm:$0xf]
          %v1967 = vlaneseq
          %v1968 = vshrl.u32 %v1967, 7
          %v1969 = vsub.s32 0, %v1968
          %v1970 = vrot.slane %v1965, %v1969
          %v1971 = vlaneseq
          %v1972 = vshrl.u32 %v1971, 7
          %v1973 = vsub.s32 1, %v1972
          %v1974 = vrot.slane %v1965, %v1973
          %v1975 = vlaneseq
          %v1976 = vshrl.u32 %v1975, 7
          %v1977 = vsub.s32 2, %v1976
          %v1978 = vrot.slane %v1965, %v1977
          %v1979 = vlaneseq
          %v1980 = vshrl.u32 %v1979, 7
          %v1981 = vsub.s32 3, %v1980
          %v1982 = vrot.slane %v1965, %v1981
          %v1987 = vadd.f32 %v1957, %v1970
          %v1988 = vadd.f32 %v1958, %v1974
          %v1989 = vadd.f32 %v1959, %v1978
          %v1990 = vadd.f32 %v1960, %v1982
          %v1991 = vadd.f32 %v1961, %v1970
          %v1992 = vadd.f32 %v1962, %v1974
          %v1993 = vadd.f32 %v1963, %v1978
          %v1994 = vadd.f32 %v1964, %v1982
          %v1995 = vmul.f32 %v1987, 0.2
          %v1996 = vmul.f32 %v1988, 0.2
          %v1997 = vmul.f32 %v1989, 0.2
          %v1998 = vmul.f32 %v1990, 0.2
          %v1999 = vmul.f32 %v1991, 0.2
          %v2000 = vmul.f32 %v1992, 0.2
          %v2001 = vmul.f32 %v1993, 0.2
          %v2002 = vmul.f32 %v1994, 0.2
          %v2003 = vmax.f32 %v1987, %v1995
          %v2004 = vmax.f32 %v1988, %v1996
          %v2005 = vmax.f32 %v1989, %v1997
          %v2006 = vmax.f32 %v1990, %v1998
          %v2007 = vmax.f32 %v1991, %v1999
          %v2008 = vmax.f32 %v1992, %v2000
          %v2009 = vmax.f32 %v1993, %v2001
          %v2010 = vmax.f32 %v1994, %v2002
          %v2011 = vmul.f32 %v2003, %v463
          %v2012 = vmul.f32 %v2004, %v463
          %v2013 = vmul.f32 %v2005, %v463
          %v2014 = vmul.f32 %v2006, %v463
          %v2015 = vmul.f32 %v2007, %v464
          %v2016 = vmul.f32 %v2008, %v464
          %v2017 = vmul.f32 %v2009, %v464
          %v2018 = vmul.f32 %v2010, %v464
          %2019 = vst [vmem:[#allocation2] sm:$0xff] %v2011
          %2020 = vst [vmem:[#allocation2 + $0x8] sm:$0xff] %v2012
          %2021 = vst [vmem:[#allocation2 + $0x10] sm:$0xff] %v2013
          %2022 = vst [vmem:[#allocation2 + $0x18] sm:$0xff] %v2014
          %2023 = vst [vmem:[#allocation2 + $0x20] sm:$0xff] %v2015
          %2024 = vst [vmem:[#allocation2 + $0x28] sm:$0xff] %v2016
          %2025 = vst [vmem:[#allocation2 + $0x30] sm:$0xff] %v2017
          %2026 = vst [vmem:[#allocation2 + $0x38] sm:$0xff] %v2018
        $region92: #{tpu_custom_call.1} parent=63 // pred_fallthru
          _
        %s2027 = smul.u32 %s29, 8
        %s2028 = sshra.s32 %s2027, 3
        %s2029 = sand.u32 %s2027, 7
        %s2030 = smul.u32 %s2028, 4
        %s2031 = smul.addr %s2030, 8
        %s2032 = scalar_lea.vmem [#allocation2], %s2031
        %v2033 = vld [vmem:[%s2032] sm:$0xff]
        %v2034 = vld [vmem:[%s2032 + $0x8] sm:$0xff]
        %v2035 = vld [vmem:[%s2032 + $0x10] sm:$0xff]
        %v2036 = vld [vmem:[%s2032 + $0x18] sm:$0xff]
        %v2037 = vpack.c.bf16 %v2033, %v2033
        %v2038 = vpack.c.bf16 %v2034, %v2034
        %v2039 = vpack.c.bf16 %v2035, %v2035
        %v2040 = vpack.c.bf16 %v2036, %v2036
        %v2041 = vld [vmem:[#allocation12] sm:$0xff]
        %v2042 = vld [vmem:[#allocation12 + $0x8] sm:$0xff]
        %v2043 = vld [vmem:[#allocation12 + $0x10] sm:$0xff]
        %v2044 = vld [vmem:[#allocation12 + $0x18] sm:$0xf]
        %v2045 = vld [vmem:[#allocation12 + $0x1c] sm:$0xff]
        %v2046 = vld [vmem:[#allocation12 + $0x24] sm:$0xff]
        %v2047 = vld [vmem:[#allocation12 + $0x2c] sm:$0xff]
        %v2048 = vld [vmem:[#allocation12 + $0x34] sm:$0xf]
        %v2049 = vld [vmem:[#allocation12 + $0x38] sm:$0xff]
        %v2050 = vld [vmem:[#allocation12 + $0x40] sm:$0xff]
        %v2051 = vld [vmem:[#allocation12 + $0x48] sm:$0xff]
        %v2052 = vld [vmem:[#allocation12 + $0x50] sm:$0xf]
        %v2053 = vld [vmem:[#allocation12 + $0x54] sm:$0xff]
        %v2054 = vld [vmem:[#allocation12 + $0x5c] sm:$0xff]
        %v2055 = vld [vmem:[#allocation12 + $0x64] sm:$0xff]
        %v2056 = vld [vmem:[#allocation12 + $0x6c] sm:$0xf]
        %v2057 = vld [vmem:[#allocation12 + $0x70] sm:$0xff]
        %v2058 = vld [vmem:[#allocation12 + $0x78] sm:$0xff]
        %v2059 = vld [vmem:[#allocation12 + $0x80] sm:$0xff]
        %v2060 = vld [vmem:[#allocation12 + $0x88] sm:$0xf]
        %v2061 = vld [vmem:[#allocation12 + $0x8c] sm:$0xff]
        %v2062 = vld [vmem:[#allocation12 + $0x94] sm:$0xff]
        %v2063 = vld [vmem:[#allocation12 + $0x9c] sm:$0xff]
        %v2064 = vld [vmem:[#allocation12 + $0xa4] sm:$0xf]
        %v2065 = vld [vmem:[#allocation12 + $0xa8] sm:$0xff]
        %v2066 = vld [vmem:[#allocation12 + $0xb0] sm:$0xff]
        %v2067 = vld [vmem:[#allocation12 + $0xb8] sm:$0xff]
        %v2068 = vld [vmem:[#allocation12 + $0xc0] sm:$0xf]
        %v2069 = vld [vmem:[#allocation12 + $0xc4] sm:$0xff]
        %v2070 = vld [vmem:[#allocation12 + $0xcc] sm:$0xff]
        %v2071 = vld [vmem:[#allocation12 + $0xd4] sm:$0xff]
        %v2072 = vld [vmem:[#allocation12 + $0xdc] sm:$0xf]
        %v2073 = vld [vmem:[#allocation12 + $0xe0] sm:$0xff]
        %v2074 = vld [vmem:[#allocation12 + $0xe8] sm:$0xff]
        %v2075 = vld [vmem:[#allocation12 + $0xf0] sm:$0xff]
        %v2076 = vld [vmem:[#allocation12 + $0xf8] sm:$0xf]
        %v2077 = vld [vmem:[#allocation12 + $0xfc] sm:$0xff]
        %v2078 = vld [vmem:[#allocation12 + $0x104] sm:$0xff]
        %v2079 = vld [vmem:[#allocation12 + $0x10c] sm:$0xff]
        %v2080 = vld [vmem:[#allocation12 + $0x114] sm:$0xf]
        %v2081 = vld [vmem:[#allocation12 + $0x118] sm:$0xff]
        %v2082 = vld [vmem:[#allocation12 + $0x120] sm:$0xff]
        %v2083 = vld [vmem:[#allocation12 + $0x128] sm:$0xff]
        %v2084 = vld [vmem:[#allocation12 + $0x130] sm:$0xf]
        %v2085 = vld [vmem:[#allocation12 + $0x134] sm:$0xff]
        %v2086 = vld [vmem:[#allocation12 + $0x13c] sm:$0xff]
        %v2087 = vld [vmem:[#allocation12 + $0x144] sm:$0xff]
        %v2088 = vld [vmem:[#allocation12 + $0x14c] sm:$0xf]
        %v2089 = vld [vmem:[#allocation12 + $0x150] sm:$0xff]
        %v2090 = vld [vmem:[#allocation12 + $0x158] sm:$0xff]
        %v2091 = vld [vmem:[#allocation12 + $0x160] sm:$0xff]
        %v2092 = vld [vmem:[#allocation12 + $0x168] sm:$0xf]
        %v2093 = vld [vmem:[#allocation12 + $0x16c] sm:$0xff]
        %v2094 = vld [vmem:[#allocation12 + $0x174] sm:$0xff]
        %v2095 = vld [vmem:[#allocation12 + $0x17c] sm:$0xff]
        %v2096 = vld [vmem:[#allocation12 + $0x184] sm:$0xf]
        %v2097 = vld [vmem:[#allocation12 + $0x188] sm:$0xff]
        %v2098 = vld [vmem:[#allocation12 + $0x190] sm:$0xff]
        %v2099 = vld [vmem:[#allocation12 + $0x198] sm:$0xff]
        %v2100 = vld [vmem:[#allocation12 + $0x1a0] sm:$0xf]
        %v2101 = vld [vmem:[#allocation12 + $0x1a4] sm:$0xff]
        %v2102 = vld [vmem:[#allocation12 + $0x1ac] sm:$0xff]
        %v2103 = vld [vmem:[#allocation12 + $0x1b4] sm:$0xff]
        %v2104 = vld [vmem:[#allocation12 + $0x1bc] sm:$0xf]
        %v2105 = vld [vmem:[#allocation12 + $0x1c0] sm:$0xff]
        %v2106 = vld [vmem:[#allocation12 + $0x1c8] sm:$0xff]
        %v2107 = vld [vmem:[#allocation12 + $0x1d0] sm:$0xff]
        %v2108 = vld [vmem:[#allocation12 + $0x1d8] sm:$0xf]
        %v2109 = vld [vmem:[#allocation12 + $0x1dc] sm:$0xff]
        %v2110 = vld [vmem:[#allocation12 + $0x1e4] sm:$0xff]
        %v2111 = vld [vmem:[#allocation12 + $0x1ec] sm:$0xff]
        %v2112 = vld [vmem:[#allocation12 + $0x1f4] sm:$0xf]
        %v2113 = vld [vmem:[#allocation12 + $0x1f8] sm:$0xff]
        %v2114 = vld [vmem:[#allocation12 + $0x200] sm:$0xff]
        %v2115 = vld [vmem:[#allocation12 + $0x208] sm:$0xff]
        %v2116 = vld [vmem:[#allocation12 + $0x210] sm:$0xf]
        %v2117 = vld [vmem:[#allocation12 + $0x214] sm:$0xff]
        %v2118 = vld [vmem:[#allocation12 + $0x21c] sm:$0xff]
        %v2119 = vld [vmem:[#allocation12 + $0x224] sm:$0xff]
        %v2120 = vld [vmem:[#allocation12 + $0x22c] sm:$0xf]
        %v2121 = vld [vmem:[#allocation12 + $0x230] sm:$0xff]
        %v2122 = vld [vmem:[#allocation12 + $0x238] sm:$0xff]
        %v2123 = vld [vmem:[#allocation12 + $0x240] sm:$0xff]
        %v2124 = vld [vmem:[#allocation12 + $0x248] sm:$0xf]
        %v2125 = vld [vmem:[#allocation12 + $0x24c] sm:$0xff]
        %v2126 = vld [vmem:[#allocation12 + $0x254] sm:$0xff]
        %v2127 = vld [vmem:[#allocation12 + $0x25c] sm:$0xff]
        %v2128 = vld [vmem:[#allocation12 + $0x264] sm:$0xf]
        %v2129 = vld [vmem:[#allocation12 + $0x268] sm:$0xff]
        %v2130 = vld [vmem:[#allocation12 + $0x270] sm:$0xff]
        %v2131 = vld [vmem:[#allocation12 + $0x278] sm:$0xff]
        %v2132 = vld [vmem:[#allocation12 + $0x280] sm:$0xf]
        %v2133 = vld [vmem:[#allocation12 + $0x284] sm:$0xff]
        %v2134 = vld [vmem:[#allocation12 + $0x28c] sm:$0xff]
        %v2135 = vld [vmem:[#allocation12 + $0x294] sm:$0xff]
        %v2136 = vld [vmem:[#allocation12 + $0x29c] sm:$0xf]
        %v2137 = vld [vmem:[#allocation12 + $0x2a0] sm:$0xff]
        %v2138 = vld [vmem:[#allocation12 + $0x2a8] sm:$0xff]
        %v2139 = vld [vmem:[#allocation12 + $0x2b0] sm:$0xff]
        %v2140 = vld [vmem:[#allocation12 + $0x2b8] sm:$0xf]
        %v2141 = vld [vmem:[#allocation12 + $0x2bc] sm:$0xff]
        %v2142 = vld [vmem:[#allocation12 + $0x2c4] sm:$0xff]
        %v2143 = vld [vmem:[#allocation12 + $0x2cc] sm:$0xff]
        %v2144 = vld [vmem:[#allocation12 + $0x2d4] sm:$0xf]
        %v2145 = vld [vmem:[#allocation12 + $0x2d8] sm:$0xff]
        %v2146 = vld [vmem:[#allocation12 + $0x2e0] sm:$0xff]
        %v2147 = vld [vmem:[#allocation12 + $0x2e8] sm:$0xff]
        %v2148 = vld [vmem:[#allocation12 + $0x2f0] sm:$0xf]
        %v2149 = vld [vmem:[#allocation12 + $0x2f4] sm:$0xff]
        %v2150 = vld [vmem:[#allocation12 + $0x2fc] sm:$0xff]
        %v2151 = vld [vmem:[#allocation12 + $0x304] sm:$0xff]
        %v2152 = vld [vmem:[#allocation12 + $0x30c] sm:$0xf]
        %v2153 = vld [vmem:[#allocation12 + $0x310] sm:$0xff]
        %v2154 = vld [vmem:[#allocation12 + $0x318] sm:$0xff]
        %v2155 = vld [vmem:[#allocation12 + $0x320] sm:$0xff]
        %v2156 = vld [vmem:[#allocation12 + $0x328] sm:$0xf]
        %v2157 = vld [vmem:[#allocation12 + $0x32c] sm:$0xff]
        %v2158 = vld [vmem:[#allocation12 + $0x334] sm:$0xff]
        %v2159 = vld [vmem:[#allocation12 + $0x33c] sm:$0xff]
        %v2160 = vld [vmem:[#allocation12 + $0x344] sm:$0xf]
        %v2161 = vld [vmem:[#allocation12 + $0x348] sm:$0xff]
        %v2162 = vld [vmem:[#allocation12 + $0x350] sm:$0xff]
        %v2163 = vld [vmem:[#allocation12 + $0x358] sm:$0xff]
        %v2164 = vld [vmem:[#allocation12 + $0x360] sm:$0xf]
        %v2165 = vld [vmem:[#allocation12 + $0x364] sm:$0xff]
        %v2166 = vld [vmem:[#allocation12 + $0x36c] sm:$0xff]
        %v2167 = vld [vmem:[#allocation12 + $0x374] sm:$0xff]
        %v2168 = vld [vmem:[#allocation12 + $0x37c] sm:$0xf]
        %v2169 = vld [vmem:[#allocation12 + $0x380] sm:$0xff]
        %v2170 = vld [vmem:[#allocation12 + $0x388] sm:$0xff]
        %v2171 = vld [vmem:[#allocation12 + $0x390] sm:$0xff]
        %v2172 = vld [vmem:[#allocation12 + $0x398] sm:$0xf]
        %v2173 = vld [vmem:[#allocation12 + $0x39c] sm:$0xff]
        %v2174 = vld [vmem:[#allocation12 + $0x3a4] sm:$0xff]
        %v2175 = vld [vmem:[#allocation12 + $0x3ac] sm:$0xff]
        %v2176 = vld [vmem:[#allocation12 + $0x3b4] sm:$0xf]
        %v2177 = vld [vmem:[#allocation12 + $0x3b8] sm:$0xff]
        %v2178 = vld [vmem:[#allocation12 + $0x3c0] sm:$0xff]
        %v2179 = vld [vmem:[#allocation12 + $0x3c8] sm:$0xff]
        %v2180 = vld [vmem:[#allocation12 + $0x3d0] sm:$0xf]
        %v2181 = vld [vmem:[#allocation12 + $0x3d4] sm:$0xff]
        %v2182 = vld [vmem:[#allocation12 + $0x3dc] sm:$0xff]
        %v2183 = vld [vmem:[#allocation12 + $0x3e4] sm:$0xff]
        %v2184 = vld [vmem:[#allocation12 + $0x3ec] sm:$0xf]
        %v2185 = vld [vmem:[#allocation12 + $0x3f0] sm:$0xff]
        %v2186 = vld [vmem:[#allocation12 + $0x3f8] sm:$0xff]
        %v2187 = vld [vmem:[#allocation12 + $0x400] sm:$0xff]
        %v2188 = vld [vmem:[#allocation12 + $0x408] sm:$0xf]
        %v2189 = vld [vmem:[#allocation12 + $0x40c] sm:$0xff]
        %v2190 = vld [vmem:[#allocation12 + $0x414] sm:$0xff]
        %v2191 = vld [vmem:[#allocation12 + $0x41c] sm:$0xff]
        %v2192 = vld [vmem:[#allocation12 + $0x424] sm:$0xf]
        %v2193 = vld [vmem:[#allocation12 + $0x428] sm:$0xff]
        %v2194 = vld [vmem:[#allocation12 + $0x430] sm:$0xff]
        %v2195 = vld [vmem:[#allocation12 + $0x438] sm:$0xff]
        %v2196 = vld [vmem:[#allocation12 + $0x440] sm:$0xf]
        %v2197 = vld [vmem:[#allocation12 + $0x444] sm:$0xff]
        %v2198 = vld [vmem:[#allocation12 + $0x44c] sm:$0xff]
        %v2199 = vld [vmem:[#allocation12 + $0x454] sm:$0xff]
        %v2200 = vld [vmem:[#allocation12 + $0x45c] sm:$0xf]
        %v2201 = vld [vmem:[#allocation12 + $0x460] sm:$0xff]
        %v2202 = vld [vmem:[#allocation12 + $0x468] sm:$0xff]
        %v2203 = vld [vmem:[#allocation12 + $0x470] sm:$0xff]
        %v2204 = vld [vmem:[#allocation12 + $0x478] sm:$0xf]
        %v2205 = vld [vmem:[#allocation12 + $0x47c] sm:$0xff]
        %v2206 = vld [vmem:[#allocation12 + $0x484] sm:$0xff]
        %v2207 = vld [vmem:[#allocation12 + $0x48c] sm:$0xff]
        %v2208 = vld [vmem:[#allocation12 + $0x494] sm:$0xf]
        %v2209 = vld [vmem:[#allocation12 + $0x498] sm:$0xff]
        %v2210 = vld [vmem:[#allocation12 + $0x4a0] sm:$0xff]
        %v2211 = vld [vmem:[#allocation12 + $0x4a8] sm:$0xff]
        %v2212 = vld [vmem:[#allocation12 + $0x4b0] sm:$0xf]
        %v2213 = vld [vmem:[#allocation12 + $0x4b4] sm:$0xff]
        %v2214 = vld [vmem:[#allocation12 + $0x4bc] sm:$0xff]
        %v2215 = vld [vmem:[#allocation12 + $0x4c4] sm:$0xff]
        %v2216 = vld [vmem:[#allocation12 + $0x4cc] sm:$0xf]
        %v2217 = vld [vmem:[#allocation12 + $0x4d0] sm:$0xff]
        %v2218 = vld [vmem:[#allocation12 + $0x4d8] sm:$0xff]
        %v2219 = vld [vmem:[#allocation12 + $0x4e0] sm:$0xff]
        %v2220 = vld [vmem:[#allocation12 + $0x4e8] sm:$0xf]
        %v2221 = vld [vmem:[#allocation12 + $0x4ec] sm:$0xff]
        %v2222 = vld [vmem:[#allocation12 + $0x4f4] sm:$0xff]
        %v2223 = vld [vmem:[#allocation12 + $0x4fc] sm:$0xff]
        %v2224 = vld [vmem:[#allocation12 + $0x504] sm:$0xf]
        %v2225 = vld [vmem:[#allocation12 + $0x508] sm:$0xff]
        %v2226 = vld [vmem:[#allocation12 + $0x510] sm:$0xff]
        %v2227 = vld [vmem:[#allocation12 + $0x518] sm:$0xff]
        %v2228 = vld [vmem:[#allocation12 + $0x520] sm:$0xf]
        %v2229 = vld [vmem:[#allocation12 + $0x524] sm:$0xff]
        %v2230 = vld [vmem:[#allocation12 + $0x52c] sm:$0xff]
        %v2231 = vld [vmem:[#allocation12 + $0x534] sm:$0xff]
        %v2232 = vld [vmem:[#allocation12 + $0x53c] sm:$0xf]
        %v2233 = vld [vmem:[#allocation12 + $0x540] sm:$0xff]
        %v2234 = vld [vmem:[#allocation12 + $0x548] sm:$0xff]
        %v2235 = vld [vmem:[#allocation12 + $0x550] sm:$0xff]
        %v2236 = vld [vmem:[#allocation12 + $0x558] sm:$0xf]
        %v2237 = vld [vmem:[#allocation12 + $0x55c] sm:$0xff]
        %v2238 = vld [vmem:[#allocation12 + $0x564] sm:$0xff]
        %v2239 = vld [vmem:[#allocation12 + $0x56c] sm:$0xff]
        %v2240 = vld [vmem:[#allocation12 + $0x574] sm:$0xf]
        %v2241 = vld [vmem:[#allocation12 + $0x578] sm:$0xff]
        %v2242 = vld [vmem:[#allocation12 + $0x580] sm:$0xff]
        %v2243 = vld [vmem:[#allocation12 + $0x588] sm:$0xff]
        %v2244 = vld [vmem:[#allocation12 + $0x590] sm:$0xf]
        %v2245 = vld [vmem:[#allocation12 + $0x594] sm:$0xff]
        %v2246 = vld [vmem:[#allocation12 + $0x59c] sm:$0xff]
        %v2247 = vld [vmem:[#allocation12 + $0x5a4] sm:$0xff]
        %v2248 = vld [vmem:[#allocation12 + $0x5ac] sm:$0xf]
        %v2249 = vld [vmem:[#allocation12 + $0x5b0] sm:$0xff]
        %v2250 = vld [vmem:[#allocation12 + $0x5b8] sm:$0xff]
        %v2251 = vld [vmem:[#allocation12 + $0x5c0] sm:$0xff]
        %v2252 = vld [vmem:[#allocation12 + $0x5c8] sm:$0xf]
        %v2253 = vld [vmem:[#allocation12 + $0x5cc] sm:$0xff]
        %v2254 = vld [vmem:[#allocation12 + $0x5d4] sm:$0xff]
        %v2255 = vld [vmem:[#allocation12 + $0x5dc] sm:$0xff]
        %v2256 = vld [vmem:[#allocation12 + $0x5e4] sm:$0xf]
        %v2257 = vld [vmem:[#allocation12 + $0x5e8] sm:$0xff]
        %v2258 = vld [vmem:[#allocation12 + $0x5f0] sm:$0xff]
        %v2259 = vld [vmem:[#allocation12 + $0x5f8] sm:$0xff]
        %v2260 = vld [vmem:[#allocation12 + $0x600] sm:$0xf]
        %v2261 = vld [vmem:[#allocation12 + $0x604] sm:$0xff]
        %v2262 = vld [vmem:[#allocation12 + $0x60c] sm:$0xff]
        %v2263 = vld [vmem:[#allocation12 + $0x614] sm:$0xff]
        %v2264 = vld [vmem:[#allocation12 + $0x61c] sm:$0xf]
        %v2265 = vld [vmem:[#allocation12 + $0x620] sm:$0xff]
        %v2266 = vld [vmem:[#allocation12 + $0x628] sm:$0xff]
        %v2267 = vld [vmem:[#allocation12 + $0x630] sm:$0xff]
        %v2268 = vld [vmem:[#allocation12 + $0x638] sm:$0xf]
        %v2269 = vld [vmem:[#allocation12 + $0x63c] sm:$0xff]
        %v2270 = vld [vmem:[#allocation12 + $0x644] sm:$0xff]
        %v2271 = vld [vmem:[#allocation12 + $0x64c] sm:$0xff]
        %v2272 = vld [vmem:[#allocation12 + $0x654] sm:$0xf]
        %v2273 = vld [vmem:[#allocation12 + $0x658] sm:$0xff]
        %v2274 = vld [vmem:[#allocation12 + $0x660] sm:$0xff]
        %v2275 = vld [vmem:[#allocation12 + $0x668] sm:$0xff]
        %v2276 = vld [vmem:[#allocation12 + $0x670] sm:$0xf]
        %v2277 = vld [vmem:[#allocation12 + $0x674] sm:$0xff]
        %v2278 = vld [vmem:[#allocation12 + $0x67c] sm:$0xff]
        %v2279 = vld [vmem:[#allocation12 + $0x684] sm:$0xff]
        %v2280 = vld [vmem:[#allocation12 + $0x68c] sm:$0xf]
        %v2281 = vld [vmem:[#allocation12 + $0x690] sm:$0xff]
        %v2282 = vld [vmem:[#allocation12 + $0x698] sm:$0xff]
        %v2283 = vld [vmem:[#allocation12 + $0x6a0] sm:$0xff]
        %v2284 = vld [vmem:[#allocation12 + $0x6a8] sm:$0xf]
        %v2285 = vld [vmem:[#allocation12 + $0x6ac] sm:$0xff]
        %v2286 = vld [vmem:[#allocation12 + $0x6b4] sm:$0xff]
        %v2287 = vld [vmem:[#allocation12 + $0x6bc] sm:$0xff]
        %v2288 = vld [vmem:[#allocation12 + $0x6c4] sm:$0xf]
        %v2289 = vld [vmem:[#allocation12 + $0x6c8] sm:$0xff]
        %v2290 = vld [vmem:[#allocation12 + $0x6d0] sm:$0xff]
        %v2291 = vld [vmem:[#allocation12 + $0x6d8] sm:$0xff]
        %v2292 = vld [vmem:[#allocation12 + $0x6e0] sm:$0xf]
        %v2293 = vld [vmem:[#allocation12 + $0x6e4] sm:$0xff]
        %v2294 = vld [vmem:[#allocation12 + $0x6ec] sm:$0xff]
        %v2295 = vld [vmem:[#allocation12 + $0x6f4] sm:$0xff]
        %v2296 = vld [vmem:[#allocation12 + $0x6fc] sm:$0xf]
        %v2553 = vunpack.c.l.b16 %v2041
        %v2554 = vunpack.c.h.b16 %v2041
        %v2555 = vunpack.c.l.b16 %v2042
        %v2556 = vunpack.c.h.b16 %v2042
        %v2557 = vunpack.c.l.b16 %v2043
        %v2558 = vunpack.c.h.b16 %v2043
        %v2559 = vunpack.c.l.b16 %v2044
        %v2560 = vunpack.c.l.b16 %v2045
        %v2561 = vunpack.c.h.b16 %v2045
        %v2562 = vunpack.c.l.b16 %v2046
        %v2563 = vunpack.c.h.b16 %v2046
        %v2564 = vunpack.c.l.b16 %v2047
        %v2565 = vunpack.c.h.b16 %v2047
        %v2566 = vunpack.c.l.b16 %v2048
        %v2567 = vunpack.c.l.b16 %v2049
        %v2568 = vunpack.c.h.b16 %v2049
        %v2569 = vunpack.c.l.b16 %v2050
        %v2570 = vunpack.c.h.b16 %v2050
        %v2571 = vunpack.c.l.b16 %v2051
        %v2572 = vunpack.c.h.b16 %v2051
        %v2573 = vunpack.c.l.b16 %v2052
        %v2574 = vunpack.c.l.b16 %v2053
        %v2575 = vunpack.c.h.b16 %v2053
        %v2576 = vunpack.c.l.b16 %v2054
        %v2577 = vunpack.c.h.b16 %v2054
        %v2578 = vunpack.c.l.b16 %v2055
        %v2579 = vunpack.c.h.b16 %v2055
        %v2580 = vunpack.c.l.b16 %v2056
        %v2581 = vunpack.c.l.b16 %v2057
        %v2582 = vunpack.c.h.b16 %v2057
        %v2583 = vunpack.c.l.b16 %v2058
        %v2584 = vunpack.c.h.b16 %v2058
        %v2585 = vunpack.c.l.b16 %v2059
        %v2586 = vunpack.c.h.b16 %v2059
        %v2587 = vunpack.c.l.b16 %v2060
        %v2588 = vunpack.c.l.b16 %v2061
        %v2589 = vunpack.c.h.b16 %v2061
        %v2590 = vunpack.c.l.b16 %v2062
        %v2591 = vunpack.c.h.b16 %v2062
        %v2592 = vunpack.c.l.b16 %v2063
        %v2593 = vunpack.c.h.b16 %v2063
        %v2594 = vunpack.c.l.b16 %v2064
        %v2595 = vunpack.c.l.b16 %v2065
        %v2596 = vunpack.c.h.b16 %v2065
        %v2597 = vunpack.c.l.b16 %v2066
        %v2598 = vunpack.c.h.b16 %v2066
        %v2599 = vunpack.c.l.b16 %v2067
        %v2600 = vunpack.c.h.b16 %v2067
        %v2601 = vunpack.c.l.b16 %v2068
        %v2602 = vunpack.c.l.b16 %v2069
        %v2603 = vunpack.c.h.b16 %v2069
        %v2604 = vunpack.c.l.b16 %v2070
        %v2605 = vunpack.c.h.b16 %v2070
        %v2606 = vunpack.c.l.b16 %v2071
        %v2607 = vunpack.c.h.b16 %v2071
        %v2608 = vunpack.c.l.b16 %v2072
        %v2609 = vunpack.c.l.b16 %v2073
        %v2610 = vunpack.c.h.b16 %v2073
        %v2611 = vunpack.c.l.b16 %v2074
        %v2612 = vunpack.c.h.b16 %v2074
        %v2613 = vunpack.c.l.b16 %v2075
        %v2614 = vunpack.c.h.b16 %v2075
        %v2615 = vunpack.c.l.b16 %v2076
        %v2616 = vunpack.c.l.b16 %v2077
        %v2617 = vunpack.c.h.b16 %v2077
        %v2618 = vunpack.c.l.b16 %v2078
        %v2619 = vunpack.c.h.b16 %v2078
        %v2620 = vunpack.c.l.b16 %v2079
        %v2621 = vunpack.c.h.b16 %v2079
        %v2622 = vunpack.c.l.b16 %v2080
        %v2623 = vunpack.c.l.b16 %v2081
        %v2624 = vunpack.c.h.b16 %v2081
        %v2625 = vunpack.c.l.b16 %v2082
        %v2626 = vunpack.c.h.b16 %v2082
        %v2627 = vunpack.c.l.b16 %v2083
        %v2628 = vunpack.c.h.b16 %v2083
        %v2629 = vunpack.c.l.b16 %v2084
        %v2630 = vunpack.c.l.b16 %v2085
        %v2631 = vunpack.c.h.b16 %v2085
        %v2632 = vunpack.c.l.b16 %v2086
        %v2633 = vunpack.c.h.b16 %v2086
        %v2634 = vunpack.c.l.b16 %v2087
        %v2635 = vunpack.c.h.b16 %v2087
        %v2636 = vunpack.c.l.b16 %v2088
        %v2637 = vunpack.c.l.b16 %v2089
        %v2638 = vunpack.c.h.b16 %v2089
        %v2639 = vunpack.c.l.b16 %v2090
        %v2640 = vunpack.c.h.b16 %v2090
        %v2641 = vunpack.c.l.b16 %v2091
        %v2642 = vunpack.c.h.b16 %v2091
        %v2643 = vunpack.c.l.b16 %v2092
        %v2644 = vunpack.c.l.b16 %v2093
        %v2645 = vunpack.c.h.b16 %v2093
        %v2646 = vunpack.c.l.b16 %v2094
        %v2647 = vunpack.c.h.b16 %v2094
        %v2648 = vunpack.c.l.b16 %v2095
        %v2649 = vunpack.c.h.b16 %v2095
        %v2650 = vunpack.c.l.b16 %v2096
        %v2651 = vunpack.c.l.b16 %v2097
        %v2652 = vunpack.c.h.b16 %v2097
        %v2653 = vunpack.c.l.b16 %v2098
        %v2654 = vunpack.c.h.b16 %v2098
        %v2655 = vunpack.c.l.b16 %v2099
        %v2656 = vunpack.c.h.b16 %v2099
        %v2657 = vunpack.c.l.b16 %v2100
        %v2658 = vunpack.c.l.b16 %v2101
        %v2659 = vunpack.c.h.b16 %v2101
        %v2660 = vunpack.c.l.b16 %v2102
        %v2661 = vunpack.c.h.b16 %v2102
        %v2662 = vunpack.c.l.b16 %v2103
        %v2663 = vunpack.c.h.b16 %v2103
        %v2664 = vunpack.c.l.b16 %v2104
        %v2665 = vunpack.c.l.b16 %v2105
        %v2666 = vunpack.c.h.b16 %v2105
        %v2667 = vunpack.c.l.b16 %v2106
        %v2668 = vunpack.c.h.b16 %v2106
        %v2669 = vunpack.c.l.b16 %v2107
        %v2670 = vunpack.c.h.b16 %v2107
        %v2671 = vunpack.c.l.b16 %v2108
        %v2672 = vunpack.c.l.b16 %v2109
        %v2673 = vunpack.c.h.b16 %v2109
        %v2674 = vunpack.c.l.b16 %v2110
        %v2675 = vunpack.c.h.b16 %v2110
        %v2676 = vunpack.c.l.b16 %v2111
        %v2677 = vunpack.c.h.b16 %v2111
        %v2678 = vunpack.c.l.b16 %v2112
        %v2679 = vunpack.c.l.b16 %v2113
        %v2680 = vunpack.c.h.b16 %v2113
        %v2681 = vunpack.c.l.b16 %v2114
        %v2682 = vunpack.c.h.b16 %v2114
        %v2683 = vunpack.c.l.b16 %v2115
        %v2684 = vunpack.c.h.b16 %v2115
        %v2685 = vunpack.c.l.b16 %v2116
        %v2686 = vunpack.c.l.b16 %v2117
        %v2687 = vunpack.c.h.b16 %v2117
        %v2688 = vunpack.c.l.b16 %v2118
        %v2689 = vunpack.c.h.b16 %v2118
        %v2690 = vunpack.c.l.b16 %v2119
        %v2691 = vunpack.c.h.b16 %v2119
        %v2692 = vunpack.c.l.b16 %v2120
        %v2693 = vunpack.c.l.b16 %v2121
        %v2694 = vunpack.c.h.b16 %v2121
        %v2695 = vunpack.c.l.b16 %v2122
        %v2696 = vunpack.c.h.b16 %v2122
        %v2697 = vunpack.c.l.b16 %v2123
        %v2698 = vunpack.c.h.b16 %v2123
        %v2699 = vunpack.c.l.b16 %v2124
        %v2700 = vunpack.c.l.b16 %v2125
        %v2701 = vunpack.c.h.b16 %v2125
        %v2702 = vunpack.c.l.b16 %v2126
        %v2703 = vunpack.c.h.b16 %v2126
        %v2704 = vunpack.c.l.b16 %v2127
        %v2705 = vunpack.c.h.b16 %v2127
        %v2706 = vunpack.c.l.b16 %v2128
        %v2707 = vunpack.c.l.b16 %v2129
        %v2708 = vunpack.c.h.b16 %v2129
        %v2709 = vunpack.c.l.b16 %v2130
        %v2710 = vunpack.c.h.b16 %v2130
        %v2711 = vunpack.c.l.b16 %v2131
        %v2712 = vunpack.c.h.b16 %v2131
        %v2713 = vunpack.c.l.b16 %v2132
        %v2714 = vunpack.c.l.b16 %v2133
        %v2715 = vunpack.c.h.b16 %v2133
        %v2716 = vunpack.c.l.b16 %v2134
        %v2717 = vunpack.c.h.b16 %v2134
        %v2718 = vunpack.c.l.b16 %v2135
        %v2719 = vunpack.c.h.b16 %v2135
        %v2720 = vunpack.c.l.b16 %v2136
        %v2721 = vunpack.c.l.b16 %v2137
        %v2722 = vunpack.c.h.b16 %v2137
        %v2723 = vunpack.c.l.b16 %v2138
        %v2724 = vunpack.c.h.b16 %v2138
        %v2725 = vunpack.c.l.b16 %v2139
        %v2726 = vunpack.c.h.b16 %v2139
        %v2727 = vunpack.c.l.b16 %v2140
        %v2728 = vunpack.c.l.b16 %v2141
        %v2729 = vunpack.c.h.b16 %v2141
        %v2730 = vunpack.c.l.b16 %v2142
        %v2731 = vunpack.c.h.b16 %v2142
        %v2732 = vunpack.c.l.b16 %v2143
        %v2733 = vunpack.c.h.b16 %v2143
        %v2734 = vunpack.c.l.b16 %v2144
        %v2735 = vunpack.c.l.b16 %v2145
        %v2736 = vunpack.c.h.b16 %v2145
        %v2737 = vunpack.c.l.b16 %v2146
        %v2738 = vunpack.c.h.b16 %v2146
        %v2739 = vunpack.c.l.b16 %v2147
        %v2740 = vunpack.c.h.b16 %v2147
        %v2741 = vunpack.c.l.b16 %v2148
        %v2742 = vunpack.c.l.b16 %v2149
        %v2743 = vunpack.c.h.b16 %v2149
        %v2744 = vunpack.c.l.b16 %v2150
        %v2745 = vunpack.c.h.b16 %v2150
        %v2746 = vunpack.c.l.b16 %v2151
        %v2747 = vunpack.c.h.b16 %v2151
        %v2748 = vunpack.c.l.b16 %v2152
        %v2749 = vunpack.c.l.b16 %v2153
        %v2750 = vunpack.c.h.b16 %v2153
        %v2751 = vunpack.c.l.b16 %v2154
        %v2752 = vunpack.c.h.b16 %v2154
        %v2753 = vunpack.c.l.b16 %v2155
        %v2754 = vunpack.c.h.b16 %v2155
        %v2755 = vunpack.c.l.b16 %v2156
        %v2756 = vunpack.c.l.b16 %v2157
        %v2757 = vunpack.c.h.b16 %v2157
        %v2758 = vunpack.c.l.b16 %v2158
        %v2759 = vunpack.c.h.b16 %v2158
        %v2760 = vunpack.c.l.b16 %v2159
        %v2761 = vunpack.c.h.b16 %v2159
        %v2762 = vunpack.c.l.b16 %v2160
        %v2763 = vunpack.c.l.b16 %v2161
        %v2764 = vunpack.c.h.b16 %v2161
        %v2765 = vunpack.c.l.b16 %v2162
        %v2766 = vunpack.c.h.b16 %v2162
        %v2767 = vunpack.c.l.b16 %v2163
        %v2768 = vunpack.c.h.b16 %v2163
        %v2769 = vunpack.c.l.b16 %v2164
        %v2770 = vunpack.c.l.b16 %v2165
        %v2771 = vunpack.c.h.b16 %v2165
        %v2772 = vunpack.c.l.b16 %v2166
        %v2773 = vunpack.c.h.b16 %v2166
        %v2774 = vunpack.c.l.b16 %v2167
        %v2775 = vunpack.c.h.b16 %v2167
        %v2776 = vunpack.c.l.b16 %v2168
        %v2777 = vunpack.c.l.b16 %v2169
        %v2778 = vunpack.c.h.b16 %v2169
        %v2779 = vunpack.c.l.b16 %v2170
        %v2780 = vunpack.c.h.b16 %v2170
        %v2781 = vunpack.c.l.b16 %v2171
        %v2782 = vunpack.c.h.b16 %v2171
        %v2783 = vunpack.c.l.b16 %v2172
        %v2784 = vunpack.c.l.b16 %v2173
        %v2785 = vunpack.c.h.b16 %v2173
        %v2786 = vunpack.c.l.b16 %v2174
        %v2787 = vunpack.c.h.b16 %v2174
        %v2788 = vunpack.c.l.b16 %v2175
        %v2789 = vunpack.c.h.b16 %v2175
        %v2790 = vunpack.c.l.b16 %v2176
        %v2791 = vunpack.c.l.b16 %v2177
        %v2792 = vunpack.c.h.b16 %v2177
        %v2793 = vunpack.c.l.b16 %v2178
        %v2794 = vunpack.c.h.b16 %v2178
        %v2795 = vunpack.c.l.b16 %v2179
        %v2796 = vunpack.c.h.b16 %v2179
        %v2797 = vunpack.c.l.b16 %v2180
        %v2798 = vunpack.c.l.b16 %v2181
        %v2799 = vunpack.c.h.b16 %v2181
        %v2800 = vunpack.c.l.b16 %v2182
        %v2801 = vunpack.c.h.b16 %v2182
        %v2802 = vunpack.c.l.b16 %v2183
        %v2803 = vunpack.c.h.b16 %v2183
        %v2804 = vunpack.c.l.b16 %v2184
        %v2805 = vunpack.c.l.b16 %v2185
        %v2806 = vunpack.c.h.b16 %v2185
        %v2807 = vunpack.c.l.b16 %v2186
        %v2808 = vunpack.c.h.b16 %v2186
        %v2809 = vunpack.c.l.b16 %v2187
        %v2810 = vunpack.c.h.b16 %v2187
        %v2811 = vunpack.c.l.b16 %v2188
        %v2812 = vunpack.c.l.b16 %v2189
        %v2813 = vunpack.c.h.b16 %v2189
        %v2814 = vunpack.c.l.b16 %v2190
        %v2815 = vunpack.c.h.b16 %v2190
        %v2816 = vunpack.c.l.b16 %v2191
        %v2817 = vunpack.c.h.b16 %v2191
        %v2818 = vunpack.c.l.b16 %v2192
        %v2819 = vunpack.c.l.b16 %v2193
        %v2820 = vunpack.c.h.b16 %v2193
        %v2821 = vunpack.c.l.b16 %v2194
        %v2822 = vunpack.c.h.b16 %v2194
        %v2823 = vunpack.c.l.b16 %v2195
        %v2824 = vunpack.c.h.b16 %v2195
        %v2825 = vunpack.c.l.b16 %v2196
        %v2826 = vunpack.c.l.b16 %v2197
        %v2827 = vunpack.c.h.b16 %v2197
        %v2828 = vunpack.c.l.b16 %v2198
        %v2829 = vunpack.c.h.b16 %v2198
        %v2830 = vunpack.c.l.b16 %v2199
        %v2831 = vunpack.c.h.b16 %v2199
        %v2832 = vunpack.c.l.b16 %v2200
        %v2833 = vunpack.c.l.b16 %v2201
        %v2834 = vunpack.c.h.b16 %v2201
        %v2835 = vunpack.c.l.b16 %v2202
        %v2836 = vunpack.c.h.b16 %v2202
        %v2837 = vunpack.c.l.b16 %v2203
        %v2838 = vunpack.c.h.b16 %v2203
        %v2839 = vunpack.c.l.b16 %v2204
        %v2840 = vunpack.c.l.b16 %v2205
        %v2841 = vunpack.c.h.b16 %v2205
        %v2842 = vunpack.c.l.b16 %v2206
        %v2843 = vunpack.c.h.b16 %v2206
        %v2844 = vunpack.c.l.b16 %v2207
        %v2845 = vunpack.c.h.b16 %v2207
        %v2846 = vunpack.c.l.b16 %v2208
        %v2847 = vunpack.c.l.b16 %v2209
        %v2848 = vunpack.c.h.b16 %v2209
        %v2849 = vunpack.c.l.b16 %v2210
        %v2850 = vunpack.c.h.b16 %v2210
        %v2851 = vunpack.c.l.b16 %v2211
        %v2852 = vunpack.c.h.b16 %v2211
        %v2853 = vunpack.c.l.b16 %v2212
        %v2854 = vunpack.c.l.b16 %v2213
        %v2855 = vunpack.c.h.b16 %v2213
        %v2856 = vunpack.c.l.b16 %v2214
        %v2857 = vunpack.c.h.b16 %v2214
        %v2858 = vunpack.c.l.b16 %v2215
        %v2859 = vunpack.c.h.b16 %v2215
        %v2860 = vunpack.c.l.b16 %v2216
        %v2861 = vunpack.c.l.b16 %v2217
        %v2862 = vunpack.c.h.b16 %v2217
        %v2863 = vunpack.c.l.b16 %v2218
        %v2864 = vunpack.c.h.b16 %v2218
        %v2865 = vunpack.c.l.b16 %v2219
        %v2866 = vunpack.c.h.b16 %v2219
        %v2867 = vunpack.c.l.b16 %v2220
        %v2868 = vunpack.c.l.b16 %v2221
        %v2869 = vunpack.c.h.b16 %v2221
        %v2870 = vunpack.c.l.b16 %v2222
        %v2871 = vunpack.c.h.b16 %v2222
        %v2872 = vunpack.c.l.b16 %v2223
        %v2873 = vunpack.c.h.b16 %v2223
        %v2874 = vunpack.c.l.b16 %v2224
        %v2875 = vunpack.c.l.b16 %v2225
        %v2876 = vunpack.c.h.b16 %v2225
        %v2877 = vunpack.c.l.b16 %v2226
        %v2878 = vunpack.c.h.b16 %v2226
        %v2879 = vunpack.c.l.b16 %v2227
        %v2880 = vunpack.c.h.b16 %v2227
        %v2881 = vunpack.c.l.b16 %v2228
        %v2882 = vunpack.c.l.b16 %v2229
        %v2883 = vunpack.c.h.b16 %v2229
        %v2884 = vunpack.c.l.b16 %v2230
        %v2885 = vunpack.c.h.b16 %v2230
        %v2886 = vunpack.c.l.b16 %v2231
        %v2887 = vunpack.c.h.b16 %v2231
        %v2888 = vunpack.c.l.b16 %v2232
        %v2889 = vunpack.c.l.b16 %v2233
        %v2890 = vunpack.c.h.b16 %v2233
        %v2891 = vunpack.c.l.b16 %v2234
        %v2892 = vunpack.c.h.b16 %v2234
        %v2893 = vunpack.c.l.b16 %v2235
        %v2894 = vunpack.c.h.b16 %v2235
        %v2895 = vunpack.c.l.b16 %v2236
        %v2896 = vunpack.c.l.b16 %v2237
        %v2897 = vunpack.c.h.b16 %v2237
        %v2898 = vunpack.c.l.b16 %v2238
        %v2899 = vunpack.c.h.b16 %v2238
        %v2900 = vunpack.c.l.b16 %v2239
        %v2901 = vunpack.c.h.b16 %v2239
        %v2902 = vunpack.c.l.b16 %v2240
        %v2903 = vunpack.c.l.b16 %v2241
        %v2904 = vunpack.c.h.b16 %v2241
        %v2905 = vunpack.c.l.b16 %v2242
        %v2906 = vunpack.c.h.b16 %v2242
        %v2907 = vunpack.c.l.b16 %v2243
        %v2908 = vunpack.c.h.b16 %v2243
        %v2909 = vunpack.c.l.b16 %v2244
        %v2910 = vunpack.c.l.b16 %v2245
        %v2911 = vunpack.c.h.b16 %v2245
        %v2912 = vunpack.c.l.b16 %v2246
        %v2913 = vunpack.c.h.b16 %v2246
        %v2914 = vunpack.c.l.b16 %v2247
        %v2915 = vunpack.c.h.b16 %v2247
        %v2916 = vunpack.c.l.b16 %v2248
        %v2917 = vunpack.c.l.b16 %v2249
        %v2918 = vunpack.c.h.b16 %v2249
        %v2919 = vunpack.c.l.b16 %v2250
        %v2920 = vunpack.c.h.b16 %v2250
        %v2921 = vunpack.c.l.b16 %v2251
        %v2922 = vunpack.c.h.b16 %v2251
        %v2923 = vunpack.c.l.b16 %v2252
        %v2924 = vunpack.c.l.b16 %v2253
        %v2925 = vunpack.c.h.b16 %v2253
        %v2926 = vunpack.c.l.b16 %v2254
        %v2927 = vunpack.c.h.b16 %v2254
        %v2928 = vunpack.c.l.b16 %v2255
        %v2929 = vunpack.c.h.b16 %v2255
        %v2930 = vunpack.c.l.b16 %v2256
        %v2931 = vunpack.c.l.b16 %v2257
        %v2932 = vunpack.c.h.b16 %v2257
        %v2933 = vunpack.c.l.b16 %v2258
        %v2934 = vunpack.c.h.b16 %v2258
        %v2935 = vunpack.c.l.b16 %v2259
        %v2936 = vunpack.c.h.b16 %v2259
        %v2937 = vunpack.c.l.b16 %v2260
        %v2938 = vunpack.c.l.b16 %v2261
        %v2939 = vunpack.c.h.b16 %v2261
        %v2940 = vunpack.c.l.b16 %v2262
        %v2941 = vunpack.c.h.b16 %v2262
        %v2942 = vunpack.c.l.b16 %v2263
        %v2943 = vunpack.c.h.b16 %v2263
        %v2944 = vunpack.c.l.b16 %v2264
        %v2945 = vunpack.c.l.b16 %v2265
        %v2946 = vunpack.c.h.b16 %v2265
        %v2947 = vunpack.c.l.b16 %v2266
        %v2948 = vunpack.c.h.b16 %v2266
        %v2949 = vunpack.c.l.b16 %v2267
        %v2950 = vunpack.c.h.b16 %v2267
        %v2951 = vunpack.c.l.b16 %v2268
        %v2952 = vunpack.c.l.b16 %v2269
        %v2953 = vunpack.c.h.b16 %v2269
        %v2954 = vunpack.c.l.b16 %v2270
        %v2955 = vunpack.c.h.b16 %v2270
        %v2956 = vunpack.c.l.b16 %v2271
        %v2957 = vunpack.c.h.b16 %v2271
        %v2958 = vunpack.c.l.b16 %v2272
        %v2959 = vunpack.c.l.b16 %v2273
        %v2960 = vunpack.c.h.b16 %v2273
        %v2961 = vunpack.c.l.b16 %v2274
        %v2962 = vunpack.c.h.b16 %v2274
        %v2963 = vunpack.c.l.b16 %v2275
        %v2964 = vunpack.c.h.b16 %v2275
        %v2965 = vunpack.c.l.b16 %v2276
        %v2966 = vunpack.c.l.b16 %v2277
        %v2967 = vunpack.c.h.b16 %v2277
        %v2968 = vunpack.c.l.b16 %v2278
        %v2969 = vunpack.c.h.b16 %v2278
        %v2970 = vunpack.c.l.b16 %v2279
        %v2971 = vunpack.c.h.b16 %v2279
        %v2972 = vunpack.c.l.b16 %v2280
        %v2973 = vunpack.c.l.b16 %v2281
        %v2974 = vunpack.c.h.b16 %v2281
        %v2975 = vunpack.c.l.b16 %v2282
        %v2976 = vunpack.c.h.b16 %v2282
        %v2977 = vunpack.c.l.b16 %v2283
        %v2978 = vunpack.c.h.b16 %v2283
        %v2979 = vunpack.c.l.b16 %v2284
        %v2980 = vunpack.c.l.b16 %v2285
        %v2981 = vunpack.c.h.b16 %v2285
        %v2982 = vunpack.c.l.b16 %v2286
        %v2983 = vunpack.c.h.b16 %v2286
        %v2984 = vunpack.c.l.b16 %v2287
        %v2985 = vunpack.c.h.b16 %v2287
        %v2986 = vunpack.c.l.b16 %v2288
        %v2987 = vunpack.c.l.b16 %v2289
        %v2988 = vunpack.c.h.b16 %v2289
        %v2989 = vunpack.c.l.b16 %v2290
        %v2990 = vunpack.c.h.b16 %v2290
        %v2991 = vunpack.c.l.b16 %v2291
        %v2992 = vunpack.c.h.b16 %v2291
        %v2993 = vunpack.c.l.b16 %v2292
        %v2994 = vunpack.c.l.b16 %v2293
        %v2995 = vunpack.c.h.b16 %v2293
        %v2996 = vunpack.c.l.b16 %v2294
        %v2997 = vunpack.c.h.b16 %v2294
        %v2998 = vunpack.c.l.b16 %v2295
        %v2999 = vunpack.c.h.b16 %v2295
        %v3000 = vunpack.c.l.b16 %v2296
        %v3001 = vpack.c.b16 %v2560, %v2553
        %v3002 = vpack.c.b16 %v2561, %v2554
        %v3003 = vpack.c.b16 %v2562, %v2555
        %v3004 = vpack.c.b16 %v2563, %v2556
        %v3005 = vpack.c.b16 %v2564, %v2557
        %v3006 = vpack.c.b16 %v2565, %v2558
        %v3007 = vpack.c.b16 %v2566, %v2559
        %v3008 = vpack.c.b16 %v2574, %v2567
        %v3009 = vpack.c.b16 %v2575, %v2568
        %v3010 = vpack.c.b16 %v2576, %v2569
        %v3011 = vpack.c.b16 %v2577, %v2570
        %v3012 = vpack.c.b16 %v2578, %v2571
        %v3013 = vpack.c.b16 %v2579, %v2572
        %v3014 = vpack.c.b16 %v2580, %v2573
        %v3015 = vpack.c.b16 %v2588, %v2581
        %v3016 = vpack.c.b16 %v2589, %v2582
        %v3017 = vpack.c.b16 %v2590, %v2583
        %v3018 = vpack.c.b16 %v2591, %v2584
        %v3019 = vpack.c.b16 %v2592, %v2585
        %v3020 = vpack.c.b16 %v2593, %v2586
        %v3021 = vpack.c.b16 %v2594, %v2587
        %v3022 = vpack.c.b16 %v2602, %v2595
        %v3023 = vpack.c.b16 %v2603, %v2596
        %v3024 = vpack.c.b16 %v2604, %v2597
        %v3025 = vpack.c.b16 %v2605, %v2598
        %v3026 = vpack.c.b16 %v2606, %v2599
        %v3027 = vpack.c.b16 %v2607, %v2600
        %v3028 = vpack.c.b16 %v2608, %v2601
        %v3029 = vpack.c.b16 %v2616, %v2609
        %v3030 = vpack.c.b16 %v2617, %v2610
        %v3031 = vpack.c.b16 %v2618, %v2611
        %v3032 = vpack.c.b16 %v2619, %v2612
        %v3033 = vpack.c.b16 %v2620, %v2613
        %v3034 = vpack.c.b16 %v2621, %v2614
        %v3035 = vpack.c.b16 %v2622, %v2615
        %v3036 = vpack.c.b16 %v2630, %v2623
        %v3037 = vpack.c.b16 %v2631, %v2624
        %v3038 = vpack.c.b16 %v2632, %v2625
        %v3039 = vpack.c.b16 %v2633, %v2626
        %v3040 = vpack.c.b16 %v2634, %v2627
        %v3041 = vpack.c.b16 %v2635, %v2628
        %v3042 = vpack.c.b16 %v2636, %v2629
        %v3043 = vpack.c.b16 %v2644, %v2637
        %v3044 = vpack.c.b16 %v2645, %v2638
        %v3045 = vpack.c.b16 %v2646, %v2639
        %v3046 = vpack.c.b16 %v2647, %v2640
        %v3047 = vpack.c.b16 %v2648, %v2641
        %v3048 = vpack.c.b16 %v2649, %v2642
        %v3049 = vpack.c.b16 %v2650, %v2643
        %v3050 = vpack.c.b16 %v2658, %v2651
        %v3051 = vpack.c.b16 %v2659, %v2652
        %v3052 = vpack.c.b16 %v2660, %v2653
        %v3053 = vpack.c.b16 %v2661, %v2654
        %v3054 = vpack.c.b16 %v2662, %v2655
        %v3055 = vpack.c.b16 %v2663, %v2656
        %v3056 = vpack.c.b16 %v2664, %v2657
        %v3057 = vpack.c.b16 %v2672, %v2665
        %v3058 = vpack.c.b16 %v2673, %v2666
        %v3059 = vpack.c.b16 %v2674, %v2667
        %v3060 = vpack.c.b16 %v2675, %v2668
        %v3061 = vpack.c.b16 %v2676, %v2669
        %v3062 = vpack.c.b16 %v2677, %v2670
        %v3063 = vpack.c.b16 %v2678, %v2671
        %v3064 = vpack.c.b16 %v2686, %v2679
        %v3065 = vpack.c.b16 %v2687, %v2680
        %v3066 = vpack.c.b16 %v2688, %v2681
        %v3067 = vpack.c.b16 %v2689, %v2682
        %v3068 = vpack.c.b16 %v2690, %v2683
        %v3069 = vpack.c.b16 %v2691, %v2684
        %v3070 = vpack.c.b16 %v2692, %v2685
        %v3071 = vpack.c.b16 %v2700, %v2693
        %v3072 = vpack.c.b16 %v2701, %v2694
        %v3073 = vpack.c.b16 %v2702, %v2695
        %v3074 = vpack.c.b16 %v2703, %v2696
        %v3075 = vpack.c.b16 %v2704, %v2697
        %v3076 = vpack.c.b16 %v2705, %v2698
        %v3077 = vpack.c.b16 %v2706, %v2699
        %v3078 = vpack.c.b16 %v2714, %v2707
        %v3079 = vpack.c.b16 %v2715, %v2708
        %v3080 = vpack.c.b16 %v2716, %v2709
        %v3081 = vpack.c.b16 %v2717, %v2710
        %v3082 = vpack.c.b16 %v2718, %v2711
        %v3083 = vpack.c.b16 %v2719, %v2712
        %v3084 = vpack.c.b16 %v2720, %v2713
        %v3085 = vpack.c.b16 %v2728, %v2721
        %v3086 = vpack.c.b16 %v2729, %v2722
        %v3087 = vpack.c.b16 %v2730, %v2723
        %v3088 = vpack.c.b16 %v2731, %v2724
        %v3089 = vpack.c.b16 %v2732, %v2725
        %v3090 = vpack.c.b16 %v2733, %v2726
        %v3091 = vpack.c.b16 %v2734, %v2727
        %v3092 = vpack.c.b16 %v2742, %v2735
        %v3093 = vpack.c.b16 %v2743, %v2736
        %v3094 = vpack.c.b16 %v2744, %v2737
        %v3095 = vpack.c.b16 %v2745, %v2738
        %v3096 = vpack.c.b16 %v2746, %v2739
        %v3097 = vpack.c.b16 %v2747, %v2740
        %v3098 = vpack.c.b16 %v2748, %v2741
        %v3099 = vpack.c.b16 %v2756, %v2749
        %v3100 = vpack.c.b16 %v2757, %v2750
        %v3101 = vpack.c.b16 %v2758, %v2751
        %v3102 = vpack.c.b16 %v2759, %v2752
        %v3103 = vpack.c.b16 %v2760, %v2753
        %v3104 = vpack.c.b16 %v2761, %v2754
        %v3105 = vpack.c.b16 %v2762, %v2755
        %v3106 = vpack.c.b16 %v2770, %v2763
        %v3107 = vpack.c.b16 %v2771, %v2764
        %v3108 = vpack.c.b16 %v2772, %v2765
        %v3109 = vpack.c.b16 %v2773, %v2766
        %v3110 = vpack.c.b16 %v2774, %v2767
        %v3111 = vpack.c.b16 %v2775, %v2768
        %v3112 = vpack.c.b16 %v2776, %v2769
        %v3113 = vpack.c.b16 %v2784, %v2777
        %v3114 = vpack.c.b16 %v2785, %v2778
        %v3115 = vpack.c.b16 %v2786, %v2779
        %v3116 = vpack.c.b16 %v2787, %v2780
        %v3117 = vpack.c.b16 %v2788, %v2781
        %v3118 = vpack.c.b16 %v2789, %v2782
        %v3119 = vpack.c.b16 %v2790, %v2783
        %v3120 = vpack.c.b16 %v2798, %v2791
        %v3121 = vpack.c.b16 %v2799, %v2792
        %v3122 = vpack.c.b16 %v2800, %v2793
        %v3123 = vpack.c.b16 %v2801, %v2794
        %v3124 = vpack.c.b16 %v2802, %v2795
        %v3125 = vpack.c.b16 %v2803, %v2796
        %v3126 = vpack.c.b16 %v2804, %v2797
        %v3127 = vpack.c.b16 %v2812, %v2805
        %v3128 = vpack.c.b16 %v2813, %v2806
        %v3129 = vpack.c.b16 %v2814, %v2807
        %v3130 = vpack.c.b16 %v2815, %v2808
        %v3131 = vpack.c.b16 %v2816, %v2809
        %v3132 = vpack.c.b16 %v2817, %v2810
        %v3133 = vpack.c.b16 %v2818, %v2811
        %v3134 = vpack.c.b16 %v2826, %v2819
        %v3135 = vpack.c.b16 %v2827, %v2820
        %v3136 = vpack.c.b16 %v2828, %v2821
        %v3137 = vpack.c.b16 %v2829, %v2822
        %v3138 = vpack.c.b16 %v2830, %v2823
        %v3139 = vpack.c.b16 %v2831, %v2824
        %v3140 = vpack.c.b16 %v2832, %v2825
        %v3141 = vpack.c.b16 %v2840, %v2833
        %v3142 = vpack.c.b16 %v2841, %v2834
        %v3143 = vpack.c.b16 %v2842, %v2835
        %v3144 = vpack.c.b16 %v2843, %v2836
        %v3145 = vpack.c.b16 %v2844, %v2837
        %v3146 = vpack.c.b16 %v2845, %v2838
        %v3147 = vpack.c.b16 %v2846, %v2839
        %v3148 = vpack.c.b16 %v2854, %v2847
        %v3149 = vpack.c.b16 %v2855, %v2848
        %v3150 = vpack.c.b16 %v2856, %v2849
        %v3151 = vpack.c.b16 %v2857, %v2850
        %v3152 = vpack.c.b16 %v2858, %v2851
        %v3153 = vpack.c.b16 %v2859, %v2852
        %v3154 = vpack.c.b16 %v2860, %v2853
        %v3155 = vpack.c.b16 %v2868, %v2861
        %v3156 = vpack.c.b16 %v2869, %v2862
        %v3157 = vpack.c.b16 %v2870, %v2863
        %v3158 = vpack.c.b16 %v2871, %v2864
        %v3159 = vpack.c.b16 %v2872, %v2865
        %v3160 = vpack.c.b16 %v2873, %v2866
        %v3161 = vpack.c.b16 %v2874, %v2867
        %v3162 = vpack.c.b16 %v2882, %v2875
        %v3163 = vpack.c.b16 %v2883, %v2876
        %v3164 = vpack.c.b16 %v2884, %v2877
        %v3165 = vpack.c.b16 %v2885, %v2878
        %v3166 = vpack.c.b16 %v2886, %v2879
        %v3167 = vpack.c.b16 %v2887, %v2880
        %v3168 = vpack.c.b16 %v2888, %v2881
        %v3169 = vpack.c.b16 %v2896, %v2889
        %v3170 = vpack.c.b16 %v2897, %v2890
        %v3171 = vpack.c.b16 %v2898, %v2891
        %v3172 = vpack.c.b16 %v2899, %v2892
        %v3173 = vpack.c.b16 %v2900, %v2893
        %v3174 = vpack.c.b16 %v2901, %v2894
        %v3175 = vpack.c.b16 %v2902, %v2895
        %v3176 = vpack.c.b16 %v2910, %v2903
        %v3177 = vpack.c.b16 %v2911, %v2904
        %v3178 = vpack.c.b16 %v2912, %v2905
        %v3179 = vpack.c.b16 %v2913, %v2906
        %v3180 = vpack.c.b16 %v2914, %v2907
        %v3181 = vpack.c.b16 %v2915, %v2908
        %v3182 = vpack.c.b16 %v2916, %v2909
        %v3183 = vpack.c.b16 %v2924, %v2917
        %v3184 = vpack.c.b16 %v2925, %v2918
        %v3185 = vpack.c.b16 %v2926, %v2919
        %v3186 = vpack.c.b16 %v2927, %v2920
        %v3187 = vpack.c.b16 %v2928, %v2921
        %v3188 = vpack.c.b16 %v2929, %v2922
        %v3189 = vpack.c.b16 %v2930, %v2923
        %v3190 = vpack.c.b16 %v2938, %v2931
        %v3191 = vpack.c.b16 %v2939, %v2932
        %v3192 = vpack.c.b16 %v2940, %v2933
        %v3193 = vpack.c.b16 %v2941, %v2934
        %v3194 = vpack.c.b16 %v2942, %v2935
        %v3195 = vpack.c.b16 %v2943, %v2936
        %v3196 = vpack.c.b16 %v2944, %v2937
        %v3197 = vpack.c.b16 %v2952, %v2945
        %v3198 = vpack.c.b16 %v2953, %v2946
        %v3199 = vpack.c.b16 %v2954, %v2947
        %v3200 = vpack.c.b16 %v2955, %v2948
        %v3201 = vpack.c.b16 %v2956, %v2949
        %v3202 = vpack.c.b16 %v2957, %v2950
        %v3203 = vpack.c.b16 %v2958, %v2951
        %v3204 = vpack.c.b16 %v2966, %v2959
        %v3205 = vpack.c.b16 %v2967, %v2960
        %v3206 = vpack.c.b16 %v2968, %v2961
        %v3207 = vpack.c.b16 %v2969, %v2962
        %v3208 = vpack.c.b16 %v2970, %v2963
        %v3209 = vpack.c.b16 %v2971, %v2964
        %v3210 = vpack.c.b16 %v2972, %v2965
        %v3211 = vpack.c.b16 %v2980, %v2973
        %v3212 = vpack.c.b16 %v2981, %v2974
        %v3213 = vpack.c.b16 %v2982, %v2975
        %v3214 = vpack.c.b16 %v2983, %v2976
        %v3215 = vpack.c.b16 %v2984, %v2977
        %v3216 = vpack.c.b16 %v2985, %v2978
        %v3217 = vpack.c.b16 %v2986, %v2979
        %v3218 = vpack.c.b16 %v2994, %v2987
        %v3219 = vpack.c.b16 %v2995, %v2988
        %v3220 = vpack.c.b16 %v2996, %v2989
        %v3221 = vpack.c.b16 %v2997, %v2990
        %v3222 = vpack.c.b16 %v2998, %v2991
        %v3223 = vpack.c.b16 %v2999, %v2992
        %v3224 = vpack.c.b16 %v3000, %v2993
        %3449 = vmatprep.subr.bf16.mxu0 %v3002
        %3450 = vmatpush1.bf16.msra.mxu0 %v3001
        %3451 = vmatprep.subr.bf16.mxu0 %v3009
        %3452 = vmatpush1.bf16.msra.mxu0 %v3008
        %3453 = vmatprep.subr.bf16.mxu0 %v3016
        %3454 = vmatpush1.bf16.msra.mxu0 %v3015
        %3455 = vmatprep.subr.bf16.mxu0 %v3023
        %3456 = vmatpush1.bf16.msra.mxu0 %v3022
        %3457 = vmatprep.subr.bf16.mxu0 %v3030
        %3458 = vmatpush1.bf16.msra.mxu0 %v3029
        %3459 = vmatprep.subr.bf16.mxu0 %v3037
        %3460 = vmatpush1.bf16.msra.mxu0 %v3036
        %3461 = vmatprep.subr.bf16.mxu0 %v3044
        %3462 = vmatpush1.bf16.msra.mxu0 %v3043
        %3463 = vmatprep.subr.bf16.mxu0 %v3051
        %3464 = vmatpush1.bf16.msra.mxu0 %v3050
        %3465 = vmatprep.subr.bf16.mxu0 %v3058
        %3466 = vmatpush1.bf16.msra.mxu0 %v3057
        %3467 = vmatprep.subr.bf16.mxu0 %v3065
        %3468 = vmatpush1.bf16.msra.mxu0 %v3064
        %3469 = vmatprep.subr.bf16.mxu0 %v3072
        %3470 = vmatpush1.bf16.msra.mxu0 %v3071
        %3471 = vmatprep.subr.bf16.mxu0 %v3079
        %3472 = vmatpush1.bf16.msra.mxu0 %v3078
        %3473 = vmatprep.subr.bf16.mxu0 %v3086
        %3474 = vmatpush1.bf16.msra.mxu0 %v3085
        %3475 = vmatprep.subr.bf16.mxu0 %v3093
        %3476 = vmatpush1.bf16.msra.mxu0 %v3092
        %3477 = vmatprep.subr.bf16.mxu0 %v3100
        %3478 = vmatpush1.bf16.msra.mxu0 %v3099
        %3479 = vmatprep.subr.bf16.mxu0 %v3107
        %3480 = vmatpush1.bf16.msra.mxu0 %v3106
        %3481 = vmatprep.mubr.bf16.mxu0 %v2038
        %3482 = vmatmul.mubr.bf16.gmra.mrb[0].mxu0 %v2037
        %v3483 = vpop.f32.mrb[0].mxu0
        %v3484 = vadd.f32 0.0, %v3483
        %v3485 = vpop.f32.mrb[0].mxu0
        %v3486 = vadd.f32 0.0, %v3485
        %v3487 = vpop.f32.mrb[0].mxu0
        %v3488 = vpop.f32.mrb[0].mxu0
        %3489 = vdwg.mxu0
        %3490 = vmatprep.subr.bf16.mxu0 %v3114
        %3491 = vmatpush1.bf16.msra.mxu0 %v3113
        %3492 = vmatprep.subr.bf16.mxu0 %v3121
        %3493 = vmatpush1.bf16.msra.mxu0 %v3120
        %3494 = vmatprep.subr.bf16.mxu0 %v3128
        %3495 = vmatpush1.bf16.msra.mxu0 %v3127
        %3496 = vmatprep.subr.bf16.mxu0 %v3135
        %3497 = vmatpush1.bf16.msra.mxu0 %v3134
        %3498 = vmatprep.subr.bf16.mxu0 %v3142
        %3499 = vmatpush1.bf16.msra.mxu0 %v3141
        %3500 = vmatprep.subr.bf16.mxu0 %v3149
        %3501 = vmatpush1.bf16.msra.mxu0 %v3148
        %3502 = vmatprep.subr.bf16.mxu0 %v3156
        %3503 = vmatpush1.bf16.msra.mxu0 %v3155
        %3504 = vmatprep.subr.bf16.mxu0 %v3163
        %3505 = vmatpush1.bf16.msra.mxu0 %v3162
        %3506 = vmatprep.subr.bf16.mxu0 %v3170
        %3507 = vmatpush1.bf16.msra.mxu0 %v3169
        %3508 = vmatprep.subr.bf16.mxu0 %v3177
        %3509 = vmatpush1.bf16.msra.mxu0 %v3176
        %3510 = vmatprep.subr.bf16.mxu0 %v3184
        %3511 = vmatpush1.bf16.msra.mxu0 %v3183
        %3512 = vmatprep.subr.bf16.mxu0 %v3191
        %3513 = vmatpush1.bf16.msra.mxu0 %v3190
        %3514 = vmatprep.subr.bf16.mxu0 %v3198
        %3515 = vmatpush1.bf16.msra.mxu0 %v3197
        %3516 = vmatprep.subr.bf16.mxu0 %v3205
        %3517 = vmatpush1.bf16.msra.mxu0 %v3204
        %3518 = vmatprep.subr.bf16.mxu0 %v3212
        %3519 = vmatpush1.bf16.msra.mxu0 %v3211
        %3520 = vmatprep.subr.bf16.mxu0 %v3219
        %3521 = vmatpush1.bf16.msra.mxu0 %v3218
        %3522 = vmatprep.mubr.bf16.mxu0 %v2040
        %3523 = vmatmul.mubr.bf16.gmra.mrb[0].mxu0 %v2039
        %v3524 = vpop.f32.mrb[0].mxu0
        %v3525 = vadd.f32 %v3484, %v3524
        %v3526 = vpop.f32.mrb[0].mxu0
        %v3527 = vadd.f32 %v3486, %v3526
        %v3528 = vpop.f32.mrb[0].mxu0
        %v3529 = vpop.f32.mrb[0].mxu0
        %3530 = vdwg.mxu0
        %3531 = vmatprep.subr.bf16.mxu0 %v3004
        %3532 = vmatpush1.bf16.msra.mxu0 %v3003
        %3533 = vmatprep.subr.bf16.mxu0 %v3011
        %3534 = vmatpush1.bf16.msra.mxu0 %v3010
        %3535 = vmatprep.subr.bf16.mxu0 %v3018
        %3536 = vmatpush1.bf16.msra.mxu0 %v3017
        %3537 = vmatprep.subr.bf16.mxu0 %v3025
        %3538 = vmatpush1.bf16.msra.mxu0 %v3024
        %3539 = vmatprep.subr.bf16.mxu0 %v3032
        %3540 = vmatpush1.bf16.msra.mxu0 %v3031
        %3541 = vmatprep.subr.bf16.mxu0 %v3039
        %3542 = vmatpush1.bf16.msra.mxu0 %v3038
        %3543 = vmatprep.subr.bf16.mxu0 %v3046
        %3544 = vmatpush1.bf16.msra.mxu0 %v3045
        %3545 = vmatprep.subr.bf16.mxu0 %v3053
        %3546 = vmatpush1.bf16.msra.mxu0 %v3052
        %3547 = vmatprep.subr.bf16.mxu0 %v3060
        %3548 = vmatpush1.bf16.msra.mxu0 %v3059
        %3549 = vmatprep.subr.bf16.mxu0 %v3067
        %3550 = vmatpush1.bf16.msra.mxu0 %v3066
        %3551 = vmatprep.subr.bf16.mxu0 %v3074
        %3552 = vmatpush1.bf16.msra.mxu0 %v3073
        %3553 = vmatprep.subr.bf16.mxu0 %v3081
        %3554 = vmatpush1.bf16.msra.mxu0 %v3080
        %3555 = vmatprep.subr.bf16.mxu0 %v3088
        %3556 = vmatpush1.bf16.msra.mxu0 %v3087
        %3557 = vmatprep.subr.bf16.mxu0 %v3095
        %3558 = vmatpush1.bf16.msra.mxu0 %v3094
        %3559 = vmatprep.subr.bf16.mxu0 %v3102
        %3560 = vmatpush1.bf16.msra.mxu0 %v3101
        %3561 = vmatprep.subr.bf16.mxu0 %v3109
        %3562 = vmatpush1.bf16.msra.mxu0 %v3108
        %3563 = vmatprep.mubr.bf16.mxu0 %v2038
        %3564 = vmatmul.mubr.bf16.gmra.mrb[0].mxu0 %v2037
        %v3565 = vpop.f32.mrb[0].mxu0
        %v3566 = vadd.f32 0.0, %v3565
        %v3567 = vpop.f32.mrb[0].mxu0
        %v3568 = vadd.f32 0.0, %v3567
        %v3569 = vpop.f32.mrb[0].mxu0
        %v3570 = vpop.f32.mrb[0].mxu0
        %3571 = vdwg.mxu0
        %3572 = vmatprep.subr.bf16.mxu0 %v3116
        %3573 = vmatpush1.bf16.msra.mxu0 %v3115
        %3574 = vmatprep.subr.bf16.mxu0 %v3123
        %3575 = vmatpush1.bf16.msra.mxu0 %v3122
        %3576 = vmatprep.subr.bf16.mxu0 %v3130
        %3577 = vmatpush1.bf16.msra.mxu0 %v3129
        %3578 = vmatprep.subr.bf16.mxu0 %v3137
        %3579 = vmatpush1.bf16.msra.mxu0 %v3136
        %3580 = vmatprep.subr.bf16.mxu0 %v3144
        %3581 = vmatpush1.bf16.msra.mxu0 %v3143
        %3582 = vmatprep.subr.bf16.mxu0 %v3151
        %3583 = vmatpush1.bf16.msra.mxu0 %v3150
        %3584 = vmatprep.subr.bf16.mxu0 %v3158
        %3585 = vmatpush1.bf16.msra.mxu0 %v3157
        %3586 = vmatprep.subr.bf16.mxu0 %v3165
        %3587 = vmatpush1.bf16.msra.mxu0 %v3164
        %3588 = vmatprep.subr.bf16.mxu0 %v3172
        %3589 = vmatpush1.bf16.msra.mxu0 %v3171
        %3590 = vmatprep.subr.bf16.mxu0 %v3179
        %3591 = vmatpush1.bf16.msra.mxu0 %v3178
        %3592 = vmatprep.subr.bf16.mxu0 %v3186
        %3593 = vmatpush1.bf16.msra.mxu0 %v3185
        %3594 = vmatprep.subr.bf16.mxu0 %v3193
        %3595 = vmatpush1.bf16.msra.mxu0 %v3192
        %3596 = vmatprep.subr.bf16.mxu0 %v3200
        %3597 = vmatpush1.bf16.msra.mxu0 %v3199
        %3598 = vmatprep.subr.bf16.mxu0 %v3207
        %3599 = vmatpush1.bf16.msra.mxu0 %v3206
        %3600 = vmatprep.subr.bf16.mxu0 %v3214
        %3601 = vmatpush1.bf16.msra.mxu0 %v3213
        %3602 = vmatprep.subr.bf16.mxu0 %v3221
        %3603 = vmatpush1.bf16.msra.mxu0 %v3220
        %3604 = vmatprep.mubr.bf16.mxu0 %v2040
        %3605 = vmatmul.mubr.bf16.gmra.mrb[0].mxu0 %v2039
        %v3606 = vpop.f32.mrb[0].mxu0
        %v3607 = vadd.f32 %v3566, %v3606
        %v3608 = vpop.f32.mrb[0].mxu0
        %v3609 = vadd.f32 %v3568, %v3608
        %v3610 = vpop.f32.mrb[0].mxu0
        %v3611 = vpop.f32.mrb[0].mxu0
        %3612 = vdwg.mxu0
        %3613 = vmatprep.subr.bf16.mxu0 %v3006
        %3614 = vmatpush1.bf16.msra.mxu0 %v3005
        %3615 = vmatprep.subr.bf16.mxu0 %v3013
        %3616 = vmatpush1.bf16.msra.mxu0 %v3012
        %3617 = vmatprep.subr.bf16.mxu0 %v3020
        %3618 = vmatpush1.bf16.msra.mxu0 %v3019
        %3619 = vmatprep.subr.bf16.mxu0 %v3027
        %3620 = vmatpush1.bf16.msra.mxu0 %v3026
        %3621 = vmatprep.subr.bf16.mxu0 %v3034
        %3622 = vmatpush1.bf16.msra.mxu0 %v3033
        %3623 = vmatprep.subr.bf16.mxu0 %v3041
        %3624 = vmatpush1.bf16.msra.mxu0 %v3040
        %3625 = vmatprep.subr.bf16.mxu0 %v3048
        %3626 = vmatpush1.bf16.msra.mxu0 %v3047
        %3627 = vmatprep.subr.bf16.mxu0 %v3055
        %3628 = vmatpush1.bf16.msra.mxu0 %v3054
        %3629 = vmatprep.subr.bf16.mxu0 %v3062
        %3630 = vmatpush1.bf16.msra.mxu0 %v3061
        %3631 = vmatprep.subr.bf16.mxu0 %v3069
        %3632 = vmatpush1.bf16.msra.mxu0 %v3068
        %3633 = vmatprep.subr.bf16.mxu0 %v3076
        %3634 = vmatpush1.bf16.msra.mxu0 %v3075
        %3635 = vmatprep.subr.bf16.mxu0 %v3083
        %3636 = vmatpush1.bf16.msra.mxu0 %v3082
        %3637 = vmatprep.subr.bf16.mxu0 %v3090
        %3638 = vmatpush1.bf16.msra.mxu0 %v3089
        %3639 = vmatprep.subr.bf16.mxu0 %v3097
        %3640 = vmatpush1.bf16.msra.mxu0 %v3096
        %3641 = vmatprep.subr.bf16.mxu0 %v3104
        %3642 = vmatpush1.bf16.msra.mxu0 %v3103
        %3643 = vmatprep.subr.bf16.mxu0 %v3111
        %3644 = vmatpush1.bf16.msra.mxu0 %v3110
        %3645 = vmatprep.mubr.bf16.mxu0 %v2038
        %3646 = vmatmul.mubr.bf16.gmra.mrb[0].mxu0 %v2037
        %v3647 = vpop.f32.mrb[0].mxu0
        %v3648 = vadd.f32 0.0, %v3647
        %v3649 = vpop.f32.mrb[0].mxu0
        %v3650 = vadd.f32 0.0, %v3649
        %v3651 = vpop.f32.mrb[0].mxu0
        %v3652 = vpop.f32.mrb[0].mxu0
        %3653 = vdwg.mxu0
        %3654 = vmatprep.subr.bf16.mxu0 %v3118
        %3655 = vmatpush1.bf16.msra.mxu0 %v3117
        %3656 = vmatprep.subr.bf16.mxu0 %v3125
        %3657 = vmatpush1.bf16.msra.mxu0 %v3124
        %3658 = vmatprep.subr.bf16.mxu0 %v3132
        %3659 = vmatpush1.bf16.msra.mxu0 %v3131
        %3660 = vmatprep.subr.bf16.mxu0 %v3139
        %3661 = vmatpush1.bf16.msra.mxu0 %v3138
        %3662 = vmatprep.subr.bf16.mxu0 %v3146
        %3663 = vmatpush1.bf16.msra.mxu0 %v3145
        %3664 = vmatprep.subr.bf16.mxu0 %v3153
        %3665 = vmatpush1.bf16.msra.mxu0 %v3152
        %3666 = vmatprep.subr.bf16.mxu0 %v3160
        %3667 = vmatpush1.bf16.msra.mxu0 %v3159
        %3668 = vmatprep.subr.bf16.mxu0 %v3167
        %3669 = vmatpush1.bf16.msra.mxu0 %v3166
        %3670 = vmatprep.subr.bf16.mxu0 %v3174
        %3671 = vmatpush1.bf16.msra.mxu0 %v3173
        %3672 = vmatprep.subr.bf16.mxu0 %v3181
        %3673 = vmatpush1.bf16.msra.mxu0 %v3180
        %3674 = vmatprep.subr.bf16.mxu0 %v3188
        %3675 = vmatpush1.bf16.msra.mxu0 %v3187
        %3676 = vmatprep.subr.bf16.mxu0 %v3195
        %3677 = vmatpush1.bf16.msra.mxu0 %v3194
        %3678 = vmatprep.subr.bf16.mxu0 %v3202
        %3679 = vmatpush1.bf16.msra.mxu0 %v3201
        %3680 = vmatprep.subr.bf16.mxu0 %v3209
        %3681 = vmatpush1.bf16.msra.mxu0 %v3208
        %3682 = vmatprep.subr.bf16.mxu0 %v3216
        %3683 = vmatpush1.bf16.msra.mxu0 %v3215
        %3684 = vmatprep.subr.bf16.mxu0 %v3223
        %3685 = vmatpush1.bf16.msra.mxu0 %v3222
        %3686 = vmatprep.mubr.bf16.mxu0 %v2040
        %3687 = vmatmul.mubr.bf16.gmra.mrb[0].mxu0 %v2039
        %v3688 = vpop.f32.mrb[0].mxu0
        %v3689 = vadd.f32 %v3648, %v3688
        %v3690 = vpop.f32.mrb[0].mxu0
        %v3691 = vadd.f32 %v3650, %v3690
        %v3692 = vpop.f32.mrb[0].mxu0
        %v3693 = vpop.f32.mrb[0].mxu0
        %3694 = vdwg.mxu0
        %3695 = vmatprep.subr.bf16.mxu0 0
        %3696 = vmatpush1.bf16.msra.mxu0 %v3007
        %3697 = vmatprep.subr.bf16.mxu0 0
        %3698 = vmatpush1.bf16.msra.mxu0 %v3014
        %3699 = vmatprep.subr.bf16.mxu0 0
        %3700 = vmatpush1.bf16.msra.mxu0 %v3021
        %3701 = vmatprep.subr.bf16.mxu0 0
        %3702 = vmatpush1.bf16.msra.mxu0 %v3028
        %3703 = vmatprep.subr.bf16.mxu0 0
        %3704 = vmatpush1.bf16.msra.mxu0 %v3035
        %3705 = vmatprep.subr.bf16.mxu0 0
        %3706 = vmatpush1.bf16.msra.mxu0 %v3042
        %3707 = vmatprep.subr.bf16.mxu0 0
        %3708 = vmatpush1.bf16.msra.mxu0 %v3049
        %3709 = vmatprep.subr.bf16.mxu0 0
        %3710 = vmatpush1.bf16.msra.mxu0 %v3056
        %3711 = vmatprep.subr.bf16.mxu0 0
        %3712 = vmatpush1.bf16.msra.mxu0 %v3063
        %3713 = vmatprep.subr.bf16.mxu0 0
        %3714 = vmatpush1.bf16.msra.mxu0 %v3070
        %3715 = vmatprep.subr.bf16.mxu0 0
        %3716 = vmatpush1.bf16.msra.mxu0 %v3077
        %3717 = vmatprep.subr.bf16.mxu0 0
        %3718 = vmatpush1.bf16.msra.mxu0 %v3084
        %3719 = vmatprep.subr.bf16.mxu0 0
        %3720 = vmatpush1.bf16.msra.mxu0 %v3091
        %3721 = vmatprep.subr.bf16.mxu0 0
        %3722 = vmatpush1.bf16.msra.mxu0 %v3098
        %3723 = vmatprep.subr.bf16.mxu0 0
        %3724 = vmatpush1.bf16.msra.mxu0 %v3105
        %3725 = vmatprep.subr.bf16.mxu0 0
        %3726 = vmatpush1.bf16.msra.mxu0 %v3112
        %3727 = vmatprep.mubr.bf16.mxu0 %v2038
        %3728 = vmatmul.mubr.bf16.gmra.mrb[0].mxu0 %v2037
        %v3729 = vpop.f32.mrb[0].mxu0
        %v3730 = vadd.f32 0.0, %v3729
        %v3731 = vpop.f32.mrb[0].mxu0
        %v3732 = vpop.f32.mrb[0].mxu0
        %v3733 = vpop.f32.mrb[0].mxu0
        %3734 = vdwg.mxu0
        %3735 = vmatprep.subr.bf16.mxu0 0
        %3736 = vmatpush1.bf16.msra.mxu0 %v3119
        %3737 = vmatprep.subr.bf16.mxu0 0
        %3738 = vmatpush1.bf16.msra.mxu0 %v3126
        %3739 = vmatprep.subr.bf16.mxu0 0
        %3740 = vmatpush1.bf16.msra.mxu0 %v3133
        %3741 = vmatprep.subr.bf16.mxu0 0
        %3742 = vmatpush1.bf16.msra.mxu0 %v3140
        %3743 = vmatprep.subr.bf16.mxu0 0
        %3744 = vmatpush1.bf16.msra.mxu0 %v3147
        %3745 = vmatprep.subr.bf16.mxu0 0
        %3746 = vmatpush1.bf16.msra.mxu0 %v3154
        %3747 = vmatprep.subr.bf16.mxu0 0
        %3748 = vmatpush1.bf16.msra.mxu0 %v3161
        %3749 = vmatprep.subr.bf16.mxu0 0
        %3750 = vmatpush1.bf16.msra.mxu0 %v3168
        %3751 = vmatprep.subr.bf16.mxu0 0
        %3752 = vmatpush1.bf16.msra.mxu0 %v3175
        %3753 = vmatprep.subr.bf16.mxu0 0
        %3754 = vmatpush1.bf16.msra.mxu0 %v3182
        %3755 = vmatprep.subr.bf16.mxu0 0
        %3756 = vmatpush1.bf16.msra.mxu0 %v3189
        %3757 = vmatprep.subr.bf16.mxu0 0
        %3758 = vmatpush1.bf16.msra.mxu0 %v3196
        %3759 = vmatprep.subr.bf16.mxu0 0
        %3760 = vmatpush1.bf16.msra.mxu0 %v3203
        %3761 = vmatprep.subr.bf16.mxu0 0
        %3762 = vmatpush1.bf16.msra.mxu0 %v3210
        %3763 = vmatprep.subr.bf16.mxu0 0
        %3764 = vmatpush1.bf16.msra.mxu0 %v3217
        %3765 = vmatprep.subr.bf16.mxu0 0
        %3766 = vmatpush1.bf16.msra.mxu0 %v3224
        %3767 = vmatprep.mubr.bf16.mxu0 %v2040
        %3768 = vmatmul.mubr.bf16.gmra.mrb[0].mxu0 %v2039
        %v3769 = vpop.f32.mrb[0].mxu0
        %v3770 = vadd.f32 %v3730, %v3769
        %v3771 = vpop.f32.mrb[0].mxu0
        %v3772 = vpop.f32.mrb[0].mxu0
        %v3773 = vpop.f32.mrb[0].mxu0
        %3774 = vdwg.mxu0
        %v3775 = vtanh.pop %v3525
        %v3776 = vtanh.pop %v3527
        %v3777 = vtanh.pop %v3607
        %v3778 = vtanh.pop %v3609
        %v3779 = vtanh.pop %v3689
        %v3780 = vtanh.pop %v3691
        %v3781 = vtanh.pop %v3770
        %v3782 = vpack.c.bf16 %v3775, %v3775
        %v3783 = vpack.c.bf16 %v3776, %v3776
        %v3784 = vpack.c.bf16 %v3777, %v3777
        %v3785 = vpack.c.bf16 %v3778, %v3778
        %v3786 = vpack.c.bf16 %v3779, %v3779
        %v3787 = vpack.c.bf16 %v3780, %v3780
        %v3788 = vpack.c.bf16 %v3781, %v3781
        %v3796 = vunpack.c.l.b16 %v3782
        %v3797 = vunpack.c.l.b16 %v3783
        %v3798 = vunpack.c.l.b16 %v3784
        %v3799 = vunpack.c.l.b16 %v3785
        %v3800 = vunpack.c.l.b16 %v3786
        %v3801 = vunpack.c.l.b16 %v3787
        %v3802 = vunpack.c.l.b16 %v3788
        %v3803 = vpack.c.b16 %v3797, %v3796
        %v3804 = vpack.c.b16 %v3799, %v3798
        %v3805 = vpack.c.b16 %v3801, %v3800
        %v3806 = vpack.c.b16 %v3802, %v3802
        %3811 = vst [vmem:[%s450] sm:$0xff] %v3803
        %3812 = vst [vmem:[%s450 + $0x8] sm:$0xff] %v3804
        %3813 = vst [vmem:[%s450 + $0x10] sm:$0xff] %v3805
        %3814 = vst [vmem:[%s450 + $0x18] sm:$0xf] %v3806
        %s3815 = sand.u32 %s268, 1
        %s3816 = scalar_lea.sflag [#allocation5], %s3815
        %s3817 = sand.u32 %s268, 1
        %s3818 = smul.addr %s3817, 28
        %s3819 = scalar_lea.vmem [#allocation14], %s3818
        // Predicated region
        $region93: #{tpu_custom_call.1} parent=63 // pred_check
          %p3820 = pneg %p278
        $region94: #{tpu_custom_call.1} parent=63 // pred_check_branch
          %3822 = sbr.rel (%p3820) target = $region96
        $region95: #{tpu_custom_call.1} parent=63 // pred_region
          %s3824 = ssub.s32 448, 448
          %3825 = vsyncadd %s3816, %s3824
          %s3826 = smul.addr %s29, 7
          %s3827 = smul.addr %s3826, 64
          %s3828 = scalar_lea.hbm %s11, %s3827
          %s3830 = sshll.u32 %s3819, 4
          %s3831 = int_to_ptr.vmem [resolvable:$true] %s3830
          %3833 = dma.vmem_to_hbm [thread:$0]  %s3831, 448, %s3828, %s3816
        $region96: #{tpu_custom_call.1} parent=63 // pred_fallthru
          _
      $region64: #{tpu_custom_call.1} parent=5 // pred_fallthru
        _
      %p3834 = scmp.le.s32.totalorder 2, %s24
      // Predicated region
      $region97: #{tpu_custom_call.1} parent=5 // pred_check
        %p3835 = pneg %p3834
      $region98: #{tpu_custom_call.1} parent=5 // pred_check_branch
        %3837 = sbr.rel (%p3835) target = $region100
      $region99: #{tpu_custom_call.1} parent=5 // pred_region
        %s3838 = ssub.s32 %s24, 2
        // Predicated region
        $region101: #{tpu_custom_call.1} parent=99 // pred_check
          %p3839 = pneg %p284
        $region102: #{tpu_custom_call.1} parent=99 // pred_check_branch
          %3841 = sbr.rel (%p3839) target = $region104
        $region103: #{tpu_custom_call.1} parent=99 // pred_region
          %s3842 = sand.u32 %s269, 1
          %s3843 = scalar_lea.sflag [#allocation5], %s3842
          %s3844 = sand.u32 %s269, 1
          %s3845 = smul.addr %s3844, 28
          %s3846 = scalar_lea.vmem [#allocation14], %s3845
          %3847 = dma.done %s3843, 448
        $region104: #{tpu_custom_call.1} parent=99 // pred_fallthru
          _
      $region100: #{tpu_custom_call.1} parent=5 // pred_fallthru
        _
    $region6: #{tpu_custom_call.1} parent=1 // loop_footer
      %s28 = sadd.s32 1, %s24
    $region7: #{tpu_custom_call.1} parent=1 // loop_footer_branch
      %23 = sbr.rel target = $region3
    $region8: #{tpu_custom_call.1} parent=1 // loop_exit
      _
    %3848 = vsyncpa [#allocation4], 1
    %s3849 = scalar_lea.sflag [#allocation4], 1
    %3850 = vsyncpa %s3849, 1
    %3851 = vsyncpa [#allocation7], 1
    %3852 = vsyncpa [#allocation10], 1
    %3853 = vsyncpa [#allocation13], 1
    %3854 = vsyncpa [#allocation5], 1
    %s3855 = scalar_lea.sflag [#allocation5], 1
    %3856 = vsyncpa %s3855, 1

</llo_original>
